<compile_context>
chip_gen: v7x
topology: tpu7x:2x2x1
jax: 0.10.0
libtpu: 0.0.40
codegen_flags: <defaults>
</compile_context>

<pallas_src>
import functools
import math

import jax
import jax.numpy as jnp
from jax.experimental import pallas as pl
from jax.experimental.pallas import tpu as pltpu

_LANES = 128
_SUBLANES = 8


def _round_up(x: int, m: int) -> int:
    return ((x + m - 1) // m) * m


def _make_bilinear_kernel(d_lp: int, d_rp: int, o_pad: int, ic_size: int, grp: int):
    """Kernel closed over padded dims, i-chunk size and MXU group size."""
    n_grp = ic_size // grp

    def kernel(xlc_ref, xcat_ref, u_ref, wcat_ref, b_ref, out_ref):
        ic = pl.program_id(1)

        # ---- init at first i-chunk: fused linear terms + bias (one K=D_lp+D_rp matmul)
        @pl.when(ic == 0)
        def _init():
            out_ref[...] = (
                jnp.dot(xcat_ref[...], wcat_ref[...],
                        preferred_element_type=jnp.float32)
                + b_ref[...])

        # ---- bilinear term for this i-chunk: Khatri-Rao blocks fed straight to the MXU
        xr = xcat_ref[:, d_lp:]          # (TB, D_rp) bf16, static lane-aligned slice
        xl_chunk = xlc_ref[...]          # (TB, ic_size) bf16

        for gi in range(n_grp):
            base = gi * grp
            # z[:, a*D_rp + j] = xl[:, i0 + base + a] * xr[:, j]   (bf16, lane-dense)
            pieces = [xl_chunk[:, base + a:base + a + 1] * xr for a in range(grp)]
            z = pieces[0] if grp == 1 else jnp.concatenate(pieces, axis=1)
            u_blk = u_ref[base * d_rp:(base + grp) * d_rp, :]      # (grp*D_rp, O_pad)
            out_ref[...] += jnp.dot(z, u_blk, preferred_element_type=jnp.float32)

    return kernel


@functools.partial(jax.jit, static_argnames=("batch_tile", "i_chunk"))
def bilinear_forward(input_left, input_right, U, W_l, W_r, bias,
                     *, batch_tile: int = 256, i_chunk: int = 32):
    assert input_left.shape[:-1] == input_right.shape[:-1], "leading dims mismatch"
    lead = input_left.shape[:-1]
    d_l = input_left.shape[-1]
    d_r = input_right.shape[-1]
    n_out = U.shape[0]
    # The original module declares W_r with left_features, so it only works when
    # left_features == right_features.  Enforce the shapes it implicitly assumes.
    assert W_r.shape[-1] == d_r and W_l.shape[-1] == d_l, (
        "W_r must be (out, right_features) — original module requires left == right")

    b_flat = int(math.prod(lead)) if lead else 1
    xl = input_left.reshape(b_flat, d_l)
    xr = input_right.reshape(b_flat, d_r)

    f32, bf16 = jnp.float32, jnp.bfloat16

    # ---- padded / tiled geometry ------------------------------------------------
    o_pad = _round_up(n_out, _LANES)
    d_lp = _round_up(d_l, _LANES)
    d_rp = _round_up(d_r, _LANES)
    d_cat = d_lp + d_rp

    tb = min(batch_tile, _round_up(b_flat, _SUBLANES))
    tb = _round_up(tb, _SUBLANES)
    b_pad = _round_up(b_flat, tb)

    ic_size = min(i_chunk, d_lp)
    while d_lp % ic_size:                       # must divide the padded left dim
        ic_size -= 1
    grp = max(1, min(ic_size, 512 // d_rp))     # K per MXU matmul = grp * d_rp >= 512 when possible
    while ic_size % grp:
        grp -= 1
    nic = d_lp // ic_size
    nb = b_pad // tb

    # ---- one-time layout plumbing in XLA (hoisted out of the kernel) ------------
    xl_p = jnp.pad(xl.astype(f32), ((0, b_pad - b_flat), (0, d_lp - d_l))).astype(bf16)
    xr_p = jnp.pad(xr.astype(f32), ((0, b_pad - b_flat), (0, d_rp - d_r))).astype(bf16)
    x_cat = jnp.concatenate([xl_p, xr_p], axis=1)                       # (B_pad, D_lp+D_rp)
    xlc = xl_p.reshape(b_pad, nic, ic_size).transpose(1, 0, 2)          # (nic, B_pad, IC)

    # U_flat[i*D_rp + j, o] = U[o, i, j]   (zero rows/cols for padding)
    u_pad = jnp.pad(U.astype(f32),
                    ((0, o_pad - n_out), (0, d_lp - d_l), (0, d_rp - d_r)))
    u_flat = u_pad.transpose(1, 2, 0).reshape(d_lp * d_rp, o_pad).astype(bf16)

    wl_t = jnp.pad(W_l.astype(f32), ((0, o_pad - n_out), (0, d_lp - d_l))).T
    wr_t = jnp.pad(W_r.astype(f32), ((0, o_pad - n_out), (0, d_rp - d_r))).T
    w_cat = jnp.concatenate([wl_t, wr_t], axis=0).astype(bf16)          # (D_lp+D_rp, O_pad)
    b2d = jnp.pad(bias.astype(f32), (0, o_pad - n_out)).reshape(1, o_pad)

    kernel = _make_bilinear_kernel(d_lp, d_rp, o_pad, ic_size, grp)

    # ---- cost / VMEM bookkeeping -------------------------------------------------
    flops = (2 * b_pad * d_lp * d_rp * o_pad          # bilinear (Khatri-Rao matmul)
             + 2 * b_pad * d_cat * o_pad)             # fused linear terms
    bytes_accessed = (nb * u_flat.size * 2            # U streamed once per batch tile
                      + x_cat.size * 2 + xlc.size * 2
                      + w_cat.size * 2 + b2d.size * 4
                      + b_pad * o_pad * 4)
    vmem_need = (2 * ic_size * d_rp * o_pad * 2       # U block, double-buffered (bf16)
                 + 2 * tb * d_cat * 2                 # x_cat block
                 + 2 * tb * ic_size * 2               # xl chunk block
                 + 2 * d_cat * o_pad * 2              # W_cat
                 + 2 * o_pad * 4                      # bias
                 + 2 * tb * o_pad * 4)                # f32 output accumulator block
    vmem_limit = int(min(64 * 2**20, max(32 * 2**20, int(1.5 * vmem_need))))

    out = pl.pallas_call(
        kernel,
        out_shape=jax.ShapeDtypeStruct((b_pad, o_pad), f32),
        grid_spec=pltpu.PrefetchScalarGridSpec(
            num_scalar_prefetch=0,
            grid=(nb, nic),
            in_specs=[
                # xl chunks, (nic, B_pad, IC): one i-chunk per reduction step
                pl.BlockSpec((None, tb, ic_size), lambda b, i: (i, b, 0)),
                # [xl | xr] batch tile, resident across the i axis
                pl.BlockSpec((tb, d_cat), lambda b, i: (b, 0)),
                # U_flat streamed over the i axis (double-buffered by BlockSpec)
                pl.BlockSpec((ic_size * d_rp, o_pad), lambda b, i: (i, 0)),
                # fused linear weight [W_l^T ; W_r^T], resident
                pl.BlockSpec((d_cat, o_pad), lambda b, i: (0, 0)),
                # bias (f32, added at init so it stays full precision)
                pl.BlockSpec((1, o_pad), lambda b, i: (0, 0)),
            ],
            # output block is the f32 accumulator: same block index across the i axis
            out_specs=pl.BlockSpec((tb, o_pad), lambda b, i: (b, 0)),
        ),
        compiler_params=pltpu.CompilerParams(
            dimension_semantics=("parallel", "arbitrary"),
            vmem_limit_bytes=vmem_limit),
        cost_estimate=pl.CostEstimate(flops=flops, transcendentals=0,
                                      bytes_accessed=bytes_accessed),
    )(xlc, x_cat, u_flat, w_cat, b2d)

    return out[:b_flat, :n_out].reshape(lead + (n_out,))


def _xavier_uniform(key, shape):
    # Matches torch.nn.init.xavier_uniform_ fan computation.
    if len(shape) == 2:
        fan_out, fan_in = shape
    else:
        receptive = 1
        for s in shape[2:]:
            receptive *= s
        fan_out = shape[0] * receptive
        fan_in = shape[1] * receptive
    bound = (6.0 / (fan_in + fan_out)) ** 0.5
    return jax.random.uniform(key, shape, jnp.float32, -bound, bound)


def _reference(input_left, input_right, U, W_l, W_r, bias):
    # Pure-JAX f32 reference mirroring the PyTorch forward.
    lead = input_left.shape[:-1]
    xl = input_left.reshape(-1, input_left.shape[-1])
    xr = input_right.reshape(-1, input_right.shape[-1])
    bil = jnp.einsum('bi,oij,bj->bo', xl, U, xr)
    out = bil + xl @ W_l.T + xr @ W_r.T + bias
    return out.reshape(lead + (U.shape[0],))


if __name__ == "__main__":
    batch, seq = 4, 8
    left_features = 64
    right_features = 64   # original module requires left == right (W_r declared with left)
    out_features = 48

    key = jax.random.PRNGKey(0)
    k_u, k_wl, k_wr, k_xl, k_xr = jax.random.split(key, 5)

    # Parameters (deterministic synthetic init, shapes from BiLinear.__init__).
    U = _xavier_uniform(k_u, (out_features, left_features, right_features))
    W_l = _xavier_uniform(k_wl, (out_features, left_features))
    W_r = _xavier_uniform(k_wr, (out_features, left_features))  # left == right here
    bias = jnp.zeros((out_features,), jnp.float32)

    # Inputs (leading dims are flattened to the batch, like the PyTorch module).
    input_left = jax.random.normal(k_xl, (batch, seq, left_features), jnp.float32)
    input_right = jax.random.normal(k_xr, (batch, seq, right_features), jnp.float32)

    out = bilinear_forward(input_left, input_right, U, W_l, W_r, bias)
    out = jax.block_until_ready(out)

    ref = _reference(input_left, input_right, U, W_l, W_r, bias)
    assert out.shape == (batch, seq, out_features)
    max_err = float(jnp.max(jnp.abs(out - ref)))
    # bf16 matmul operands with f32 accumulation -> loose-ish tolerance.
    # TODO(synk): keep U/xl in f32 for the bilinear matmul if accuracy matters at large hidden sizes.
    assert jnp.allclose(out, ref, atol=5e-2, rtol=5e-2), f"mismatch vs reference, max err {max_err}"

    print("KERNEL_OK")
</pallas_src>

<mosaic_0001>
module attributes {stable_mosaic.version = 11 : i64} {
  func.func @kernel(%arg0: i32, %arg1: i32, %arg2: memref<1x32x32xbf16, #tpu.memory_space<vmem>>, %arg3: memref<32x256xbf16, #tpu.memory_space<vmem>>, %arg4: memref<4096x128xbf16, #tpu.memory_space<vmem>>, %arg5: memref<256x128xbf16, #tpu.memory_space<vmem>>, %arg6: memref<1x128xf32, #tpu.memory_space<vmem>>, %arg7: memref<32x128xf32, #tpu.memory_space<vmem>>) attributes {dimension_semantics = [#tpu.dimension_semantics<parallel>, #tpu.dimension_semantics<arbitrary>], iteration_bounds = array<i64: 1, 4>, scalar_prefetch = 0 : i64, scratch_operands = 0 : i64, tpu.core_type = #tpu.core_type<tc>, window_params = [{transform_indices = @transform_0, window_bounds = array<i64: 1, 32, 32>}, {transform_indices = @transform_1, window_bounds = array<i64: 32, 256>}, {transform_indices = @transform_2, window_bounds = array<i64: 4096, 128>}, {pipeline_mode = #tpu.pipeline_mode<synchronous>, transform_indices = @transform_3, window_bounds = array<i64: 256, 128>}, {pipeline_mode = #tpu.pipeline_mode<synchronous>, transform_indices = @transform_4, window_bounds = array<i64: 1, 128>}, {transform_indices = @transform_5, window_bounds = array<i64: 32, 128>}]} {
    %c0_i32 = arith.constant 0 : i32
    %0 = arith.cmpi eq, %arg1, %c0_i32 : i32
    %1 = arith.extui %0 : i1 to i32
    %c0_i32_0 = arith.constant 0 : i32
    %2 = arith.cmpi ne, %1, %c0_i32_0 : i32
    scf.if %2 {
      %c0_52 = arith.constant 0 : index
      %c0_53 = arith.constant 0 : index
      %150 = vector.load %arg3[%c0_52, %c0_53] : memref<32x256xbf16, #tpu.memory_space<vmem>>, vector<32x256xbf16>
      %c0_54 = arith.constant 0 : index
      %c0_55 = arith.constant 0 : index
      %151 = vector.load %arg5[%c0_54, %c0_55] : memref<256x128xbf16, #tpu.memory_space<vmem>>, vector<256x128xbf16>
      %cst_56 = arith.constant dense<0.000000e+00> : vector<32x128xf32>
      %152 = tpu.matmul %150, %151, %cst_56 {dimension_numbers = #tpu.dot_dimension_numbers<[1], [0], [0], [1], [0, 0, 1, 1], [], []>} : vector<32x256xbf16>, vector<256x128xbf16>, vector<32x128xf32> -> vector<32x128xf32>
      %c0_57 = arith.constant 0 : index
      %c0_58 = arith.constant 0 : index
      %153 = vector.load %arg6[%c0_57, %c0_58] : memref<1x128xf32, #tpu.memory_space<vmem>>, vector<1x128xf32>
      %154 = vector.broadcast %153 : vector<1x128xf32> to vector<32x128xf32>
      %155 = arith.addf %152, %154 : vector<32x128xf32>
      %c0_59 = arith.constant 0 : index
      %c0_60 = arith.constant 0 : index
      %156 = vector.load %arg7[%c0_59, %c0_60] : memref<32x128xf32, #tpu.memory_space<vmem>>, vector<32x128xf32>
      tpu.vector_store %arg7[%c0_59, %c0_60], %155 {strides = array<i32>} : memref<32x128xf32, #tpu.memory_space<vmem>>, vector<32x128xf32>,
    } else {
    }
    %c0 = arith.constant 0 : index
    %c128 = arith.constant 128 : index
    %3 = vector.load %arg3[%c0, %c128] : memref<32x256xbf16, #tpu.memory_space<vmem>>, vector<32x128xbf16>
    %c0_1 = arith.constant 0 : index
    %c0_2 = arith.constant 0 : index
    %c0_3 = arith.constant 0 : index
    %4 = vector.load %arg2[%c0_1, %c0_2, %c0_3] : memref<1x32x32xbf16, #tpu.memory_space<vmem>>, vector<1x32x32xbf16>
    %5 = vector.shape_cast %4 : vector<1x32x32xbf16> to vector<32x32xbf16>
    %6 = vector.extract_strided_slice %5 {offsets = [0, 0], sizes = [32, 1], strides = [1, 1]} : vector<32x32xbf16> to vector<32x1xbf16>
    %7 = vector.broadcast %6 : vector<32x1xbf16> to vector<32x128xbf16>
    %8 = arith.mulf %7, %3 : vector<32x128xbf16>
    %9 = vector.extract_strided_slice %5 {offsets = [0, 1], sizes = [32, 1], strides = [1, 1]} : vector<32x32xbf16> to vector<32x1xbf16>
    %10 = vector.broadcast %9 : vector<32x1xbf16> to vector<32x128xbf16>
    %11 = arith.mulf %10, %3 : vector<32x128xbf16>
    %12 = vector.extract_strided_slice %5 {offsets = [0, 2], sizes = [32, 1], strides = [1, 1]} : vector<32x32xbf16> to vector<32x1xbf16>
    %13 = vector.broadcast %12 : vector<32x1xbf16> to vector<32x128xbf16>
    %14 = arith.mulf %13, %3 : vector<32x128xbf16>
    %15 = vector.extract_strided_slice %5 {offsets = [0, 3], sizes = [32, 1], strides = [1, 1]} : vector<32x32xbf16> to vector<32x1xbf16>
    %16 = vector.broadcast %15 : vector<32x1xbf16> to vector<32x128xbf16>
    %17 = arith.mulf %16, %3 : vector<32x128xbf16>
    %18 = tpu.concatenate %8, %11, %14, %17 in 1 : vector<32x128xbf16>, vector<32x128xbf16>, vector<32x128xbf16>, vector<32x128xbf16> -> vector<32x512xbf16>
    %c0_4 = arith.constant 0 : index
    %c0_5 = arith.constant 0 : index
    %19 = vector.load %arg4[%c0_4, %c0_5] : memref<4096x128xbf16, #tpu.memory_space<vmem>>, vector<512x128xbf16>
    %c0_6 = arith.constant 0 : index
    %c0_7 = arith.constant 0 : index
    %20 = vector.load %arg7[%c0_6, %c0_7] : memref<32x128xf32, #tpu.memory_space<vmem>>, vector<32x128xf32>
    %cst = arith.constant dense<0.000000e+00> : vector<32x128xf32>
    %21 = tpu.matmul %18, %19, %cst {dimension_numbers = #tpu.dot_dimension_numbers<[1], [0], [0], [1], [0, 0, 1, 1], [], []>} : vector<32x512xbf16>, vector<512x128xbf16>, vector<32x128xf32> -> vector<32x128xf32>
    %22 = arith.addf %20, %21 : vector<32x128xf32>
    %c0_8 = arith.constant 0 : index
    %c0_9 = arith.constant 0 : index
    %23 = vector.load %arg7[%c0_8, %c0_9] : memref<32x128xf32, #tpu.memory_space<vmem>>, vector<32x128xf32>
    tpu.vector_store %arg7[%c0_8, %c0_9], %22 {strides = array<i32>} : memref<32x128xf32, #tpu.memory_space<vmem>>, vector<32x128xf32>,
    %24 = vector.extract_strided_slice %5 {offsets = [0, 4], sizes = [32, 1], strides = [1, 1]} : vector<32x32xbf16> to vector<32x1xbf16>
    %25 = vector.broadcast %24 : vector<32x1xbf16> to vector<32x128xbf16>
    %26 = arith.mulf %25, %3 : vector<32x128xbf16>
    %27 = vector.extract_strided_slice %5 {offsets = [0, 5], sizes = [32, 1], strides = [1, 1]} : vector<32x32xbf16> to vector<32x1xbf16>
    %28 = vector.broadcast %27 : vector<32x1xbf16> to vector<32x128xbf16>
    %29 = arith.mulf %28, %3 : vector<32x128xbf16>
    %30 = vector.extract_strided_slice %5 {offsets = [0, 6], sizes = [32, 1], strides = [1, 1]} : vector<32x32xbf16> to vector<32x1xbf16>
    %31 = vector.broadcast %30 : vector<32x1xbf16> to vector<32x128xbf16>
    %32 = arith.mulf %31, %3 : vector<32x128xbf16>
    %33 = vector.extract_strided_slice %5 {offsets = [0, 7], sizes = [32, 1], strides = [1, 1]} : vector<32x32xbf16> to vector<32x1xbf16>
    %34 = vector.broadcast %33 : vector<32x1xbf16> to vector<32x128xbf16>
    %35 = arith.mulf %34, %3 : vector<32x128xbf16>
    %36 = tpu.concatenate %26, %29, %32, %35 in 1 : vector<32x128xbf16>, vector<32x128xbf16>, vector<32x128xbf16>, vector<32x128xbf16> -> vector<32x512xbf16>
    %c512 = arith.constant 512 : index
    %c0_10 = arith.constant 0 : index
    %37 = vector.load %arg4[%c512, %c0_10] : memref<4096x128xbf16, #tpu.memory_space<vmem>>, vector<512x128xbf16>
    %c0_11 = arith.constant 0 : index
    %c0_12 = arith.constant 0 : index
    %38 = vector.load %arg7[%c0_11, %c0_12] : memref<32x128xf32, #tpu.memory_space<vmem>>, vector<32x128xf32>
    %cst_13 = arith.constant dense<0.000000e+00> : vector<32x128xf32>
    %39 = tpu.matmul %36, %37, %cst_13 {dimension_numbers = #tpu.dot_dimension_numbers<[1], [0], [0], [1], [0, 0, 1, 1], [], []>} : vector<32x512xbf16>, vector<512x128xbf16>, vector<32x128xf32> -> vector<32x128xf32>
    %40 = arith.addf %38, %39 : vector<32x128xf32>
    %c0_14 = arith.constant 0 : index
    %c0_15 = arith.constant 0 : index
    %41 = vector.load %arg7[%c0_14, %c0_15] : memref<32x128xf32, #tpu.memory_space<vmem>>, vector<32x128xf32>
    tpu.vector_store %arg7[%c0_14, %c0_15], %40 {strides = array<i32>} : memref<32x128xf32, #tpu.memory_space<vmem>>, vector<32x128xf32>,
    %42 = vector.extract_strided_slice %5 {offsets = [0, 8], sizes = [32, 1], strides = [1, 1]} : vector<32x32xbf16> to vector<32x1xbf16>
    %43 = vector.broadcast %42 : vector<32x1xbf16> to vector<32x128xbf16>
    %44 = arith.mulf %43, %3 : vector<32x128xbf16>
    %45 = vector.extract_strided_slice %5 {offsets = [0, 9], sizes = [32, 1], strides = [1, 1]} : vector<32x32xbf16> to vector<32x1xbf16>
    %46 = vector.broadcast %45 : vector<32x1xbf16> to vector<32x128xbf16>
    %47 = arith.mulf %46, %3 : vector<32x128xbf16>
    %48 = vector.extract_strided_slice %5 {offsets = [0, 10], sizes = [32, 1], strides = [1, 1]} : vector<32x32xbf16> to vector<32x1xbf16>
    %49 = vector.broadcast %48 : vector<32x1xbf16> to vector<32x128xbf16>
    %50 = arith.mulf %49, %3 : vector<32x128xbf16>
    %51 = vector.extract_strided_slice %5 {offsets = [0, 11], sizes = [32, 1], strides = [1, 1]} : vector<32x32xbf16> to vector<32x1xbf16>
    %52 = vector.broadcast %51 : vector<32x1xbf16> to vector<32x128xbf16>
    %53 = arith.mulf %52, %3 : vector<32x128xbf16>
    %54 = tpu.concatenate %44, %47, %50, %53 in 1 : vector<32x128xbf16>, vector<32x128xbf16>, vector<32x128xbf16>, vector<32x128xbf16> -> vector<32x512xbf16>
    %c1024 = arith.constant 1024 : index
    %c0_16 = arith.constant 0 : index
    %55 = vector.load %arg4[%c1024, %c0_16] : memref<4096x128xbf16, #tpu.memory_space<vmem>>, vector<512x128xbf16>
    %c0_17 = arith.constant 0 : index
    %c0_18 = arith.constant 0 : index
    %56 = vector.load %arg7[%c0_17, %c0_18] : memref<32x128xf32, #tpu.memory_space<vmem>>, vector<32x128xf32>
    %cst_19 = arith.constant dense<0.000000e+00> : vector<32x128xf32>
    %57 = tpu.matmul %54, %55, %cst_19 {dimension_numbers = #tpu.dot_dimension_numbers<[1], [0], [0], [1], [0, 0, 1, 1], [], []>} : vector<32x512xbf16>, vector<512x128xbf16>, vector<32x128xf32> -> vector<32x128xf32>
    %58 = arith.addf %56, %57 : vector<32x128xf32>
    %c0_20 = arith.constant 0 : index
    %c0_21 = arith.constant 0 : index
    %59 = vector.load %arg7[%c0_20, %c0_21] : memref<32x128xf32, #tpu.memory_space<vmem>>, vector<32x128xf32>
    tpu.vector_store %arg7[%c0_20, %c0_21], %58 {strides = array<i32>} : memref<32x128xf32, #tpu.memory_space<vmem>>, vector<32x128xf32>,
    %60 = vector.extract_strided_slice %5 {offsets = [0, 12], sizes = [32, 1], strides = [1, 1]} : vector<32x32xbf16> to vector<32x1xbf16>
    %61 = vector.broadcast %60 : vector<32x1xbf16> to vector<32x128xbf16>
    %62 = arith.mulf %61, %3 : vector<32x128xbf16>
    %63 = vector.extract_strided_slice %5 {offsets = [0, 13], sizes = [32, 1], strides = [1, 1]} : vector<32x32xbf16> to vector<32x1xbf16>
    %64 = vector.broadcast %63 : vector<32x1xbf16> to vector<32x128xbf16>
    %65 = arith.mulf %64, %3 : vector<32x128xbf16>
    %66 = vector.extract_strided_slice %5 {offsets = [0, 14], sizes = [32, 1], strides = [1, 1]} : vector<32x32xbf16> to vector<32x1xbf16>
    %67 = vector.broadcast %66 : vector<32x1xbf16> to vector<32x128xbf16>
    %68 = arith.mulf %67, %3 : vector<32x128xbf16>
    %69 = vector.extract_strided_slice %5 {offsets = [0, 15], sizes = [32, 1], strides = [1, 1]} : vector<32x32xbf16> to vector<32x1xbf16>
    %70 = vector.broadcast %69 : vector<32x1xbf16> to vector<32x128xbf16>
    %71 = arith.mulf %70, %3 : vector<32x128xbf16>
    %72 = tpu.concatenate %62, %65, %68, %71 in 1 : vector<32x128xbf16>, vector<32x128xbf16>, vector<32x128xbf16>, vector<32x128xbf16> -> vector<32x512xbf16>
    %c1536 = arith.constant 1536 : index
    %c0_22 = arith.constant 0 : index
    %73 = vector.load %arg4[%c1536, %c0_22] : memref<4096x128xbf16, #tpu.memory_space<vmem>>, vector<512x128xbf16>
    %c0_23 = arith.constant 0 : index
    %c0_24 = arith.constant 0 : index
    %74 = vector.load %arg7[%c0_23, %c0_24] : memref<32x128xf32, #tpu.memory_space<vmem>>, vector<32x128xf32>
    %cst_25 = arith.constant dense<0.000000e+00> : vector<32x128xf32>
    %75 = tpu.matmul %72, %73, %cst_25 {dimension_numbers = #tpu.dot_dimension_numbers<[1], [0], [0], [1], [0, 0, 1, 1], [], []>} : vector<32x512xbf16>, vector<512x128xbf16>, vector<32x128xf32> -> vector<32x128xf32>
    %76 = arith.addf %74, %75 : vector<32x128xf32>
    %c0_26 = arith.constant 0 : index
    %c0_27 = arith.constant 0 : index
    %77 = vector.load %arg7[%c0_26, %c0_27] : memref<32x128xf32, #tpu.memory_space<vmem>>, vector<32x128xf32>
    tpu.vector_store %arg7[%c0_26, %c0_27], %76 {strides = array<i32>} : memref<32x128xf32, #tpu.memory_space<vmem>>, vector<32x128xf32>,
    %78 = vector.extract_strided_slice %5 {offsets = [0, 16], sizes = [32, 1], strides = [1, 1]} : vector<32x32xbf16> to vector<32x1xbf16>
    %79 = vector.broadcast %78 : vector<32x1xbf16> to vector<32x128xbf16>
    %80 = arith.mulf %79, %3 : vector<32x128xbf16>
    %81 = vector.extract_strided_slice %5 {offsets = [0, 17], sizes = [32, 1], strides = [1, 1]} : vector<32x32xbf16> to vector<32x1xbf16>
    %82 = vector.broadcast %81 : vector<32x1xbf16> to vector<32x128xbf16>
    %83 = arith.mulf %82, %3 : vector<32x128xbf16>
    %84 = vector.extract_strided_slice %5 {offsets = [0, 18], sizes = [32, 1], strides = [1, 1]} : vector<32x32xbf16> to vector<32x1xbf16>
    %85 = vector.broadcast %84 : vector<32x1xbf16> to vector<32x128xbf16>
    %86 = arith.mulf %85, %3 : vector<32x128xbf16>
    %87 = vector.extract_strided_slice %5 {offsets = [0, 19], sizes = [32, 1], strides = [1, 1]} : vector<32x32xbf16> to vector<32x1xbf16>
    %88 = vector.broadcast %87 : vector<32x1xbf16> to vector<32x128xbf16>
    %89 = arith.mulf %88, %3 : vector<32x128xbf16>
    %90 = tpu.concatenate %80, %83, %86, %89 in 1 : vector<32x128xbf16>, vector<32x128xbf16>, vector<32x128xbf16>, vector<32x128xbf16> -> vector<32x512xbf16>
    %c2048 = arith.constant 2048 : index
    %c0_28 = arith.constant 0 : index
    %91 = vector.load %arg4[%c2048, %c0_28] : memref<4096x128xbf16, #tpu.memory_space<vmem>>, vector<512x128xbf16>
    %c0_29 = arith.constant 0 : index
    %c0_30 = arith.constant 0 : index
    %92 = vector.load %arg7[%c0_29, %c0_30] : memref<32x128xf32, #tpu.memory_space<vmem>>, vector<32x128xf32>
    %cst_31 = arith.constant dense<0.000000e+00> : vector<32x128xf32>
    %93 = tpu.matmul %90, %91, %cst_31 {dimension_numbers = #tpu.dot_dimension_numbers<[1], [0], [0], [1], [0, 0, 1, 1], [], []>} : vector<32x512xbf16>, vector<512x128xbf16>, vector<32x128xf32> -> vector<32x128xf32>
    %94 = arith.addf %92, %93 : vector<32x128xf32>
    %c0_32 = arith.constant 0 : index
    %c0_33 = arith.constant 0 : index
    %95 = vector.load %arg7[%c0_32, %c0_33] : memref<32x128xf32, #tpu.memory_space<vmem>>, vector<32x128xf32>
    tpu.vector_store %arg7[%c0_32, %c0_33], %94 {strides = array<i32>} : memref<32x128xf32, #tpu.memory_space<vmem>>, vector<32x128xf32>,
    %96 = vector.extract_strided_slice %5 {offsets = [0, 20], sizes = [32, 1], strides = [1, 1]} : vector<32x32xbf16> to vector<32x1xbf16>
    %97 = vector.broadcast %96 : vector<32x1xbf16> to vector<32x128xbf16>
    %98 = arith.mulf %97, %3 : vector<32x128xbf16>
    %99 = vector.extract_strided_slice %5 {offsets = [0, 21], sizes = [32, 1], strides = [1, 1]} : vector<32x32xbf16> to vector<32x1xbf16>
    %100 = vector.broadcast %99 : vector<32x1xbf16> to vector<32x128xbf16>
    %101 = arith.mulf %100, %3 : vector<32x128xbf16>
    %102 = vector.extract_strided_slice %5 {offsets = [0, 22], sizes = [32, 1], strides = [1, 1]} : vector<32x32xbf16> to vector<32x1xbf16>
    %103 = vector.broadcast %102 : vector<32x1xbf16> to vector<32x128xbf16>
    %104 = arith.mulf %103, %3 : vector<32x128xbf16>
    %105 = vector.extract_strided_slice %5 {offsets = [0, 23], sizes = [32, 1], strides = [1, 1]} : vector<32x32xbf16> to vector<32x1xbf16>
    %106 = vector.broadcast %105 : vector<32x1xbf16> to vector<32x128xbf16>
    %107 = arith.mulf %106, %3 : vector<32x128xbf16>
    %108 = tpu.concatenate %98, %101, %104, %107 in 1 : vector<32x128xbf16>, vector<32x128xbf16>, vector<32x128xbf16>, vector<32x128xbf16> -> vector<32x512xbf16>
    %c2560 = arith.constant 2560 : index
    %c0_34 = arith.constant 0 : index
    %109 = vector.load %arg4[%c2560, %c0_34] : memref<4096x128xbf16, #tpu.memory_space<vmem>>, vector<512x128xbf16>
    %c0_35 = arith.constant 0 : index
    %c0_36 = arith.constant 0 : index
    %110 = vector.load %arg7[%c0_35, %c0_36] : memref<32x128xf32, #tpu.memory_space<vmem>>, vector<32x128xf32>
    %cst_37 = arith.constant dense<0.000000e+00> : vector<32x128xf32>
    %111 = tpu.matmul %108, %109, %cst_37 {dimension_numbers = #tpu.dot_dimension_numbers<[1], [0], [0], [1], [0, 0, 1, 1], [], []>} : vector<32x512xbf16>, vector<512x128xbf16>, vector<32x128xf32> -> vector<32x128xf32>
    %112 = arith.addf %110, %111 : vector<32x128xf32>
    %c0_38 = arith.constant 0 : index
    %c0_39 = arith.constant 0 : index
    %113 = vector.load %arg7[%c0_38, %c0_39] : memref<32x128xf32, #tpu.memory_space<vmem>>, vector<32x128xf32>
    tpu.vector_store %arg7[%c0_38, %c0_39], %112 {strides = array<i32>} : memref<32x128xf32, #tpu.memory_space<vmem>>, vector<32x128xf32>,
    %114 = vector.extract_strided_slice %5 {offsets = [0, 24], sizes = [32, 1], strides = [1, 1]} : vector<32x32xbf16> to vector<32x1xbf16>
    %115 = vector.broadcast %114 : vector<32x1xbf16> to vector<32x128xbf16>
    %116 = arith.mulf %115, %3 : vector<32x128xbf16>
    %117 = vector.extract_strided_slice %5 {offsets = [0, 25], sizes = [32, 1], strides = [1, 1]} : vector<32x32xbf16> to vector<32x1xbf16>
    %118 = vector.broadcast %117 : vector<32x1xbf16> to vector<32x128xbf16>
    %119 = arith.mulf %118, %3 : vector<32x128xbf16>
    %120 = vector.extract_strided_slice %5 {offsets = [0, 26], sizes = [32, 1], strides = [1, 1]} : vector<32x32xbf16> to vector<32x1xbf16>
    %121 = vector.broadcast %120 : vector<32x1xbf16> to vector<32x128xbf16>
    %122 = arith.mulf %121, %3 : vector<32x128xbf16>
    %123 = vector.extract_strided_slice %5 {offsets = [0, 27], sizes = [32, 1], strides = [1, 1]} : vector<32x32xbf16> to vector<32x1xbf16>
    %124 = vector.broadcast %123 : vector<32x1xbf16> to vector<32x128xbf16>
    %125 = arith.mulf %124, %3 : vector<32x128xbf16>
    %126 = tpu.concatenate %116, %119, %122, %125 in 1 : vector<32x128xbf16>, vector<32x128xbf16>, vector<32x128xbf16>, vector<32x128xbf16> -> vector<32x512xbf16>
    %c3072 = arith.constant 3072 : index
    %c0_40 = arith.constant 0 : index
    %127 = vector.load %arg4[%c3072, %c0_40] : memref<4096x128xbf16, #tpu.memory_space<vmem>>, vector<512x128xbf16>
    %c0_41 = arith.constant 0 : index
    %c0_42 = arith.constant 0 : index
    %128 = vector.load %arg7[%c0_41, %c0_42] : memref<32x128xf32, #tpu.memory_space<vmem>>, vector<32x128xf32>
    %cst_43 = arith.constant dense<0.000000e+00> : vector<32x128xf32>
    %129 = tpu.matmul %126, %127, %cst_43 {dimension_numbers = #tpu.dot_dimension_numbers<[1], [0], [0], [1], [0, 0, 1, 1], [], []>} : vector<32x512xbf16>, vector<512x128xbf16>, vector<32x128xf32> -> vector<32x128xf32>
    %130 = arith.addf %128, %129 : vector<32x128xf32>
    %c0_44 = arith.constant 0 : index
    %c0_45 = arith.constant 0 : index
    %131 = vector.load %arg7[%c0_44, %c0_45] : memref<32x128xf32, #tpu.memory_space<vmem>>, vector<32x128xf32>
    tpu.vector_store %arg7[%c0_44, %c0_45], %130 {strides = array<i32>} : memref<32x128xf32, #tpu.memory_space<vmem>>, vector<32x128xf32>,
    %132 = vector.extract_strided_slice %5 {offsets = [0, 28], sizes = [32, 1], strides = [1, 1]} : vector<32x32xbf16> to vector<32x1xbf16>
    %133 = vector.broadcast %132 : vector<32x1xbf16> to vector<32x128xbf16>
    %134 = arith.mulf %133, %3 : vector<32x128xbf16>
    %135 = vector.extract_strided_slice %5 {offsets = [0, 29], sizes = [32, 1], strides = [1, 1]} : vector<32x32xbf16> to vector<32x1xbf16>
    %136 = vector.broadcast %135 : vector<32x1xbf16> to vector<32x128xbf16>
    %137 = arith.mulf %136, %3 : vector<32x128xbf16>
    %138 = vector.extract_strided_slice %5 {offsets = [0, 30], sizes = [32, 1], strides = [1, 1]} : vector<32x32xbf16> to vector<32x1xbf16>
    %139 = vector.broadcast %138 : vector<32x1xbf16> to vector<32x128xbf16>
    %140 = arith.mulf %139, %3 : vector<32x128xbf16>
    %141 = vector.extract_strided_slice %5 {offsets = [0, 31], sizes = [32, 1], strides = [1, 1]} : vector<32x32xbf16> to vector<32x1xbf16>
    %142 = vector.broadcast %141 : vector<32x1xbf16> to vector<32x128xbf16>
    %143 = arith.mulf %142, %3 : vector<32x128xbf16>
    %144 = tpu.concatenate %134, %137, %140, %143 in 1 : vector<32x128xbf16>, vector<32x128xbf16>, vector<32x128xbf16>, vector<32x128xbf16> -> vector<32x512xbf16>
    %c3584 = arith.constant 3584 : index
    %c0_46 = arith.constant 0 : index
    %145 = vector.load %arg4[%c3584, %c0_46] : memref<4096x128xbf16, #tpu.memory_space<vmem>>, vector<512x128xbf16>
    %c0_47 = arith.constant 0 : index
    %c0_48 = arith.constant 0 : index
    %146 = vector.load %arg7[%c0_47, %c0_48] : memref<32x128xf32, #tpu.memory_space<vmem>>, vector<32x128xf32>
    %cst_49 = arith.constant dense<0.000000e+00> : vector<32x128xf32>
    %147 = tpu.matmul %144, %145, %cst_49 {dimension_numbers = #tpu.dot_dimension_numbers<[1], [0], [0], [1], [0, 0, 1, 1], [], []>} : vector<32x512xbf16>, vector<512x128xbf16>, vector<32x128xf32> -> vector<32x128xf32>
    %148 = arith.addf %146, %147 : vector<32x128xf32>
    %c0_50 = arith.constant 0 : index
    %c0_51 = arith.constant 0 : index
    %149 = vector.load %arg7[%c0_50, %c0_51] : memref<32x128xf32, #tpu.memory_space<vmem>>, vector<32x128xf32>
    tpu.vector_store %arg7[%c0_50, %c0_51], %148 {strides = array<i32>} : memref<32x128xf32, #tpu.memory_space<vmem>>, vector<32x128xf32>,
    return
  }
  func.func @transform_0(%arg0: i32, %arg1: i32) -> (i32, i32, i32) {
    %c0_i32 = arith.constant 0 : i32
    %c0_i32_0 = arith.constant 0 : i32
    return %arg1, %arg0, %c0_i32 : i32, i32, i32
  }
  func.func @transform_1(%arg0: i32, %arg1: i32) -> (i32, i32) {
    %c0_i32 = arith.constant 0 : i32
    %c0_i32_0 = arith.constant 0 : i32
    return %arg0, %c0_i32 : i32, i32
  }
  func.func @transform_2(%arg0: i32, %arg1: i32) -> (i32, i32) {
    %c0_i32 = arith.constant 0 : i32
    %c0_i32_0 = arith.constant 0 : i32
    return %arg1, %c0_i32 : i32, i32
  }
  func.func @transform_3(%arg0: i32, %arg1: i32) -> (i32, i32) {
    %c0_i32 = arith.constant 0 : i32
    %c0_i32_0 = arith.constant 0 : i32
    %c0_i32_1 = arith.constant 0 : i32
    return %c0_i32, %c0_i32_0 : i32, i32
  }
  func.func @transform_4(%arg0: i32, %arg1: i32) -> (i32, i32) {
    %c0_i32 = arith.constant 0 : i32
    %c0_i32_0 = arith.constant 0 : i32
    %c0_i32_1 = arith.constant 0 : i32
    return %c0_i32, %c0_i32_0 : i32, i32
  }
  func.func @transform_5(%arg0: i32, %arg1: i32) -> (i32, i32) {
    %c0_i32 = arith.constant 0 : i32
    %c0_i32_0 = arith.constant 0 : i32
    return %arg0, %c0_i32 : i32, i32
  }
}

</mosaic_0001>

<llo_original>
// kernel: bilinear_forward.1
$region0: #{bilinear_forward.1}
  #allocation0 [shape = 'u32[]', space=smem, size = 0x4, offset = 0x4, fixed_abs, tag = 'smem constant byte address 0x4 - core index']
  #allocation1 [shape = 'u32[144,128]{1,0:T(1,128)}', space=vmem, size = 0x12000, scoped, tag = 'internal scratch']
  %s0 = inlined_call_operand.vmem [shape: bf16[4,32,32], index: 0, kind: input, shape index: {}]
  %s1 = inlined_call_operand.vmem [shape: bf16[32,256], index: 1, kind: input, shape index: {}]
  %s2 = inlined_call_operand.vmem [shape: bf16[16384,128], index: 2, kind: input, shape index: {}]
  %s3 = inlined_call_operand.vmem [shape: bf16[256,128], index: 3, kind: input, shape index: {}]
  %s4 = inlined_call_operand.vmem [shape: f32[1,128], index: 4, kind: input, shape index: {}]
  %s5 = inlined_call_operand.vmem [shape: f32[32,128], index: 5, kind: output, shape index: {}]
  %s6 = sld [smem:[#allocation0]]
  $region57: #{bilinear_forward.1} parent=0
    _
  %s8 = ssub.s32 1, %s6
  %s9 = scalar_select 0, %s8, %s6
  loop: start=0, step=1, limit=6
  $region2: #{bilinear_forward.1} parent=0 // loop_pre_header
    _
  $region3: #{bilinear_forward.1} parent=0 // loop_header
    %s11 = sphi 0, %s15
    %p12 = scmp.ge.s32.totalorder %s11, 6
    %s18 = sphi 0, %s30
    %s19 = sphi 0, %s26
    %s20 = sphi 0, %s18
    %s21 = sphi 0, %s19
    %s22 = sphi 0, %s20
    %s23 = sphi 0, %s21
    %s35 = sphi 0, %s37
    %s38 = sphi 0, %s35
    %s39 = sphi 0, %s38
    %s55 = sphi 0, %s39
    %s61 = sphi 0, %s63
    %s64 = sphi 0, %s61
    %s65 = sphi 0, %s64
    %s81 = sphi 0, %s65
    %s87 = sphi 0, %s89
    %s90 = sphi 0, %s87
    %s91 = sphi 0, %s90
    %s107 = sphi 0, %s91
    %s111 = sphi 0, %s111
    %s113 = sphi 0, %s111
    %s114 = sphi 0, %s113
    %s128 = sphi 0, %s114
    %s132 = sphi 0, %s132
    %s134 = sphi 0, %s132
    %s135 = sphi 0, %s134
    %s149 = sphi 0, %s135
    %s155 = sphi 0, %s157
    %s158 = sphi 0, %s155
    %s159 = sphi 0, %s158
    %s175 = sphi 0, %s159
  $region4: #{bilinear_forward.1} parent=0 // loop_header_branch
    %14 = sbr.rel (%p12) target = $region8
  $region5: #{bilinear_forward.1} parent=0 // loop_body
    %s16 = ssub.s32 %s11, 1
    %s17 = ssub.s32 %s11, 2
    %s24 = sadd.s32 1, %s19
    %p25 = scmp.ge.s32.totalorder %s24, 4
    %s26 = scalar_select %p25, 0, %s24
    %s27 = sadd.s32 1, %s18
    %s28 = scalar_select %p25, %s27, %s18
    %p29 = scmp.ge.s32.totalorder %s28, 1
    %s30 = scalar_select %p29, 0, %s28
    %s31 = ssub.s32 %s19, %s26
    %s32 = ssub.s32 %s18, %s30
    %s33 = sor.u32 %s31, %s32
    %p34 = scmp.eq.s32.totalorder %s33, 0
    %s36 = sadd.s32 %s35, 1
    %s37 = scalar_select %p34, %s35, %s36
    %p40 = pneg %p34
    %p41 = scmp.eq.s32.totalorder %s11, 3
    %p42 = por %p40, %p41
    %p43 = scmp.ne.s32.totalorder %s35, %s38
    %p44 = scmp.eq.s32.totalorder %s11, 0
    %p45 = por %p43, %p44
    %p46 = scmp.ne.s32.totalorder %s35, %s38
    %p47 = scmp.eq.s32.totalorder %s16, 3
    %p48 = por %p46, %p47
    %p49 = scmp.ne.s32.totalorder %s38, %s39
    %p50 = scmp.eq.s32.totalorder %s16, 0
    %p51 = por %p49, %p50
    %p52 = scmp.ne.s32.totalorder %s38, %s39
    %p53 = scmp.eq.s32.totalorder %s17, 3
    %p54 = por %p52, %p53
    %p56 = scmp.ne.s32.totalorder %s39, %s55
    %p57 = scmp.eq.s32.totalorder %s17, 0
    %p58 = por %p56, %p57
    %s59 = ssub.s32 %s18, %s30
    %p60 = scmp.eq.s32.totalorder %s59, 0
    %s62 = sadd.s32 %s61, 1
    %s63 = scalar_select %p60, %s61, %s62
    %p66 = pneg %p60
    %p67 = scmp.eq.s32.totalorder %s11, 3
    %p68 = por %p66, %p67
    %p69 = scmp.ne.s32.totalorder %s61, %s64
    %p70 = scmp.eq.s32.totalorder %s11, 0
    %p71 = por %p69, %p70
    %p72 = scmp.ne.s32.totalorder %s61, %s64
    %p73 = scmp.eq.s32.totalorder %s16, 3
    %p74 = por %p72, %p73
    %p75 = scmp.ne.s32.totalorder %s64, %s65
    %p76 = scmp.eq.s32.totalorder %s16, 0
    %p77 = por %p75, %p76
    %p78 = scmp.ne.s32.totalorder %s64, %s65
    %p79 = scmp.eq.s32.totalorder %s17, 3
    %p80 = por %p78, %p79
    %p82 = scmp.ne.s32.totalorder %s65, %s81
    %p83 = scmp.eq.s32.totalorder %s17, 0
    %p84 = por %p82, %p83
    %s85 = ssub.s32 %s19, %s26
    %p86 = scmp.eq.s32.totalorder %s85, 0
    %s88 = sadd.s32 %s87, 1
    %s89 = scalar_select %p86, %s87, %s88
    %p92 = pneg %p86
    %p93 = scmp.eq.s32.totalorder %s11, 3
    %p94 = por %p92, %p93
    %p95 = scmp.ne.s32.totalorder %s87, %s90
    %p96 = scmp.eq.s32.totalorder %s11, 0
    %p97 = por %p95, %p96
    %p98 = scmp.ne.s32.totalorder %s87, %s90
    %p99 = scmp.eq.s32.totalorder %s16, 3
    %p100 = por %p98, %p99
    %p101 = scmp.ne.s32.totalorder %s90, %s91
    %p102 = scmp.eq.s32.totalorder %s16, 0
    %p103 = por %p101, %p102
    %p104 = scmp.ne.s32.totalorder %s90, %s91
    %p105 = scmp.eq.s32.totalorder %s17, 3
    %p106 = por %p104, %p105
    %p108 = scmp.ne.s32.totalorder %s91, %s107
    %p109 = scmp.eq.s32.totalorder %s17, 0
    %p110 = por %p108, %p109
    %s112 = sadd.s32 %s111, 1
    %p115 = scmp.eq.s32.totalorder %s11, 3
    %p116 = scmp.ne.s32.totalorder %s111, %s113
    %p117 = scmp.eq.s32.totalorder %s11, 0
    %p118 = por %p116, %p117
    %p119 = scmp.ne.s32.totalorder %s111, %s113
    %p120 = scmp.eq.s32.totalorder %s16, 3
    %p121 = por %p119, %p120
    %p122 = scmp.ne.s32.totalorder %s113, %s114
    %p123 = scmp.eq.s32.totalorder %s16, 0
    %p124 = por %p122, %p123
    %p125 = scmp.ne.s32.totalorder %s113, %s114
    %p126 = scmp.eq.s32.totalorder %s17, 3
    %p127 = por %p125, %p126
    %p129 = scmp.ne.s32.totalorder %s114, %s128
    %p130 = scmp.eq.s32.totalorder %s17, 0
    %p131 = por %p129, %p130
    %s133 = sadd.s32 %s132, 1
    %p136 = scmp.eq.s32.totalorder %s11, 3
    %p137 = scmp.ne.s32.totalorder %s132, %s134
    %p138 = scmp.eq.s32.totalorder %s11, 0
    %p139 = por %p137, %p138
    %p140 = scmp.ne.s32.totalorder %s132, %s134
    %p141 = scmp.eq.s32.totalorder %s16, 3
    %p142 = por %p140, %p141
    %p143 = scmp.ne.s32.totalorder %s134, %s135
    %p144 = scmp.eq.s32.totalorder %s16, 0
    %p145 = por %p143, %p144
    %p146 = scmp.ne.s32.totalorder %s134, %s135
    %p147 = scmp.eq.s32.totalorder %s17, 3
    %p148 = por %p146, %p147
    %p150 = scmp.ne.s32.totalorder %s135, %s149
    %p151 = scmp.eq.s32.totalorder %s17, 0
    %p152 = por %p150, %p151
    %s153 = ssub.s32 %s18, %s30
    %p154 = scmp.eq.s32.totalorder %s153, 0
    %s156 = sadd.s32 %s155, 1
    %s157 = scalar_select %p154, %s155, %s156
    %p160 = pneg %p154
    %p161 = scmp.eq.s32.totalorder %s11, 3
    %p162 = por %p160, %p161
    %p163 = scmp.ne.s32.totalorder %s155, %s158
    %p164 = scmp.eq.s32.totalorder %s11, 0
    %p165 = por %p163, %p164
    %p166 = scmp.ne.s32.totalorder %s155, %s158
    %p167 = scmp.eq.s32.totalorder %s16, 3
    %p168 = por %p166, %p167
    %p169 = scmp.ne.s32.totalorder %s158, %s159
    %p170 = scmp.eq.s32.totalorder %s16, 0
    %p171 = por %p169, %p170
    %p172 = scmp.ne.s32.totalorder %s158, %s159
    %p173 = scmp.eq.s32.totalorder %s17, 3
    %p174 = por %p172, %p173
    %p176 = scmp.ne.s32.totalorder %s159, %s175
    %p177 = scmp.eq.s32.totalorder %s17, 0
    %p178 = por %p176, %p177
    %p179 = scmp.le.s32.totalorder 1, %s11
    %p180 = scmp.lt.s32.totalorder %s11, 5
    %p181 = pnand %p179, %p180
    %p182 = pneg %p181
    // Predicated region
    $region9: #{bilinear_forward.1} parent=5 // pred_check
      _
    $region10: #{bilinear_forward.1} parent=5 // pred_check_branch
      %184 = sbr.rel (%p181) target = $region12
    $region11: #{bilinear_forward.1} parent=5 // pred_region
      %s185 = ssub.s32 %s11, 1
      // Predicated region
      $region13: #{bilinear_forward.1} parent=11 // pred_check
        %p186 = pneg %p77
      $region14: #{bilinear_forward.1} parent=11 // pred_check_branch
        %188 = sbr.rel (%p186) target = $region16
      $region15: #{bilinear_forward.1} parent=11 // pred_region
        %s189 = smul.u32 4, %s20
        %p190 = scmp.lt.s32.totalorder %s189, 3
        %s191 = scalar_select %p190, %s189, 3
        %s192 = smul.addr %s191, 2
        %s193 = smul.addr %s192, 4
        %s194 = scalar_lea.vmem %s1, %s193
        %s195 = smul.u32 4, %s20
      $region16: #{bilinear_forward.1} parent=11 // pred_fallthru
        _
      // Predicated region
      $region17: #{bilinear_forward.1} parent=11 // pred_check
        %p196 = pneg %p124
      $region18: #{bilinear_forward.1} parent=11 // pred_check_branch
        %198 = sbr.rel (%p196) target = $region20
      $region19: #{bilinear_forward.1} parent=11 // pred_region
        _
      $region20: #{bilinear_forward.1} parent=11 // pred_fallthru
        _
      // Predicated region
      $region21: #{bilinear_forward.1} parent=11 // pred_check
        %p199 = pneg %p145
      $region22: #{bilinear_forward.1} parent=11 // pred_check_branch
        %201 = sbr.rel (%p199) target = $region24
      $region23: #{bilinear_forward.1} parent=11 // pred_region
        _
      $region24: #{bilinear_forward.1} parent=11 // pred_fallthru
        _
    $region12: #{bilinear_forward.1} parent=5 // pred_fallthru
      _
    %p202 = scmp.lt.s32.totalorder %s11, 4
    // Predicated region
    $region25: #{bilinear_forward.1} parent=5 // pred_check
      %p203 = pneg %p202
    $region26: #{bilinear_forward.1} parent=5 // pred_check_branch
      %205 = sbr.rel (%p203) target = $region28
    $region27: #{bilinear_forward.1} parent=5 // pred_region
      // Predicated region
      $region29: #{bilinear_forward.1} parent=27 // pred_check
        %p206 = pneg %p45
      $region30: #{bilinear_forward.1} parent=27 // pred_check_branch
        %208 = sbr.rel (%p206) target = $region32
      $region31: #{bilinear_forward.1} parent=27 // pred_region
        %s209 = smul.u32 4, %s18
        %p210 = scmp.lt.s32.totalorder %s19, 3
        %s211 = scalar_select %p210, %s19, 3
        %p212 = scmp.lt.s32.totalorder %s209, 3
        %s213 = scalar_select %p212, %s209, 3
        %s214 = smul.addr %s211, 4
        %s215 = sadd.s32 %s213, %s214
        %s216 = smul.addr %s215, 4
        %s217 = scalar_lea.vmem %s0, %s216
        %s218 = smul.u32 4, %s18
      $region32: #{bilinear_forward.1} parent=27 // pred_fallthru
        _
      // Predicated region
      $region33: #{bilinear_forward.1} parent=27 // pred_check
        %p219 = pneg %p97
      $region34: #{bilinear_forward.1} parent=27 // pred_check_branch
        %221 = sbr.rel (%p219) target = $region36
      $region35: #{bilinear_forward.1} parent=27 // pred_region
        %s222 = smul.u32 512, %s19
        %p223 = scmp.lt.s32.totalorder %s222, 2047
        %s224 = scalar_select %p223, %s222, 2047
        %s225 = smul.addr %s224, 4
        %s226 = scalar_lea.vmem %s2, %s225
        %s227 = smul.u32 512, %s19
      $region36: #{bilinear_forward.1} parent=27 // pred_fallthru
        _
    $region28: #{bilinear_forward.1} parent=5 // pred_fallthru
      _
    %p228 = scmp.le.s32.totalorder 1, %s11
    %p229 = scmp.lt.s32.totalorder %s11, 5
    %p230 = pnand %p228, %p229
    %p231 = pneg %p230
    // Predicated region
    $region37: #{bilinear_forward.1} parent=5 // pred_check
      _
    $region38: #{bilinear_forward.1} parent=5 // pred_check_branch
      %233 = sbr.rel (%p230) target = $region40
    $region39: #{bilinear_forward.1} parent=5 // pred_region
      %s234 = ssub.s32 %s11, 1
      %s235 = smul.u32 4, %s20
      %p236 = scmp.lt.s32.totalorder %s21, 3
      %s237 = scalar_select %p236, %s21, 3
      %p238 = scmp.lt.s32.totalorder %s235, 3
      %s239 = scalar_select %p238, %s235, 3
      %s240 = smul.addr %s237, 4
      %s241 = sadd.s32 %s239, %s240
      %s242 = smul.addr %s241, 4
      %s243 = scalar_lea.vmem %s0, %s242
      %p244 = pneg %p51
      %p245 = pneg %p48
      %s246 = smul.u32 4, %s20
      %p247 = scmp.lt.s32.totalorder %s246, 3
      %s248 = scalar_select %p247, %s246, 3
      %s249 = smul.addr %s248, 2
      %s250 = smul.addr %s249, 4
      %s251 = scalar_lea.vmem %s1, %s250
      %p252 = pneg %p77
      %p253 = pneg %p74
      %s254 = smul.u32 512, %s21
      %p255 = scmp.lt.s32.totalorder %s254, 2047
      %s256 = scalar_select %p255, %s254, 2047
      %s257 = smul.addr %s256, 4
      %s258 = scalar_lea.vmem %s2, %s257
      %p259 = pneg %p103
      %p260 = pneg %p100
      %p261 = pneg %p124
      %p262 = pneg %p121
      %p263 = pneg %p145
      %p264 = pneg %p142
      %p265 = pneg %p171
      %p266 = pneg %p168
      %s267 = smul.u32 4, %s20
      %p268 = scmp.lt.s32.totalorder %s267, 3
      %s269 = scalar_select %p268, %s267, 3
      %s270 = smul.addr %s269, 8
      %s271 = scalar_lea.vmem %s5, %s270
      %s272 = smul.u32 4, %s20
      %p273 = scmp.lt.s32.totalorder %s21, 3
      %s274 = scalar_select %p273, %s21, 3
      %p275 = scmp.lt.s32.totalorder %s272, 3
      %s276 = scalar_select %p275, %s272, 3
      %s277 = smul.addr %s274, 4
      %s278 = sadd.s32 %s276, %s277
      %s279 = smul.addr %s278, 4
      %s280 = scalar_lea.vmem %s0, %s279
      %s281 = smul.u32 4, %s20
      %s282 = smul.u32 4, %s20
      %p283 = scmp.lt.s32.totalorder %s282, 3
      %s284 = scalar_select %p283, %s282, 3
      %s285 = smul.addr %s284, 2
      %s286 = smul.addr %s285, 4
      %s287 = scalar_lea.vmem %s1, %s286
      %s288 = smul.u32 4, %s20
      %s289 = smul.u32 512, %s21
      %p290 = scmp.lt.s32.totalorder %s289, 2047
      %s291 = scalar_select %p290, %s289, 2047
      %s292 = smul.addr %s291, 4
      %s293 = scalar_lea.vmem %s2, %s292
      %s294 = smul.u32 512, %s21
      %s295 = smul.u32 4, %s20
      %p296 = scmp.lt.s32.totalorder %s295, 3
      %s297 = scalar_select %p296, %s295, 3
      %s298 = smul.addr %s297, 8
      %s299 = scalar_lea.vmem %s5, %s298
      %s300 = smul.u32 4, %s20
      %p302 = scmp.eq.s32.totalorder %s21, 0
      // Predicated region
      $region41: #{bilinear_forward.1} parent=39 // pred_check
        %p303 = pneg %p302
      $region42: #{bilinear_forward.1} parent=39 // pred_check_branch
        %305 = sbr.rel (%p303) target = $region44
      $region43: #{bilinear_forward.1} parent=39 // pred_region
        %v306 = vld [vmem:[%s287] sm:$0xff]
        %v307 = vld [vmem:[%s287 + $0x8] sm:$0xff]
        %v308 = vld [vmem:[%s287 + $0x10] sm:$0xff]
        %v309 = vld [vmem:[%s287 + $0x18] sm:$0xff]
        %v310 = vld [vmem:[%s3] sm:$0xf]
        %v311 = vld [vmem:[%s3 + $0x4] sm:$0xf]
        %v312 = vld [vmem:[%s3 + $0x8] sm:$0xf]
        %v313 = vld [vmem:[%s3 + $0xc] sm:$0xf]
        %v314 = vld [vmem:[%s3 + $0x10] sm:$0xf]
        %v315 = vld [vmem:[%s3 + $0x14] sm:$0xf]
        %v316 = vld [vmem:[%s3 + $0x18] sm:$0xf]
        %v317 = vld [vmem:[%s3 + $0x1c] sm:$0xf]
        %v318 = vld [vmem:[%s3 + $0x20] sm:$0xf]
        %v319 = vld [vmem:[%s3 + $0x24] sm:$0xf]
        %v320 = vld [vmem:[%s3 + $0x28] sm:$0xf]
        %v321 = vld [vmem:[%s3 + $0x2c] sm:$0xf]
        %v322 = vld [vmem:[%s3 + $0x30] sm:$0xf]
        %v323 = vld [vmem:[%s3 + $0x34] sm:$0xf]
        %v324 = vld [vmem:[%s3 + $0x38] sm:$0xf]
        %v325 = vld [vmem:[%s3 + $0x3c] sm:$0xf]
        %v326 = vld [vmem:[%s3 + $0x40] sm:$0xf]
        %v327 = vld [vmem:[%s3 + $0x44] sm:$0xf]
        %v328 = vld [vmem:[%s3 + $0x48] sm:$0xf]
        %v329 = vld [vmem:[%s3 + $0x4c] sm:$0xf]
        %v330 = vld [vmem:[%s3 + $0x50] sm:$0xf]
        %v331 = vld [vmem:[%s3 + $0x54] sm:$0xf]
        %v332 = vld [vmem:[%s3 + $0x58] sm:$0xf]
        %v333 = vld [vmem:[%s3 + $0x5c] sm:$0xf]
        %v334 = vld [vmem:[%s3 + $0x60] sm:$0xf]
        %v335 = vld [vmem:[%s3 + $0x64] sm:$0xf]
        %v336 = vld [vmem:[%s3 + $0x68] sm:$0xf]
        %v337 = vld [vmem:[%s3 + $0x6c] sm:$0xf]
        %v338 = vld [vmem:[%s3 + $0x70] sm:$0xf]
        %v339 = vld [vmem:[%s3 + $0x74] sm:$0xf]
        %v340 = vld [vmem:[%s3 + $0x78] sm:$0xf]
        %v341 = vld [vmem:[%s3 + $0x7c] sm:$0xf]
        %v342 = vld [vmem:[%s4] sm:$0x1]
        %v344 = vlaneseq
        %v345 = vshrl.u32 %v344, 7
        %v346 = vsub.s32 0, %v345
        %v347 = vrot.slane %v342, %v346
        %v353 = vunpack.c.l.b16 %v306
        %v354 = vunpack.c.h.b16 %v306
        %v355 = vunpack.c.l.b16 %v307
        %v356 = vunpack.c.h.b16 %v307
        %v357 = vunpack.c.l.b16 %v308
        %v358 = vunpack.c.h.b16 %v308
        %v359 = vunpack.c.l.b16 %v309
        %v360 = vunpack.c.h.b16 %v309
        %v361 = vpack.c.b16 %v355, %v353
        %v362 = vpack.c.b16 %v356, %v354
        %v363 = vpack.c.b16 %v359, %v357
        %v364 = vpack.c.b16 %v360, %v358
        %v401 = vunpack.c.l.b16 %v310
        %v402 = vunpack.c.l.b16 %v311
        %v403 = vunpack.c.l.b16 %v312
        %v404 = vunpack.c.l.b16 %v313
        %v405 = vunpack.c.l.b16 %v314
        %v406 = vunpack.c.l.b16 %v315
        %v407 = vunpack.c.l.b16 %v316
        %v408 = vunpack.c.l.b16 %v317
        %v409 = vunpack.c.l.b16 %v318
        %v410 = vunpack.c.l.b16 %v319
        %v411 = vunpack.c.l.b16 %v320
        %v412 = vunpack.c.l.b16 %v321
        %v413 = vunpack.c.l.b16 %v322
        %v414 = vunpack.c.l.b16 %v323
        %v415 = vunpack.c.l.b16 %v324
        %v416 = vunpack.c.l.b16 %v325
        %v417 = vunpack.c.l.b16 %v326
        %v418 = vunpack.c.l.b16 %v327
        %v419 = vunpack.c.l.b16 %v328
        %v420 = vunpack.c.l.b16 %v329
        %v421 = vunpack.c.l.b16 %v330
        %v422 = vunpack.c.l.b16 %v331
        %v423 = vunpack.c.l.b16 %v332
        %v424 = vunpack.c.l.b16 %v333
        %v425 = vunpack.c.l.b16 %v334
        %v426 = vunpack.c.l.b16 %v335
        %v427 = vunpack.c.l.b16 %v336
        %v428 = vunpack.c.l.b16 %v337
        %v429 = vunpack.c.l.b16 %v338
        %v430 = vunpack.c.l.b16 %v339
        %v431 = vunpack.c.l.b16 %v340
        %v432 = vunpack.c.l.b16 %v341
        %v433 = vpack.c.b16 %v402, %v401
        %v434 = vpack.c.b16 %v404, %v403
        %v435 = vpack.c.b16 %v406, %v405
        %v436 = vpack.c.b16 %v408, %v407
        %v437 = vpack.c.b16 %v410, %v409
        %v438 = vpack.c.b16 %v412, %v411
        %v439 = vpack.c.b16 %v414, %v413
        %v440 = vpack.c.b16 %v416, %v415
        %v441 = vpack.c.b16 %v418, %v417
        %v442 = vpack.c.b16 %v420, %v419
        %v443 = vpack.c.b16 %v422, %v421
        %v444 = vpack.c.b16 %v424, %v423
        %v445 = vpack.c.b16 %v426, %v425
        %v446 = vpack.c.b16 %v428, %v427
        %v447 = vpack.c.b16 %v430, %v429
        %v448 = vpack.c.b16 %v432, %v431
        %465 = vmatprep.subr.bf16.mxu0 0
        %466 = vmatpush1.bf16.msra.mxu0 %v433
        %467 = vmatprep.subr.bf16.mxu0 0
        %468 = vmatpush1.bf16.msra.mxu0 %v434
        %469 = vmatprep.subr.bf16.mxu0 0
        %470 = vmatpush1.bf16.msra.mxu0 %v435
        %471 = vmatprep.subr.bf16.mxu0 0
        %472 = vmatpush1.bf16.msra.mxu0 %v436
        %473 = vmatprep.subr.bf16.mxu0 0
        %474 = vmatpush1.bf16.msra.mxu0 %v437
        %475 = vmatprep.subr.bf16.mxu0 0
        %476 = vmatpush1.bf16.msra.mxu0 %v438
        %477 = vmatprep.subr.bf16.mxu0 0
        %478 = vmatpush1.bf16.msra.mxu0 %v439
        %479 = vmatprep.subr.bf16.mxu0 0
        %480 = vmatpush1.bf16.msra.mxu0 %v440
        %481 = vmatprep.subr.bf16.mxu0 0
        %482 = vmatpush1.bf16.msra.mxu0 %v441
        %483 = vmatprep.subr.bf16.mxu0 0
        %484 = vmatpush1.bf16.msra.mxu0 %v442
        %485 = vmatprep.subr.bf16.mxu0 0
        %486 = vmatpush1.bf16.msra.mxu0 %v443
        %487 = vmatprep.subr.bf16.mxu0 0
        %488 = vmatpush1.bf16.msra.mxu0 %v444
        %489 = vmatprep.subr.bf16.mxu0 0
        %490 = vmatpush1.bf16.msra.mxu0 %v445
        %491 = vmatprep.subr.bf16.mxu0 0
        %492 = vmatpush1.bf16.msra.mxu0 %v446
        %493 = vmatprep.subr.bf16.mxu0 0
        %494 = vmatpush1.bf16.msra.mxu0 %v447
        %495 = vmatprep.subr.bf16.mxu0 0
        %496 = vmatpush1.bf16.msra.mxu0 %v448
        %497 = vmatprep.mubr.bf16.mxu0 %v362
        %498 = vmatmul.mubr.bf16.gmra.mrb[0].mxu0 %v361
        %v499 = vpop.f32.mrb[0].mxu0
        %v500 = vadd.f32 %v347, %v499
        %v501 = vpop.f32.mrb[0].mxu0
        %v502 = vpop.f32.mrb[0].mxu0
        %v503 = vadd.f32 %v347, %v502
        %v504 = vpop.f32.mrb[0].mxu0
        %505 = vmatprep.mubr.bf16.mxu0 %v364
        %506 = vmatmul.mubr.bf16.gmra.mrb[0].mxu0 %v363
        %v507 = vpop.f32.mrb[0].mxu0
        %v508 = vadd.f32 %v347, %v507
        %v509 = vpop.f32.mrb[0].mxu0
        %v510 = vpop.f32.mrb[0].mxu0
        %v511 = vadd.f32 %v347, %v510
        %v512 = vpop.f32.mrb[0].mxu0
        %513 = vdwg.mxu0
        %514 = vst [vmem:[%s299] sm:$0xff] %v500
        %515 = vst [vmem:[%s299 + $0x8] sm:$0xff] %v503
        %516 = vst [vmem:[%s299 + $0x10] sm:$0xff] %v508
        %517 = vst [vmem:[%s299 + $0x18] sm:$0xff] %v511
      $region44: #{bilinear_forward.1} parent=39 // pred_fallthru
        _
      %v518 = vld [vmem:[%s287 + $0x4] sm:$0xf]
      %v519 = vld [vmem:[%s287 + $0xc] sm:$0xf]
      %v520 = vld [vmem:[%s287 + $0x14] sm:$0xf]
      %v521 = vld [vmem:[%s287 + $0x1c] sm:$0xf]
      %v522 = vld [vmem:[%s280] sm:$0xf]
      %v523 = vld [vmem:[%s280 + $0x4] sm:$0xf]
      %v524 = vld [vmem:[%s280 + $0x8] sm:$0xf]
      %v525 = vld [vmem:[%s280 + $0xc] sm:$0xf]
      %527 = vset.pattern.permute.xlu0 0
      %528 = vperm.xlu0 %527, %v522
      %v529 = vpop.permute.xlu0 %528
      %v532 = vunpack.c.l.s4 839922192
      %v533 = vunpack.c.0.s8 %v532
      %v534 = vlaneseq
      %v535 = vshrl.u32 %v534, 7
      %v536 = vsub.s32 %v533, %v535
      %v537 = vrot.slane %v529, %v536
      %539 = vset.pattern.permute.xlu0 0
      %540 = vperm.xlu0 %539, %v523
      %v541 = vpop.permute.xlu0 %540
      %v544 = vunpack.c.l.s4 839922192
      %v545 = vunpack.c.0.s8 %v544
      %v546 = vlaneseq
      %v547 = vshrl.u32 %v546, 7
      %v548 = vsub.s32 %v545, %v547
      %v549 = vrot.slane %v541, %v548
      %551 = vset.pattern.permute.xlu0 0
      %552 = vperm.xlu0 %551, %v524
      %v553 = vpop.permute.xlu0 %552
      %v556 = vunpack.c.l.s4 839922192
      %v557 = vunpack.c.0.s8 %v556
      %v558 = vlaneseq
      %v559 = vshrl.u32 %v558, 7
      %v560 = vsub.s32 %v557, %v559
      %v561 = vrot.slane %v553, %v560
      %563 = vset.pattern.permute.xlu0 0
      %564 = vperm.xlu0 %563, %v525
      %v565 = vpop.permute.xlu0 %564
      %v568 = vunpack.c.l.s4 839922192
      %v569 = vunpack.c.0.s8 %v568
      %v570 = vlaneseq
      %v571 = vshrl.u32 %v570, 7
      %v572 = vsub.s32 %v569, %v571
      %v573 = vrot.slane %v565, %v572
      %v574 = vmul.bf16 %v537, %v518
      %v575 = vmul.bf16 %v549, %v519
      %v576 = vmul.bf16 %v561, %v520
      %v577 = vmul.bf16 %v573, %v521
      %578 = vset.pattern.permute.xlu0 1
      %579 = vperm.xlu0 %578, %v522
      %v580 = vpop.permute.xlu0 %579
      %v583 = vunpack.c.l.s4 839922192
      %v584 = vunpack.c.0.s8 %v583
      %v585 = vlaneseq
      %v586 = vshrl.u32 %v585, 7
      %v587 = vsub.s32 %v584, %v586
      %v588 = vrot.slane %v580, %v587
      %589 = vset.pattern.permute.xlu0 1
      %590 = vperm.xlu0 %589, %v523
      %v591 = vpop.permute.xlu0 %590
      %v594 = vunpack.c.l.s4 839922192
      %v595 = vunpack.c.0.s8 %v594
      %v596 = vlaneseq
      %v597 = vshrl.u32 %v596, 7
      %v598 = vsub.s32 %v595, %v597
      %v599 = vrot.slane %v591, %v598
      %600 = vset.pattern.permute.xlu0 1
      %601 = vperm.xlu0 %600, %v524
      %v602 = vpop.permute.xlu0 %601
      %v605 = vunpack.c.l.s4 839922192
      %v606 = vunpack.c.0.s8 %v605
      %v607 = vlaneseq
      %v608 = vshrl.u32 %v607, 7
      %v609 = vsub.s32 %v606, %v608
      %v610 = vrot.slane %v602, %v609
      %611 = vset.pattern.permute.xlu0 1
      %612 = vperm.xlu0 %611, %v525
      %v613 = vpop.permute.xlu0 %612
      %v616 = vunpack.c.l.s4 839922192
      %v617 = vunpack.c.0.s8 %v616
      %v618 = vlaneseq
      %v619 = vshrl.u32 %v618, 7
      %v620 = vsub.s32 %v617, %v619
      %v621 = vrot.slane %v613, %v620
      %v622 = vmul.bf16 %v588, %v518
      %v623 = vmul.bf16 %v599, %v519
      %v624 = vmul.bf16 %v610, %v520
      %v625 = vmul.bf16 %v621, %v521
      %626 = vset.pattern.permute.xlu0 2
      %627 = vperm.xlu0 %626, %v522
      %v628 = vpop.permute.xlu0 %627
      %v631 = vunpack.c.l.s4 839922192
      %v632 = vunpack.c.0.s8 %v631
      %v633 = vlaneseq
      %v634 = vshrl.u32 %v633, 7
      %v635 = vsub.s32 %v632, %v634
      %v636 = vrot.slane %v628, %v635
      %637 = vset.pattern.permute.xlu0 2
      %638 = vperm.xlu0 %637, %v523
      %v639 = vpop.permute.xlu0 %638
      %v642 = vunpack.c.l.s4 839922192
      %v643 = vunpack.c.0.s8 %v642
      %v644 = vlaneseq
      %v645 = vshrl.u32 %v644, 7
      %v646 = vsub.s32 %v643, %v645
      %v647 = vrot.slane %v639, %v646
      %648 = vset.pattern.permute.xlu0 2
      %649 = vperm.xlu0 %648, %v524
      %v650 = vpop.permute.xlu0 %649
      %v653 = vunpack.c.l.s4 839922192
      %v654 = vunpack.c.0.s8 %v653
      %v655 = vlaneseq
      %v656 = vshrl.u32 %v655, 7
      %v657 = vsub.s32 %v654, %v656
      %v658 = vrot.slane %v650, %v657
      %659 = vset.pattern.permute.xlu0 2
      %660 = vperm.xlu0 %659, %v525
      %v661 = vpop.permute.xlu0 %660
      %v664 = vunpack.c.l.s4 839922192
      %v665 = vunpack.c.0.s8 %v664
      %v666 = vlaneseq
      %v667 = vshrl.u32 %v666, 7
      %v668 = vsub.s32 %v665, %v667
      %v669 = vrot.slane %v661, %v668
      %v670 = vmul.bf16 %v636, %v518
      %v671 = vmul.bf16 %v647, %v519
      %v672 = vmul.bf16 %v658, %v520
      %v673 = vmul.bf16 %v669, %v521
      %674 = vset.pattern.permute.xlu0 3
      %675 = vperm.xlu0 %674, %v522
      %v676 = vpop.permute.xlu0 %675
      %v679 = vunpack.c.l.s4 839922192
      %v680 = vunpack.c.0.s8 %v679
      %v681 = vlaneseq
      %v682 = vshrl.u32 %v681, 7
      %v683 = vsub.s32 %v680, %v682
      %v684 = vrot.slane %v676, %v683
      %685 = vset.pattern.permute.xlu0 3
      %686 = vperm.xlu0 %685, %v523
      %v687 = vpop.permute.xlu0 %686
      %v690 = vunpack.c.l.s4 839922192
      %v691 = vunpack.c.0.s8 %v690
      %v692 = vlaneseq
      %v693 = vshrl.u32 %v692, 7
      %v694 = vsub.s32 %v691, %v693
      %v695 = vrot.slane %v687, %v694
      %696 = vset.pattern.permute.xlu0 3
      %697 = vperm.xlu0 %696, %v524
      %v698 = vpop.permute.xlu0 %697
      %v701 = vunpack.c.l.s4 839922192
      %v702 = vunpack.c.0.s8 %v701
      %v703 = vlaneseq
      %v704 = vshrl.u32 %v703, 7
      %v705 = vsub.s32 %v702, %v704
      %v706 = vrot.slane %v698, %v705
      %707 = vset.pattern.permute.xlu0 3
      %708 = vperm.xlu0 %707, %v525
      %v709 = vpop.permute.xlu0 %708
      %v712 = vunpack.c.l.s4 839922192
      %v713 = vunpack.c.0.s8 %v712
      %v714 = vlaneseq
      %v715 = vshrl.u32 %v714, 7
      %v716 = vsub.s32 %v713, %v715
      %v717 = vrot.slane %v709, %v716
      %v718 = vmul.bf16 %v684, %v518
      %v719 = vmul.bf16 %v695, %v519
      %v720 = vmul.bf16 %v706, %v520
      %v721 = vmul.bf16 %v717, %v521
      %v726 = vunpack.c.l.b16 %v574
      %v727 = vunpack.c.l.b16 %v575
      %v728 = vunpack.c.l.b16 %v576
      %v729 = vunpack.c.l.b16 %v577
      %v730 = vpack.c.b16 %v727, %v726
      %v731 = vpack.c.b16 %v729, %v728
      %v738 = vunpack.c.l.b16 %v622
      %v739 = vunpack.c.l.b16 %v623
      %v740 = vunpack.c.l.b16 %v624
      %v741 = vunpack.c.l.b16 %v625
      %v742 = vpack.c.b16 %v739, %v738
      %v743 = vpack.c.b16 %v741, %v740
      %v750 = vunpack.c.l.b16 %v670
      %v751 = vunpack.c.l.b16 %v671
      %v752 = vunpack.c.l.b16 %v672
      %v753 = vunpack.c.l.b16 %v673
      %v754 = vpack.c.b16 %v751, %v750
      %v755 = vpack.c.b16 %v753, %v752
      %v762 = vunpack.c.l.b16 %v718
      %v763 = vunpack.c.l.b16 %v719
      %v764 = vunpack.c.l.b16 %v720
      %v765 = vunpack.c.l.b16 %v721
      %v766 = vpack.c.b16 %v763, %v762
      %v767 = vpack.c.b16 %v765, %v764
      %v770 = vld [vmem:[%s293] sm:$0xf]
      %v771 = vld [vmem:[%s293 + $0x4] sm:$0xf]
      %v772 = vld [vmem:[%s293 + $0x8] sm:$0xf]
      %v773 = vld [vmem:[%s293 + $0xc] sm:$0xf]
      %v774 = vld [vmem:[%s293 + $0x10] sm:$0xf]
      %v775 = vld [vmem:[%s293 + $0x14] sm:$0xf]
      %v776 = vld [vmem:[%s293 + $0x18] sm:$0xf]
      %v777 = vld [vmem:[%s293 + $0x1c] sm:$0xf]
      %v778 = vld [vmem:[%s293 + $0x20] sm:$0xf]
      %v779 = vld [vmem:[%s293 + $0x24] sm:$0xf]
      %v780 = vld [vmem:[%s293 + $0x28] sm:$0xf]
      %v781 = vld [vmem:[%s293 + $0x2c] sm:$0xf]
      %v782 = vld [vmem:[%s293 + $0x30] sm:$0xf]
      %v783 = vld [vmem:[%s293 + $0x34] sm:$0xf]
      %v784 = vld [vmem:[%s293 + $0x38] sm:$0xf]
      %v785 = vld [vmem:[%s293 + $0x3c] sm:$0xf]
      %v786 = vld [vmem:[%s293 + $0x40] sm:$0xf]
      %v787 = vld [vmem:[%s293 + $0x44] sm:$0xf]
      %v788 = vld [vmem:[%s293 + $0x48] sm:$0xf]
      %v789 = vld [vmem:[%s293 + $0x4c] sm:$0xf]
      %v790 = vld [vmem:[%s293 + $0x50] sm:$0xf]
      %v791 = vld [vmem:[%s293 + $0x54] sm:$0xf]
      %v792 = vld [vmem:[%s293 + $0x58] sm:$0xf]
      %v793 = vld [vmem:[%s293 + $0x5c] sm:$0xf]
      %v794 = vld [vmem:[%s293 + $0x60] sm:$0xf]
      %v795 = vld [vmem:[%s293 + $0x64] sm:$0xf]
      %v796 = vld [vmem:[%s293 + $0x68] sm:$0xf]
      %v797 = vld [vmem:[%s293 + $0x6c] sm:$0xf]
      %v798 = vld [vmem:[%s293 + $0x70] sm:$0xf]
      %v799 = vld [vmem:[%s293 + $0x74] sm:$0xf]
      %v800 = vld [vmem:[%s293 + $0x78] sm:$0xf]
      %v801 = vld [vmem:[%s293 + $0x7c] sm:$0xf]
      %v802 = vld [vmem:[%s293 + $0x80] sm:$0xf]
      %v803 = vld [vmem:[%s293 + $0x84] sm:$0xf]
      %v804 = vld [vmem:[%s293 + $0x88] sm:$0xf]
      %v805 = vld [vmem:[%s293 + $0x8c] sm:$0xf]
      %v806 = vld [vmem:[%s293 + $0x90] sm:$0xf]
      %v807 = vld [vmem:[%s293 + $0x94] sm:$0xf]
      %v808 = vld [vmem:[%s293 + $0x98] sm:$0xf]
      %v809 = vld [vmem:[%s293 + $0x9c] sm:$0xf]
      %v810 = vld [vmem:[%s293 + $0xa0] sm:$0xf]
      %v811 = vld [vmem:[%s293 + $0xa4] sm:$0xf]
      %v812 = vld [vmem:[%s293 + $0xa8] sm:$0xf]
      %v813 = vld [vmem:[%s293 + $0xac] sm:$0xf]
      %v814 = vld [vmem:[%s293 + $0xb0] sm:$0xf]
      %v815 = vld [vmem:[%s293 + $0xb4] sm:$0xf]
      %v816 = vld [vmem:[%s293 + $0xb8] sm:$0xf]
      %v817 = vld [vmem:[%s293 + $0xbc] sm:$0xf]
      %v818 = vld [vmem:[%s293 + $0xc0] sm:$0xf]
      %v819 = vld [vmem:[%s293 + $0xc4] sm:$0xf]
      %v820 = vld [vmem:[%s293 + $0xc8] sm:$0xf]
      %v821 = vld [vmem:[%s293 + $0xcc] sm:$0xf]
      %v822 = vld [vmem:[%s293 + $0xd0] sm:$0xf]
      %v823 = vld [vmem:[%s293 + $0xd4] sm:$0xf]
      %v824 = vld [vmem:[%s293 + $0xd8] sm:$0xf]
      %v825 = vld [vmem:[%s293 + $0xdc] sm:$0xf]
      %v826 = vld [vmem:[%s293 + $0xe0] sm:$0xf]
      %v827 = vld [vmem:[%s293 + $0xe4] sm:$0xf]
      %v828 = vld [vmem:[%s293 + $0xe8] sm:$0xf]
      %v829 = vld [vmem:[%s293 + $0xec] sm:$0xf]
      %v830 = vld [vmem:[%s293 + $0xf0] sm:$0xf]
      %v831 = vld [vmem:[%s293 + $0xf4] sm:$0xf]
      %v832 = vld [vmem:[%s293 + $0xf8] sm:$0xf]
      %v833 = vld [vmem:[%s293 + $0xfc] sm:$0xf]
      %v834 = vld [vmem:[%s299] sm:$0xff]
      %v835 = vld [vmem:[%s299 + $0x8] sm:$0xff]
      %v836 = vld [vmem:[%s299 + $0x10] sm:$0xff]
      %v837 = vld [vmem:[%s299 + $0x18] sm:$0xff]
      %v902 = vunpack.c.l.b16 %v770
      %v903 = vunpack.c.l.b16 %v771
      %v904 = vunpack.c.l.b16 %v772
      %v905 = vunpack.c.l.b16 %v773
      %v906 = vunpack.c.l.b16 %v774
      %v907 = vunpack.c.l.b16 %v775
      %v908 = vunpack.c.l.b16 %v776
      %v909 = vunpack.c.l.b16 %v777
      %v910 = vunpack.c.l.b16 %v778
      %v911 = vunpack.c.l.b16 %v779
      %v912 = vunpack.c.l.b16 %v780
      %v913 = vunpack.c.l.b16 %v781
      %v914 = vunpack.c.l.b16 %v782
      %v915 = vunpack.c.l.b16 %v783
      %v916 = vunpack.c.l.b16 %v784
      %v917 = vunpack.c.l.b16 %v785
      %v918 = vunpack.c.l.b16 %v786
      %v919 = vunpack.c.l.b16 %v787
      %v920 = vunpack.c.l.b16 %v788
      %v921 = vunpack.c.l.b16 %v789
      %v922 = vunpack.c.l.b16 %v790
      %v923 = vunpack.c.l.b16 %v791
      %v924 = vunpack.c.l.b16 %v792
      %v925 = vunpack.c.l.b16 %v793
      %v926 = vunpack.c.l.b16 %v794
      %v927 = vunpack.c.l.b16 %v795
      %v928 = vunpack.c.l.b16 %v796
      %v929 = vunpack.c.l.b16 %v797
      %v930 = vunpack.c.l.b16 %v798
      %v931 = vunpack.c.l.b16 %v799
      %v932 = vunpack.c.l.b16 %v800
      %v933 = vunpack.c.l.b16 %v801
      %v934 = vunpack.c.l.b16 %v802
      %v935 = vunpack.c.l.b16 %v803
      %v936 = vunpack.c.l.b16 %v804
      %v937 = vunpack.c.l.b16 %v805
      %v938 = vunpack.c.l.b16 %v806
      %v939 = vunpack.c.l.b16 %v807
      %v940 = vunpack.c.l.b16 %v808
      %v941 = vunpack.c.l.b16 %v809
      %v942 = vunpack.c.l.b16 %v810
      %v943 = vunpack.c.l.b16 %v811
      %v944 = vunpack.c.l.b16 %v812
      %v945 = vunpack.c.l.b16 %v813
      %v946 = vunpack.c.l.b16 %v814
      %v947 = vunpack.c.l.b16 %v815
      %v948 = vunpack.c.l.b16 %v816
      %v949 = vunpack.c.l.b16 %v817
      %v950 = vunpack.c.l.b16 %v818
      %v951 = vunpack.c.l.b16 %v819
      %v952 = vunpack.c.l.b16 %v820
      %v953 = vunpack.c.l.b16 %v821
      %v954 = vunpack.c.l.b16 %v822
      %v955 = vunpack.c.l.b16 %v823
      %v956 = vunpack.c.l.b16 %v824
      %v957 = vunpack.c.l.b16 %v825
      %v958 = vunpack.c.l.b16 %v826
      %v959 = vunpack.c.l.b16 %v827
      %v960 = vunpack.c.l.b16 %v828
      %v961 = vunpack.c.l.b16 %v829
      %v962 = vunpack.c.l.b16 %v830
      %v963 = vunpack.c.l.b16 %v831
      %v964 = vunpack.c.l.b16 %v832
      %v965 = vunpack.c.l.b16 %v833
      %v966 = vpack.c.b16 %v903, %v902
      %v967 = vpack.c.b16 %v905, %v904
      %v968 = vpack.c.b16 %v907, %v906
      %v969 = vpack.c.b16 %v909, %v908
      %v970 = vpack.c.b16 %v911, %v910
      %v971 = vpack.c.b16 %v913, %v912
      %v972 = vpack.c.b16 %v915, %v914
      %v973 = vpack.c.b16 %v917, %v916
      %v974 = vpack.c.b16 %v919, %v918
      %v975 = vpack.c.b16 %v921, %v920
      %v976 = vpack.c.b16 %v923, %v922
      %v977 = vpack.c.b16 %v925, %v924
      %v978 = vpack.c.b16 %v927, %v926
      %v979 = vpack.c.b16 %v929, %v928
      %v980 = vpack.c.b16 %v931, %v930
      %v981 = vpack.c.b16 %v933, %v932
      %v982 = vpack.c.b16 %v935, %v934
      %v983 = vpack.c.b16 %v937, %v936
      %v984 = vpack.c.b16 %v939, %v938
      %v985 = vpack.c.b16 %v941, %v940
      %v986 = vpack.c.b16 %v943, %v942
      %v987 = vpack.c.b16 %v945, %v944
      %v988 = vpack.c.b16 %v947, %v946
      %v989 = vpack.c.b16 %v949, %v948
      %v990 = vpack.c.b16 %v951, %v950
      %v991 = vpack.c.b16 %v953, %v952
      %v992 = vpack.c.b16 %v955, %v954
      %v993 = vpack.c.b16 %v957, %v956
      %v994 = vpack.c.b16 %v959, %v958
      %v995 = vpack.c.b16 %v961, %v960
      %v996 = vpack.c.b16 %v963, %v962
      %v997 = vpack.c.b16 %v965, %v964
      %1030 = vmatprep.subr.bf16.mxu0 0
      %1031 = vmatpush1.bf16.msra.mxu0 %v966
      %1032 = vmatprep.subr.bf16.mxu0 0
      %1033 = vmatpush1.bf16.msra.mxu0 %v967
      %1034 = vmatprep.subr.bf16.mxu0 0
      %1035 = vmatpush1.bf16.msra.mxu0 %v968
      %1036 = vmatprep.subr.bf16.mxu0 0
      %1037 = vmatpush1.bf16.msra.mxu0 %v969
      %1038 = vmatprep.subr.bf16.mxu0 0
      %1039 = vmatpush1.bf16.msra.mxu0 %v970
      %1040 = vmatprep.subr.bf16.mxu0 0
      %1041 = vmatpush1.bf16.msra.mxu0 %v971
      %1042 = vmatprep.subr.bf16.mxu0 0
      %1043 = vmatpush1.bf16.msra.mxu0 %v972
      %1044 = vmatprep.subr.bf16.mxu0 0
      %1045 = vmatpush1.bf16.msra.mxu0 %v973
      %1046 = vmatprep.subr.bf16.mxu0 0
      %1047 = vmatpush1.bf16.msra.mxu0 %v974
      %1048 = vmatprep.subr.bf16.mxu0 0
      %1049 = vmatpush1.bf16.msra.mxu0 %v975
      %1050 = vmatprep.subr.bf16.mxu0 0
      %1051 = vmatpush1.bf16.msra.mxu0 %v976
      %1052 = vmatprep.subr.bf16.mxu0 0
      %1053 = vmatpush1.bf16.msra.mxu0 %v977
      %1054 = vmatprep.subr.bf16.mxu0 0
      %1055 = vmatpush1.bf16.msra.mxu0 %v978
      %1056 = vmatprep.subr.bf16.mxu0 0
      %1057 = vmatpush1.bf16.msra.mxu0 %v979
      %1058 = vmatprep.subr.bf16.mxu0 0
      %1059 = vmatpush1.bf16.msra.mxu0 %v980
      %1060 = vmatprep.subr.bf16.mxu0 0
      %1061 = vmatpush1.bf16.msra.mxu0 %v981
      %1062 = vmatprep.mubr.bf16.mxu0 %v742
      %1063 = vmatmul.mubr.bf16.gmra.mrb[0].mxu0 %v730
      %v1064 = vpop.f32.mrb[0].mxu0
      %v1065 = vadd.f32 0.0, %v1064
      %v1066 = vpop.f32.mrb[0].mxu0
      %v1067 = vpop.f32.mrb[0].mxu0
      %v1068 = vadd.f32 0.0, %v1067
      %v1069 = vpop.f32.mrb[0].mxu0
      %1070 = vmatprep.mubr.bf16.mxu0 %v743
      %1071 = vmatmul.mubr.bf16.gmra.mrb[0].mxu0 %v731
      %v1072 = vpop.f32.mrb[0].mxu0
      %v1073 = vadd.f32 0.0, %v1072
      %v1074 = vpop.f32.mrb[0].mxu0
      %v1075 = vpop.f32.mrb[0].mxu0
      %v1076 = vadd.f32 0.0, %v1075
      %v1077 = vpop.f32.mrb[0].mxu0
      %1078 = vdwg.mxu0
      %1079 = vmatprep.subr.bf16.mxu0 0
      %1080 = vmatpush1.bf16.msra.mxu0 %v982
      %1081 = vmatprep.subr.bf16.mxu0 0
      %1082 = vmatpush1.bf16.msra.mxu0 %v983
      %1083 = vmatprep.subr.bf16.mxu0 0
      %1084 = vmatpush1.bf16.msra.mxu0 %v984
      %1085 = vmatprep.subr.bf16.mxu0 0
      %1086 = vmatpush1.bf16.msra.mxu0 %v985
      %1087 = vmatprep.subr.bf16.mxu0 0
      %1088 = vmatpush1.bf16.msra.mxu0 %v986
      %1089 = vmatprep.subr.bf16.mxu0 0
      %1090 = vmatpush1.bf16.msra.mxu0 %v987
      %1091 = vmatprep.subr.bf16.mxu0 0
      %1092 = vmatpush1.bf16.msra.mxu0 %v988
      %1093 = vmatprep.subr.bf16.mxu0 0
      %1094 = vmatpush1.bf16.msra.mxu0 %v989
      %1095 = vmatprep.subr.bf16.mxu0 0
      %1096 = vmatpush1.bf16.msra.mxu0 %v990
      %1097 = vmatprep.subr.bf16.mxu0 0
      %1098 = vmatpush1.bf16.msra.mxu0 %v991
      %1099 = vmatprep.subr.bf16.mxu0 0
      %1100 = vmatpush1.bf16.msra.mxu0 %v992
      %1101 = vmatprep.subr.bf16.mxu0 0
      %1102 = vmatpush1.bf16.msra.mxu0 %v993
      %1103 = vmatprep.subr.bf16.mxu0 0
      %1104 = vmatpush1.bf16.msra.mxu0 %v994
      %1105 = vmatprep.subr.bf16.mxu0 0
      %1106 = vmatpush1.bf16.msra.mxu0 %v995
      %1107 = vmatprep.subr.bf16.mxu0 0
      %1108 = vmatpush1.bf16.msra.mxu0 %v996
      %1109 = vmatprep.subr.bf16.mxu0 0
      %1110 = vmatpush1.bf16.msra.mxu0 %v997
      %1111 = vmatprep.mubr.bf16.mxu0 %v766
      %1112 = vmatmul.mubr.bf16.gmra.mrb[0].mxu0 %v754
      %v1113 = vpop.f32.mrb[0].mxu0
      %v1114 = vadd.f32 %v1065, %v1113
      %v1115 = vpop.f32.mrb[0].mxu0
      %v1116 = vpop.f32.mrb[0].mxu0
      %v1117 = vadd.f32 %v1068, %v1116
      %v1118 = vpop.f32.mrb[0].mxu0
      %1119 = vmatprep.mubr.bf16.mxu0 %v767
      %1120 = vmatmul.mubr.bf16.gmra.mrb[0].mxu0 %v755
      %v1121 = vpop.f32.mrb[0].mxu0
      %v1122 = vadd.f32 %v1073, %v1121
      %v1123 = vpop.f32.mrb[0].mxu0
      %v1124 = vpop.f32.mrb[0].mxu0
      %v1125 = vadd.f32 %v1076, %v1124
      %v1126 = vpop.f32.mrb[0].mxu0
      %1127 = vdwg.mxu0
      %v1128 = vadd.f32 %v834, %v1114
      %v1129 = vadd.f32 %v835, %v1117
      %v1130 = vadd.f32 %v836, %v1122
      %v1131 = vadd.f32 %v837, %v1125
      %1132 = vst [vmem:[%s299] sm:$0xff] %v1128
      %1133 = vst [vmem:[%s299 + $0x8] sm:$0xff] %v1129
      %1134 = vst [vmem:[%s299 + $0x10] sm:$0xff] %v1130
      %1135 = vst [vmem:[%s299 + $0x18] sm:$0xff] %v1131
      %1136 = vset.pattern.permute.xlu0 4
      %1137 = vperm.xlu0 %1136, %v522
      %v1138 = vpop.permute.xlu0 %1137
      %v1141 = vunpack.c.l.s4 839922192
      %v1142 = vunpack.c.0.s8 %v1141
      %v1143 = vlaneseq
      %v1144 = vshrl.u32 %v1143, 7
      %v1145 = vsub.s32 %v1142, %v1144
      %v1146 = vrot.slane %v1138, %v1145
      %1147 = vset.pattern.permute.xlu0 4
      %1148 = vperm.xlu0 %1147, %v523
      %v1149 = vpop.permute.xlu0 %1148
      %v1152 = vunpack.c.l.s4 839922192
      %v1153 = vunpack.c.0.s8 %v1152
      %v1154 = vlaneseq
      %v1155 = vshrl.u32 %v1154, 7
      %v1156 = vsub.s32 %v1153, %v1155
      %v1157 = vrot.slane %v1149, %v1156
      %1158 = vset.pattern.permute.xlu0 4
      %1159 = vperm.xlu0 %1158, %v524
      %v1160 = vpop.permute.xlu0 %1159
      %v1163 = vunpack.c.l.s4 839922192
      %v1164 = vunpack.c.0.s8 %v1163
      %v1165 = vlaneseq
      %v1166 = vshrl.u32 %v1165, 7
      %v1167 = vsub.s32 %v1164, %v1166
      %v1168 = vrot.slane %v1160, %v1167
      %1169 = vset.pattern.permute.xlu0 4
      %1170 = vperm.xlu0 %1169, %v525
      %v1171 = vpop.permute.xlu0 %1170
      %v1174 = vunpack.c.l.s4 839922192
      %v1175 = vunpack.c.0.s8 %v1174
      %v1176 = vlaneseq
      %v1177 = vshrl.u32 %v1176, 7
      %v1178 = vsub.s32 %v1175, %v1177
      %v1179 = vrot.slane %v1171, %v1178
      %v1180 = vmul.bf16 %v1146, %v518
      %v1181 = vmul.bf16 %v1157, %v519
      %v1182 = vmul.bf16 %v1168, %v520
      %v1183 = vmul.bf16 %v1179, %v521
      %1184 = vset.pattern.permute.xlu0 5
      %1185 = vperm.xlu0 %1184, %v522
      %v1186 = vpop.permute.xlu0 %1185
      %v1189 = vunpack.c.l.s4 839922192
      %v1190 = vunpack.c.0.s8 %v1189
      %v1191 = vlaneseq
      %v1192 = vshrl.u32 %v1191, 7
      %v1193 = vsub.s32 %v1190, %v1192
      %v1194 = vrot.slane %v1186, %v1193
      %1195 = vset.pattern.permute.xlu0 5
      %1196 = vperm.xlu0 %1195, %v523
      %v1197 = vpop.permute.xlu0 %1196
      %v1200 = vunpack.c.l.s4 839922192
      %v1201 = vunpack.c.0.s8 %v1200
      %v1202 = vlaneseq
      %v1203 = vshrl.u32 %v1202, 7
      %v1204 = vsub.s32 %v1201, %v1203
      %v1205 = vrot.slane %v1197, %v1204
      %1206 = vset.pattern.permute.xlu0 5
      %1207 = vperm.xlu0 %1206, %v524
      %v1208 = vpop.permute.xlu0 %1207
      %v1211 = vunpack.c.l.s4 839922192
      %v1212 = vunpack.c.0.s8 %v1211
      %v1213 = vlaneseq
      %v1214 = vshrl.u32 %v1213, 7
      %v1215 = vsub.s32 %v1212, %v1214
      %v1216 = vrot.slane %v1208, %v1215
      %1217 = vset.pattern.permute.xlu0 5
      %1218 = vperm.xlu0 %1217, %v525
      %v1219 = vpop.permute.xlu0 %1218
      %v1222 = vunpack.c.l.s4 839922192
      %v1223 = vunpack.c.0.s8 %v1222
      %v1224 = vlaneseq
      %v1225 = vshrl.u32 %v1224, 7
      %v1226 = vsub.s32 %v1223, %v1225
      %v1227 = vrot.slane %v1219, %v1226
      %v1228 = vmul.bf16 %v1194, %v518
      %v1229 = vmul.bf16 %v1205, %v519
      %v1230 = vmul.bf16 %v1216, %v520
      %v1231 = vmul.bf16 %v1227, %v521
      %1232 = vset.pattern.permute.xlu0 6
      %1233 = vperm.xlu0 %1232, %v522
      %v1234 = vpop.permute.xlu0 %1233
      %v1237 = vunpack.c.l.s4 839922192
      %v1238 = vunpack.c.0.s8 %v1237
      %v1239 = vlaneseq
      %v1240 = vshrl.u32 %v1239, 7
      %v1241 = vsub.s32 %v1238, %v1240
      %v1242 = vrot.slane %v1234, %v1241
      %1243 = vset.pattern.permute.xlu0 6
      %1244 = vperm.xlu0 %1243, %v523
      %v1245 = vpop.permute.xlu0 %1244
      %v1248 = vunpack.c.l.s4 839922192
      %v1249 = vunpack.c.0.s8 %v1248
      %v1250 = vlaneseq
      %v1251 = vshrl.u32 %v1250, 7
      %v1252 = vsub.s32 %v1249, %v1251
      %v1253 = vrot.slane %v1245, %v1252
      %1254 = vset.pattern.permute.xlu0 6
      %1255 = vperm.xlu0 %1254, %v524
      %v1256 = vpop.permute.xlu0 %1255
      %v1259 = vunpack.c.l.s4 839922192
      %v1260 = vunpack.c.0.s8 %v1259
      %v1261 = vlaneseq
      %v1262 = vshrl.u32 %v1261, 7
      %v1263 = vsub.s32 %v1260, %v1262
      %v1264 = vrot.slane %v1256, %v1263
      %1265 = vset.pattern.permute.xlu0 6
      %1266 = vperm.xlu0 %1265, %v525
      %v1267 = vpop.permute.xlu0 %1266
      %v1270 = vunpack.c.l.s4 839922192
      %v1271 = vunpack.c.0.s8 %v1270
      %v1272 = vlaneseq
      %v1273 = vshrl.u32 %v1272, 7
      %v1274 = vsub.s32 %v1271, %v1273
      %v1275 = vrot.slane %v1267, %v1274
      %v1276 = vmul.bf16 %v1242, %v518
      %v1277 = vmul.bf16 %v1253, %v519
      %v1278 = vmul.bf16 %v1264, %v520
      %v1279 = vmul.bf16 %v1275, %v521
      %1280 = vset.pattern.permute.xlu0 7
      %1281 = vperm.xlu0 %1280, %v522
      %v1282 = vpop.permute.xlu0 %1281
      %v1285 = vunpack.c.l.s4 839922192
      %v1286 = vunpack.c.0.s8 %v1285
      %v1287 = vlaneseq
      %v1288 = vshrl.u32 %v1287, 7
      %v1289 = vsub.s32 %v1286, %v1288
      %v1290 = vrot.slane %v1282, %v1289
      %1291 = vset.pattern.permute.xlu0 7
      %1292 = vperm.xlu0 %1291, %v523
      %v1293 = vpop.permute.xlu0 %1292
      %v1296 = vunpack.c.l.s4 839922192
      %v1297 = vunpack.c.0.s8 %v1296
      %v1298 = vlaneseq
      %v1299 = vshrl.u32 %v1298, 7
      %v1300 = vsub.s32 %v1297, %v1299
      %v1301 = vrot.slane %v1293, %v1300
      %1302 = vset.pattern.permute.xlu0 7
      %1303 = vperm.xlu0 %1302, %v524
      %v1304 = vpop.permute.xlu0 %1303
      %v1307 = vunpack.c.l.s4 839922192
      %v1308 = vunpack.c.0.s8 %v1307
      %v1309 = vlaneseq
      %v1310 = vshrl.u32 %v1309, 7
      %v1311 = vsub.s32 %v1308, %v1310
      %v1312 = vrot.slane %v1304, %v1311
      %1313 = vset.pattern.permute.xlu0 7
      %1314 = vperm.xlu0 %1313, %v525
      %v1315 = vpop.permute.xlu0 %1314
      %v1318 = vunpack.c.l.s4 839922192
      %v1319 = vunpack.c.0.s8 %v1318
      %v1320 = vlaneseq
      %v1321 = vshrl.u32 %v1320, 7
      %v1322 = vsub.s32 %v1319, %v1321
      %v1323 = vrot.slane %v1315, %v1322
      %v1324 = vmul.bf16 %v1290, %v518
      %v1325 = vmul.bf16 %v1301, %v519
      %v1326 = vmul.bf16 %v1312, %v520
      %v1327 = vmul.bf16 %v1323, %v521
      %v1332 = vunpack.c.l.b16 %v1180
      %v1333 = vunpack.c.l.b16 %v1181
      %v1334 = vunpack.c.l.b16 %v1182
      %v1335 = vunpack.c.l.b16 %v1183
      %v1336 = vpack.c.b16 %v1333, %v1332
      %v1337 = vpack.c.b16 %v1335, %v1334
      %v1344 = vunpack.c.l.b16 %v1228
      %v1345 = vunpack.c.l.b16 %v1229
      %v1346 = vunpack.c.l.b16 %v1230
      %v1347 = vunpack.c.l.b16 %v1231
      %v1348 = vpack.c.b16 %v1345, %v1344
      %v1349 = vpack.c.b16 %v1347, %v1346
      %v1356 = vunpack.c.l.b16 %v1276
      %v1357 = vunpack.c.l.b16 %v1277
      %v1358 = vunpack.c.l.b16 %v1278
      %v1359 = vunpack.c.l.b16 %v1279
      %v1360 = vpack.c.b16 %v1357, %v1356
      %v1361 = vpack.c.b16 %v1359, %v1358
      %v1368 = vunpack.c.l.b16 %v1324
      %v1369 = vunpack.c.l.b16 %v1325
      %v1370 = vunpack.c.l.b16 %v1326
      %v1371 = vunpack.c.l.b16 %v1327
      %v1372 = vpack.c.b16 %v1369, %v1368
      %v1373 = vpack.c.b16 %v1371, %v1370
      %v1376 = vld [vmem:[%s293 + $0x100] sm:$0xf]
      %v1377 = vld [vmem:[%s293 + $0x104] sm:$0xf]
      %v1378 = vld [vmem:[%s293 + $0x108] sm:$0xf]
      %v1379 = vld [vmem:[%s293 + $0x10c] sm:$0xf]
      %v1380 = vld [vmem:[%s293 + $0x110] sm:$0xf]
      %v1381 = vld [vmem:[%s293 + $0x114] sm:$0xf]
      %v1382 = vld [vmem:[%s293 + $0x118] sm:$0xf]
      %v1383 = vld [vmem:[%s293 + $0x11c] sm:$0xf]
      %v1384 = vld [vmem:[%s293 + $0x120] sm:$0xf]
      %v1385 = vld [vmem:[%s293 + $0x124] sm:$0xf]
      %v1386 = vld [vmem:[%s293 + $0x128] sm:$0xf]
      %v1387 = vld [vmem:[%s293 + $0x12c] sm:$0xf]
      %v1388 = vld [vmem:[%s293 + $0x130] sm:$0xf]
      %v1389 = vld [vmem:[%s293 + $0x134] sm:$0xf]
      %v1390 = vld [vmem:[%s293 + $0x138] sm:$0xf]
      %v1391 = vld [vmem:[%s293 + $0x13c] sm:$0xf]
      %v1392 = vld [vmem:[%s293 + $0x140] sm:$0xf]
      %v1393 = vld [vmem:[%s293 + $0x144] sm:$0xf]
      %v1394 = vld [vmem:[%s293 + $0x148] sm:$0xf]
      %v1395 = vld [vmem:[%s293 + $0x14c] sm:$0xf]
      %v1396 = vld [vmem:[%s293 + $0x150] sm:$0xf]
      %v1397 = vld [vmem:[%s293 + $0x154] sm:$0xf]
      %v1398 = vld [vmem:[%s293 + $0x158] sm:$0xf]
      %v1399 = vld [vmem:[%s293 + $0x15c] sm:$0xf]
      %v1400 = vld [vmem:[%s293 + $0x160] sm:$0xf]
      %v1401 = vld [vmem:[%s293 + $0x164] sm:$0xf]
      %v1402 = vld [vmem:[%s293 + $0x168] sm:$0xf]
      %v1403 = vld [vmem:[%s293 + $0x16c] sm:$0xf]
      %v1404 = vld [vmem:[%s293 + $0x170] sm:$0xf]
      %v1405 = vld [vmem:[%s293 + $0x174] sm:$0xf]
      %v1406 = vld [vmem:[%s293 + $0x178] sm:$0xf]
      %v1407 = vld [vmem:[%s293 + $0x17c] sm:$0xf]
      %v1408 = vld [vmem:[%s293 + $0x180] sm:$0xf]
      %v1409 = vld [vmem:[%s293 + $0x184] sm:$0xf]
      %v1410 = vld [vmem:[%s293 + $0x188] sm:$0xf]
      %v1411 = vld [vmem:[%s293 + $0x18c] sm:$0xf]
      %v1412 = vld [vmem:[%s293 + $0x190] sm:$0xf]
      %v1413 = vld [vmem:[%s293 + $0x194] sm:$0xf]
      %v1414 = vld [vmem:[%s293 + $0x198] sm:$0xf]
      %v1415 = vld [vmem:[%s293 + $0x19c] sm:$0xf]
      %v1416 = vld [vmem:[%s293 + $0x1a0] sm:$0xf]
      %v1417 = vld [vmem:[%s293 + $0x1a4] sm:$0xf]
      %v1418 = vld [vmem:[%s293 + $0x1a8] sm:$0xf]
      %v1419 = vld [vmem:[%s293 + $0x1ac] sm:$0xf]
      %v1420 = vld [vmem:[%s293 + $0x1b0] sm:$0xf]
      %v1421 = vld [vmem:[%s293 + $0x1b4] sm:$0xf]
      %v1422 = vld [vmem:[%s293 + $0x1b8] sm:$0xf]
      %v1423 = vld [vmem:[%s293 + $0x1bc] sm:$0xf]
      %v1424 = vld [vmem:[%s293 + $0x1c0] sm:$0xf]
      %v1425 = vld [vmem:[%s293 + $0x1c4] sm:$0xf]
      %v1426 = vld [vmem:[%s293 + $0x1c8] sm:$0xf]
      %v1427 = vld [vmem:[%s293 + $0x1cc] sm:$0xf]
      %v1428 = vld [vmem:[%s293 + $0x1d0] sm:$0xf]
      %v1429 = vld [vmem:[%s293 + $0x1d4] sm:$0xf]
      %v1430 = vld [vmem:[%s293 + $0x1d8] sm:$0xf]
      %v1431 = vld [vmem:[%s293 + $0x1dc] sm:$0xf]
      %v1432 = vld [vmem:[%s293 + $0x1e0] sm:$0xf]
      %v1433 = vld [vmem:[%s293 + $0x1e4] sm:$0xf]
      %v1434 = vld [vmem:[%s293 + $0x1e8] sm:$0xf]
      %v1435 = vld [vmem:[%s293 + $0x1ec] sm:$0xf]
      %v1436 = vld [vmem:[%s293 + $0x1f0] sm:$0xf]
      %v1437 = vld [vmem:[%s293 + $0x1f4] sm:$0xf]
      %v1438 = vld [vmem:[%s293 + $0x1f8] sm:$0xf]
      %v1439 = vld [vmem:[%s293 + $0x1fc] sm:$0xf]
      %v1440 = vld [vmem:[%s299] sm:$0xff]
      %v1441 = vld [vmem:[%s299 + $0x8] sm:$0xff]
      %v1442 = vld [vmem:[%s299 + $0x10] sm:$0xff]
      %v1443 = vld [vmem:[%s299 + $0x18] sm:$0xff]
      %v1508 = vunpack.c.l.b16 %v1376
      %v1509 = vunpack.c.l.b16 %v1377
      %v1510 = vunpack.c.l.b16 %v1378
      %v1511 = vunpack.c.l.b16 %v1379
      %v1512 = vunpack.c.l.b16 %v1380
      %v1513 = vunpack.c.l.b16 %v1381
      %v1514 = vunpack.c.l.b16 %v1382
      %v1515 = vunpack.c.l.b16 %v1383
      %v1516 = vunpack.c.l.b16 %v1384
      %v1517 = vunpack.c.l.b16 %v1385
      %v1518 = vunpack.c.l.b16 %v1386
      %v1519 = vunpack.c.l.b16 %v1387
      %v1520 = vunpack.c.l.b16 %v1388
      %v1521 = vunpack.c.l.b16 %v1389
      %v1522 = vunpack.c.l.b16 %v1390
      %v1523 = vunpack.c.l.b16 %v1391
      %v1524 = vunpack.c.l.b16 %v1392
      %v1525 = vunpack.c.l.b16 %v1393
      %v1526 = vunpack.c.l.b16 %v1394
      %v1527 = vunpack.c.l.b16 %v1395
      %v1528 = vunpack.c.l.b16 %v1396
      %v1529 = vunpack.c.l.b16 %v1397
      %v1530 = vunpack.c.l.b16 %v1398
      %v1531 = vunpack.c.l.b16 %v1399
      %v1532 = vunpack.c.l.b16 %v1400
      %v1533 = vunpack.c.l.b16 %v1401
      %v1534 = vunpack.c.l.b16 %v1402
      %v1535 = vunpack.c.l.b16 %v1403
      %v1536 = vunpack.c.l.b16 %v1404
      %v1537 = vunpack.c.l.b16 %v1405
      %v1538 = vunpack.c.l.b16 %v1406
      %v1539 = vunpack.c.l.b16 %v1407
      %v1540 = vunpack.c.l.b16 %v1408
      %v1541 = vunpack.c.l.b16 %v1409
      %v1542 = vunpack.c.l.b16 %v1410
      %v1543 = vunpack.c.l.b16 %v1411
      %v1544 = vunpack.c.l.b16 %v1412
      %v1545 = vunpack.c.l.b16 %v1413
      %v1546 = vunpack.c.l.b16 %v1414
      %v1547 = vunpack.c.l.b16 %v1415
      %v1548 = vunpack.c.l.b16 %v1416
      %v1549 = vunpack.c.l.b16 %v1417
      %v1550 = vunpack.c.l.b16 %v1418
      %v1551 = vunpack.c.l.b16 %v1419
      %v1552 = vunpack.c.l.b16 %v1420
      %v1553 = vunpack.c.l.b16 %v1421
      %v1554 = vunpack.c.l.b16 %v1422
      %v1555 = vunpack.c.l.b16 %v1423
      %v1556 = vunpack.c.l.b16 %v1424
      %v1557 = vunpack.c.l.b16 %v1425
      %v1558 = vunpack.c.l.b16 %v1426
      %v1559 = vunpack.c.l.b16 %v1427
      %v1560 = vunpack.c.l.b16 %v1428
      %v1561 = vunpack.c.l.b16 %v1429
      %v1562 = vunpack.c.l.b16 %v1430
      %v1563 = vunpack.c.l.b16 %v1431
      %v1564 = vunpack.c.l.b16 %v1432
      %v1565 = vunpack.c.l.b16 %v1433
      %v1566 = vunpack.c.l.b16 %v1434
      %v1567 = vunpack.c.l.b16 %v1435
      %v1568 = vunpack.c.l.b16 %v1436
      %v1569 = vunpack.c.l.b16 %v1437
      %v1570 = vunpack.c.l.b16 %v1438
      %v1571 = vunpack.c.l.b16 %v1439
      %v1572 = vpack.c.b16 %v1509, %v1508
      %v1573 = vpack.c.b16 %v1511, %v1510
      %v1574 = vpack.c.b16 %v1513, %v1512
      %v1575 = vpack.c.b16 %v1515, %v1514
      %v1576 = vpack.c.b16 %v1517, %v1516
      %v1577 = vpack.c.b16 %v1519, %v1518
      %v1578 = vpack.c.b16 %v1521, %v1520
      %v1579 = vpack.c.b16 %v1523, %v1522
      %v1580 = vpack.c.b16 %v1525, %v1524
      %v1581 = vpack.c.b16 %v1527, %v1526
      %v1582 = vpack.c.b16 %v1529, %v1528
      %v1583 = vpack.c.b16 %v1531, %v1530
      %v1584 = vpack.c.b16 %v1533, %v1532
      %v1585 = vpack.c.b16 %v1535, %v1534
      %v1586 = vpack.c.b16 %v1537, %v1536
      %v1587 = vpack.c.b16 %v1539, %v1538
      %v1588 = vpack.c.b16 %v1541, %v1540
      %v1589 = vpack.c.b16 %v1543, %v1542
      %v1590 = vpack.c.b16 %v1545, %v1544
      %v1591 = vpack.c.b16 %v1547, %v1546
      %v1592 = vpack.c.b16 %v1549, %v1548
      %v1593 = vpack.c.b16 %v1551, %v1550
      %v1594 = vpack.c.b16 %v1553, %v1552
      %v1595 = vpack.c.b16 %v1555, %v1554
      %v1596 = vpack.c.b16 %v1557, %v1556
      %v1597 = vpack.c.b16 %v1559, %v1558
      %v1598 = vpack.c.b16 %v1561, %v1560
      %v1599 = vpack.c.b16 %v1563, %v1562
      %v1600 = vpack.c.b16 %v1565, %v1564
      %v1601 = vpack.c.b16 %v1567, %v1566
      %v1602 = vpack.c.b16 %v1569, %v1568
      %v1603 = vpack.c.b16 %v1571, %v1570
      %1636 = vmatprep.subr.bf16.mxu0 0
      %1637 = vmatpush1.bf16.msra.mxu0 %v1572
      %1638 = vmatprep.subr.bf16.mxu0 0
      %1639 = vmatpush1.bf16.msra.mxu0 %v1573
      %1640 = vmatprep.subr.bf16.mxu0 0
      %1641 = vmatpush1.bf16.msra.mxu0 %v1574
      %1642 = vmatprep.subr.bf16.mxu0 0
      %1643 = vmatpush1.bf16.msra.mxu0 %v1575
      %1644 = vmatprep.subr.bf16.mxu0 0
      %1645 = vmatpush1.bf16.msra.mxu0 %v1576
      %1646 = vmatprep.subr.bf16.mxu0 0
      %1647 = vmatpush1.bf16.msra.mxu0 %v1577
      %1648 = vmatprep.subr.bf16.mxu0 0
      %1649 = vmatpush1.bf16.msra.mxu0 %v1578
      %1650 = vmatprep.subr.bf16.mxu0 0
      %1651 = vmatpush1.bf16.msra.mxu0 %v1579
      %1652 = vmatprep.subr.bf16.mxu0 0
      %1653 = vmatpush1.bf16.msra.mxu0 %v1580
      %1654 = vmatprep.subr.bf16.mxu0 0
      %1655 = vmatpush1.bf16.msra.mxu0 %v1581
      %1656 = vmatprep.subr.bf16.mxu0 0
      %1657 = vmatpush1.bf16.msra.mxu0 %v1582
      %1658 = vmatprep.subr.bf16.mxu0 0
      %1659 = vmatpush1.bf16.msra.mxu0 %v1583
      %1660 = vmatprep.subr.bf16.mxu0 0
      %1661 = vmatpush1.bf16.msra.mxu0 %v1584
      %1662 = vmatprep.subr.bf16.mxu0 0
      %1663 = vmatpush1.bf16.msra.mxu0 %v1585
      %1664 = vmatprep.subr.bf16.mxu0 0
      %1665 = vmatpush1.bf16.msra.mxu0 %v1586
      %1666 = vmatprep.subr.bf16.mxu0 0
      %1667 = vmatpush1.bf16.msra.mxu0 %v1587
      %1668 = vmatprep.mubr.bf16.mxu0 %v1348
      %1669 = vmatmul.mubr.bf16.gmra.mrb[0].mxu0 %v1336
      %v1670 = vpop.f32.mrb[0].mxu0
      %v1671 = vadd.f32 0.0, %v1670
      %v1672 = vpop.f32.mrb[0].mxu0
      %v1673 = vpop.f32.mrb[0].mxu0
      %v1674 = vadd.f32 0.0, %v1673
      %v1675 = vpop.f32.mrb[0].mxu0
      %1676 = vmatprep.mubr.bf16.mxu0 %v1349
      %1677 = vmatmul.mubr.bf16.gmra.mrb[0].mxu0 %v1337
      %v1678 = vpop.f32.mrb[0].mxu0
      %v1679 = vadd.f32 0.0, %v1678
      %v1680 = vpop.f32.mrb[0].mxu0
      %v1681 = vpop.f32.mrb[0].mxu0
      %v1682 = vadd.f32 0.0, %v1681
      %v1683 = vpop.f32.mrb[0].mxu0
      %1684 = vdwg.mxu0
      %1685 = vmatprep.subr.bf16.mxu0 0
      %1686 = vmatpush1.bf16.msra.mxu0 %v1588
      %1687 = vmatprep.subr.bf16.mxu0 0
      %1688 = vmatpush1.bf16.msra.mxu0 %v1589
      %1689 = vmatprep.subr.bf16.mxu0 0
      %1690 = vmatpush1.bf16.msra.mxu0 %v1590
      %1691 = vmatprep.subr.bf16.mxu0 0
      %1692 = vmatpush1.bf16.msra.mxu0 %v1591
      %1693 = vmatprep.subr.bf16.mxu0 0
      %1694 = vmatpush1.bf16.msra.mxu0 %v1592
      %1695 = vmatprep.subr.bf16.mxu0 0
      %1696 = vmatpush1.bf16.msra.mxu0 %v1593
      %1697 = vmatprep.subr.bf16.mxu0 0
      %1698 = vmatpush1.bf16.msra.mxu0 %v1594
      %1699 = vmatprep.subr.bf16.mxu0 0
      %1700 = vmatpush1.bf16.msra.mxu0 %v1595
      %1701 = vmatprep.subr.bf16.mxu0 0
      %1702 = vmatpush1.bf16.msra.mxu0 %v1596
      %1703 = vmatprep.subr.bf16.mxu0 0
      %1704 = vmatpush1.bf16.msra.mxu0 %v1597
      %1705 = vmatprep.subr.bf16.mxu0 0
      %1706 = vmatpush1.bf16.msra.mxu0 %v1598
      %1707 = vmatprep.subr.bf16.mxu0 0
      %1708 = vmatpush1.bf16.msra.mxu0 %v1599
      %1709 = vmatprep.subr.bf16.mxu0 0
      %1710 = vmatpush1.bf16.msra.mxu0 %v1600
      %1711 = vmatprep.subr.bf16.mxu0 0
      %1712 = vmatpush1.bf16.msra.mxu0 %v1601
      %1713 = vmatprep.subr.bf16.mxu0 0
      %1714 = vmatpush1.bf16.msra.mxu0 %v1602
      %1715 = vmatprep.subr.bf16.mxu0 0
      %1716 = vmatpush1.bf16.msra.mxu0 %v1603
      %1717 = vmatprep.mubr.bf16.mxu0 %v1372
      %1718 = vmatmul.mubr.bf16.gmra.mrb[0].mxu0 %v1360
      %v1719 = vpop.f32.mrb[0].mxu0
      %v1720 = vadd.f32 %v1671, %v1719
      %v1721 = vpop.f32.mrb[0].mxu0
      %v1722 = vpop.f32.mrb[0].mxu0
      %v1723 = vadd.f32 %v1674, %v1722
      %v1724 = vpop.f32.mrb[0].mxu0
      %1725 = vmatprep.mubr.bf16.mxu0 %v1373
      %1726 = vmatmul.mubr.bf16.gmra.mrb[0].mxu0 %v1361
      %v1727 = vpop.f32.mrb[0].mxu0
      %v1728 = vadd.f32 %v1679, %v1727
      %v1729 = vpop.f32.mrb[0].mxu0
      %v1730 = vpop.f32.mrb[0].mxu0
      %v1731 = vadd.f32 %v1682, %v1730
      %v1732 = vpop.f32.mrb[0].mxu0
      %1733 = vdwg.mxu0
      %v1734 = vadd.f32 %v1440, %v1720
      %v1735 = vadd.f32 %v1441, %v1723
      %v1736 = vadd.f32 %v1442, %v1728
      %v1737 = vadd.f32 %v1443, %v1731
      %1738 = vst [vmem:[%s299] sm:$0xff] %v1734
      %1739 = vst [vmem:[%s299 + $0x8] sm:$0xff] %v1735
      %1740 = vst [vmem:[%s299 + $0x10] sm:$0xff] %v1736
      %1741 = vst [vmem:[%s299 + $0x18] sm:$0xff] %v1737
      %1742 = vset.pattern.permute.xlu0 8
      %1743 = vperm.xlu0 %1742, %v522
      %v1744 = vpop.permute.xlu0 %1743
      %v1747 = vunpack.c.l.s4 839922192
      %v1748 = vunpack.c.0.s8 %v1747
      %v1749 = vlaneseq
      %v1750 = vshrl.u32 %v1749, 7
      %v1751 = vsub.s32 %v1748, %v1750
      %v1752 = vrot.slane %v1744, %v1751
      %1753 = vset.pattern.permute.xlu0 8
      %1754 = vperm.xlu0 %1753, %v523
      %v1755 = vpop.permute.xlu0 %1754
      %v1758 = vunpack.c.l.s4 839922192
      %v1759 = vunpack.c.0.s8 %v1758
      %v1760 = vlaneseq
      %v1761 = vshrl.u32 %v1760, 7
      %v1762 = vsub.s32 %v1759, %v1761
      %v1763 = vrot.slane %v1755, %v1762
      %1764 = vset.pattern.permute.xlu0 8
      %1765 = vperm.xlu0 %1764, %v524
      %v1766 = vpop.permute.xlu0 %1765
      %v1769 = vunpack.c.l.s4 839922192
      %v1770 = vunpack.c.0.s8 %v1769
      %v1771 = vlaneseq
      %v1772 = vshrl.u32 %v1771, 7
      %v1773 = vsub.s32 %v1770, %v1772
      %v1774 = vrot.slane %v1766, %v1773
      %1775 = vset.pattern.permute.xlu0 8
      %1776 = vperm.xlu0 %1775, %v525
      %v1777 = vpop.permute.xlu0 %1776
      %v1780 = vunpack.c.l.s4 839922192
      %v1781 = vunpack.c.0.s8 %v1780
      %v1782 = vlaneseq
      %v1783 = vshrl.u32 %v1782, 7
      %v1784 = vsub.s32 %v1781, %v1783
      %v1785 = vrot.slane %v1777, %v1784
      %v1786 = vmul.bf16 %v1752, %v518
      %v1787 = vmul.bf16 %v1763, %v519
      %v1788 = vmul.bf16 %v1774, %v520
      %v1789 = vmul.bf16 %v1785, %v521
      %1790 = vset.pattern.permute.xlu0 9
      %1791 = vperm.xlu0 %1790, %v522
      %v1792 = vpop.permute.xlu0 %1791
      %v1795 = vunpack.c.l.s4 839922192
      %v1796 = vunpack.c.0.s8 %v1795
      %v1797 = vlaneseq
      %v1798 = vshrl.u32 %v1797, 7
      %v1799 = vsub.s32 %v1796, %v1798
      %v1800 = vrot.slane %v1792, %v1799
      %1801 = vset.pattern.permute.xlu0 9
      %1802 = vperm.xlu0 %1801, %v523
      %v1803 = vpop.permute.xlu0 %1802
      %v1806 = vunpack.c.l.s4 839922192
      %v1807 = vunpack.c.0.s8 %v1806
      %v1808 = vlaneseq
      %v1809 = vshrl.u32 %v1808, 7
      %v1810 = vsub.s32 %v1807, %v1809
      %v1811 = vrot.slane %v1803, %v1810
      %1812 = vset.pattern.permute.xlu0 9
      %1813 = vperm.xlu0 %1812, %v524
      %v1814 = vpop.permute.xlu0 %1813
      %v1817 = vunpack.c.l.s4 839922192
      %v1818 = vunpack.c.0.s8 %v1817
      %v1819 = vlaneseq
      %v1820 = vshrl.u32 %v1819, 7
      %v1821 = vsub.s32 %v1818, %v1820
      %v1822 = vrot.slane %v1814, %v1821
      %1823 = vset.pattern.permute.xlu0 9
      %1824 = vperm.xlu0 %1823, %v525
      %v1825 = vpop.permute.xlu0 %1824
      %v1828 = vunpack.c.l.s4 839922192
      %v1829 = vunpack.c.0.s8 %v1828
      %v1830 = vlaneseq
      %v1831 = vshrl.u32 %v1830, 7
      %v1832 = vsub.s32 %v1829, %v1831
      %v1833 = vrot.slane %v1825, %v1832
      %v1834 = vmul.bf16 %v1800, %v518
      %v1835 = vmul.bf16 %v1811, %v519
      %v1836 = vmul.bf16 %v1822, %v520
      %v1837 = vmul.bf16 %v1833, %v521
      %1838 = vset.pattern.permute.xlu0 10
      %1839 = vperm.xlu0 %1838, %v522
      %v1840 = vpop.permute.xlu0 %1839
      %v1843 = vunpack.c.l.s4 839922192
      %v1844 = vunpack.c.0.s8 %v1843
      %v1845 = vlaneseq
      %v1846 = vshrl.u32 %v1845, 7
      %v1847 = vsub.s32 %v1844, %v1846
      %v1848 = vrot.slane %v1840, %v1847
      %1849 = vset.pattern.permute.xlu0 10
      %1850 = vperm.xlu0 %1849, %v523
      %v1851 = vpop.permute.xlu0 %1850
      %v1854 = vunpack.c.l.s4 839922192
      %v1855 = vunpack.c.0.s8 %v1854
      %v1856 = vlaneseq
      %v1857 = vshrl.u32 %v1856, 7
      %v1858 = vsub.s32 %v1855, %v1857
      %v1859 = vrot.slane %v1851, %v1858
      %1860 = vset.pattern.permute.xlu0 10
      %1861 = vperm.xlu0 %1860, %v524
      %v1862 = vpop.permute.xlu0 %1861
      %v1865 = vunpack.c.l.s4 839922192
      %v1866 = vunpack.c.0.s8 %v1865
      %v1867 = vlaneseq
      %v1868 = vshrl.u32 %v1867, 7
      %v1869 = vsub.s32 %v1866, %v1868
      %v1870 = vrot.slane %v1862, %v1869
      %1871 = vset.pattern.permute.xlu0 10
      %1872 = vperm.xlu0 %1871, %v525
      %v1873 = vpop.permute.xlu0 %1872
      %v1876 = vunpack.c.l.s4 839922192
      %v1877 = vunpack.c.0.s8 %v1876
      %v1878 = vlaneseq
      %v1879 = vshrl.u32 %v1878, 7
      %v1880 = vsub.s32 %v1877, %v1879
      %v1881 = vrot.slane %v1873, %v1880
      %v1882 = vmul.bf16 %v1848, %v518
      %v1883 = vmul.bf16 %v1859, %v519
      %v1884 = vmul.bf16 %v1870, %v520
      %v1885 = vmul.bf16 %v1881, %v521
      %1886 = vset.pattern.permute.xlu0 11
      %1887 = vperm.xlu0 %1886, %v522
      %v1888 = vpop.permute.xlu0 %1887
      %v1891 = vunpack.c.l.s4 839922192
      %v1892 = vunpack.c.0.s8 %v1891
      %v1893 = vlaneseq
      %v1894 = vshrl.u32 %v1893, 7
      %v1895 = vsub.s32 %v1892, %v1894
      %v1896 = vrot.slane %v1888, %v1895
      %1897 = vset.pattern.permute.xlu0 11
      %1898 = vperm.xlu0 %1897, %v523
      %v1899 = vpop.permute.xlu0 %1898
      %v1902 = vunpack.c.l.s4 839922192
      %v1903 = vunpack.c.0.s8 %v1902
      %v1904 = vlaneseq
      %v1905 = vshrl.u32 %v1904, 7
      %v1906 = vsub.s32 %v1903, %v1905
      %v1907 = vrot.slane %v1899, %v1906
      %1908 = vset.pattern.permute.xlu0 11
      %1909 = vperm.xlu0 %1908, %v524
      %v1910 = vpop.permute.xlu0 %1909
      %v1913 = vunpack.c.l.s4 839922192
      %v1914 = vunpack.c.0.s8 %v1913
      %v1915 = vlaneseq
      %v1916 = vshrl.u32 %v1915, 7
      %v1917 = vsub.s32 %v1914, %v1916
      %v1918 = vrot.slane %v1910, %v1917
      %1919 = vset.pattern.permute.xlu0 11
      %1920 = vperm.xlu0 %1919, %v525
      %v1921 = vpop.permute.xlu0 %1920
      %v1924 = vunpack.c.l.s4 839922192
      %v1925 = vunpack.c.0.s8 %v1924
      %v1926 = vlaneseq
      %v1927 = vshrl.u32 %v1926, 7
      %v1928 = vsub.s32 %v1925, %v1927
      %v1929 = vrot.slane %v1921, %v1928
      %v1930 = vmul.bf16 %v1896, %v518
      %v1931 = vmul.bf16 %v1907, %v519
      %v1932 = vmul.bf16 %v1918, %v520
      %v1933 = vmul.bf16 %v1929, %v521
      %v1938 = vunpack.c.l.b16 %v1786
      %v1939 = vunpack.c.l.b16 %v1787
      %v1940 = vunpack.c.l.b16 %v1788
      %v1941 = vunpack.c.l.b16 %v1789
      %v1942 = vpack.c.b16 %v1939, %v1938
      %v1943 = vpack.c.b16 %v1941, %v1940
      %v1950 = vunpack.c.l.b16 %v1834
      %v1951 = vunpack.c.l.b16 %v1835
      %v1952 = vunpack.c.l.b16 %v1836
      %v1953 = vunpack.c.l.b16 %v1837
      %v1954 = vpack.c.b16 %v1951, %v1950
      %v1955 = vpack.c.b16 %v1953, %v1952
      %v1962 = vunpack.c.l.b16 %v1882
      %v1963 = vunpack.c.l.b16 %v1883
      %v1964 = vunpack.c.l.b16 %v1884
      %v1965 = vunpack.c.l.b16 %v1885
      %v1966 = vpack.c.b16 %v1963, %v1962
      %v1967 = vpack.c.b16 %v1965, %v1964
      %v1974 = vunpack.c.l.b16 %v1930
      %v1975 = vunpack.c.l.b16 %v1931
      %v1976 = vunpack.c.l.b16 %v1932
      %v1977 = vunpack.c.l.b16 %v1933
      %v1978 = vpack.c.b16 %v1975, %v1974
      %v1979 = vpack.c.b16 %v1977, %v1976
      %v1982 = vld [vmem:[%s293 + $0x200] sm:$0xf]
      %v1983 = vld [vmem:[%s293 + $0x204] sm:$0xf]
      %v1984 = vld [vmem:[%s293 + $0x208] sm:$0xf]
      %v1985 = vld [vmem:[%s293 + $0x20c] sm:$0xf]
      %v1986 = vld [vmem:[%s293 + $0x210] sm:$0xf]
      %v1987 = vld [vmem:[%s293 + $0x214] sm:$0xf]
      %v1988 = vld [vmem:[%s293 + $0x218] sm:$0xf]
      %v1989 = vld [vmem:[%s293 + $0x21c] sm:$0xf]
      %v1990 = vld [vmem:[%s293 + $0x220] sm:$0xf]
      %v1991 = vld [vmem:[%s293 + $0x224] sm:$0xf]
      %v1992 = vld [vmem:[%s293 + $0x228] sm:$0xf]
      %v1993 = vld [vmem:[%s293 + $0x22c] sm:$0xf]
      %v1994 = vld [vmem:[%s293 + $0x230] sm:$0xf]
      %v1995 = vld [vmem:[%s293 + $0x234] sm:$0xf]
      %v1996 = vld [vmem:[%s293 + $0x238] sm:$0xf]
      %v1997 = vld [vmem:[%s293 + $0x23c] sm:$0xf]
      %v1998 = vld [vmem:[%s293 + $0x240] sm:$0xf]
      %v1999 = vld [vmem:[%s293 + $0x244] sm:$0xf]
      %v2000 = vld [vmem:[%s293 + $0x248] sm:$0xf]
      %v2001 = vld [vmem:[%s293 + $0x24c] sm:$0xf]
      %v2002 = vld [vmem:[%s293 + $0x250] sm:$0xf]
      %v2003 = vld [vmem:[%s293 + $0x254] sm:$0xf]
      %v2004 = vld [vmem:[%s293 + $0x258] sm:$0xf]
      %v2005 = vld [vmem:[%s293 + $0x25c] sm:$0xf]
      %v2006 = vld [vmem:[%s293 + $0x260] sm:$0xf]
      %v2007 = vld [vmem:[%s293 + $0x264] sm:$0xf]
      %v2008 = vld [vmem:[%s293 + $0x268] sm:$0xf]
      %v2009 = vld [vmem:[%s293 + $0x26c] sm:$0xf]
      %v2010 = vld [vmem:[%s293 + $0x270] sm:$0xf]
      %v2011 = vld [vmem:[%s293 + $0x274] sm:$0xf]
      %v2012 = vld [vmem:[%s293 + $0x278] sm:$0xf]
      %v2013 = vld [vmem:[%s293 + $0x27c] sm:$0xf]
      %v2014 = vld [vmem:[%s293 + $0x280] sm:$0xf]
      %v2015 = vld [vmem:[%s293 + $0x284] sm:$0xf]
      %v2016 = vld [vmem:[%s293 + $0x288] sm:$0xf]
      %v2017 = vld [vmem:[%s293 + $0x28c] sm:$0xf]
      %v2018 = vld [vmem:[%s293 + $0x290] sm:$0xf]
      %v2019 = vld [vmem:[%s293 + $0x294] sm:$0xf]
      %v2020 = vld [vmem:[%s293 + $0x298] sm:$0xf]
      %v2021 = vld [vmem:[%s293 + $0x29c] sm:$0xf]
      %v2022 = vld [vmem:[%s293 + $0x2a0] sm:$0xf]
      %v2023 = vld [vmem:[%s293 + $0x2a4] sm:$0xf]
      %v2024 = vld [vmem:[%s293 + $0x2a8] sm:$0xf]
      %v2025 = vld [vmem:[%s293 + $0x2ac] sm:$0xf]
      %v2026 = vld [vmem:[%s293 + $0x2b0] sm:$0xf]
      %v2027 = vld [vmem:[%s293 + $0x2b4] sm:$0xf]
      %v2028 = vld [vmem:[%s293 + $0x2b8] sm:$0xf]
      %v2029 = vld [vmem:[%s293 + $0x2bc] sm:$0xf]
      %v2030 = vld [vmem:[%s293 + $0x2c0] sm:$0xf]
      %v2031 = vld [vmem:[%s293 + $0x2c4] sm:$0xf]
      %v2032 = vld [vmem:[%s293 + $0x2c8] sm:$0xf]
      %v2033 = vld [vmem:[%s293 + $0x2cc] sm:$0xf]
      %v2034 = vld [vmem:[%s293 + $0x2d0] sm:$0xf]
      %v2035 = vld [vmem:[%s293 + $0x2d4] sm:$0xf]
      %v2036 = vld [vmem:[%s293 + $0x2d8] sm:$0xf]
      %v2037 = vld [vmem:[%s293 + $0x2dc] sm:$0xf]
      %v2038 = vld [vmem:[%s293 + $0x2e0] sm:$0xf]
      %v2039 = vld [vmem:[%s293 + $0x2e4] sm:$0xf]
      %v2040 = vld [vmem:[%s293 + $0x2e8] sm:$0xf]
      %v2041 = vld [vmem:[%s293 + $0x2ec] sm:$0xf]
      %v2042 = vld [vmem:[%s293 + $0x2f0] sm:$0xf]
      %v2043 = vld [vmem:[%s293 + $0x2f4] sm:$0xf]
      %v2044 = vld [vmem:[%s293 + $0x2f8] sm:$0xf]
      %v2045 = vld [vmem:[%s293 + $0x2fc] sm:$0xf]
      %v2046 = vld [vmem:[%s299] sm:$0xff]
      %v2047 = vld [vmem:[%s299 + $0x8] sm:$0xff]
      %v2048 = vld [vmem:[%s299 + $0x10] sm:$0xff]
      %v2049 = vld [vmem:[%s299 + $0x18] sm:$0xff]
      %v2114 = vunpack.c.l.b16 %v1982
      %v2115 = vunpack.c.l.b16 %v1983
      %v2116 = vunpack.c.l.b16 %v1984
      %v2117 = vunpack.c.l.b16 %v1985
      %v2118 = vunpack.c.l.b16 %v1986
      %v2119 = vunpack.c.l.b16 %v1987
      %v2120 = vunpack.c.l.b16 %v1988
      %v2121 = vunpack.c.l.b16 %v1989
      %v2122 = vunpack.c.l.b16 %v1990
      %v2123 = vunpack.c.l.b16 %v1991
      %v2124 = vunpack.c.l.b16 %v1992
      %v2125 = vunpack.c.l.b16 %v1993
      %v2126 = vunpack.c.l.b16 %v1994
      %v2127 = vunpack.c.l.b16 %v1995
      %v2128 = vunpack.c.l.b16 %v1996
      %v2129 = vunpack.c.l.b16 %v1997
      %v2130 = vunpack.c.l.b16 %v1998
      %v2131 = vunpack.c.l.b16 %v1999
      %v2132 = vunpack.c.l.b16 %v2000
      %v2133 = vunpack.c.l.b16 %v2001
      %v2134 = vunpack.c.l.b16 %v2002
      %v2135 = vunpack.c.l.b16 %v2003
      %v2136 = vunpack.c.l.b16 %v2004
      %v2137 = vunpack.c.l.b16 %v2005
      %v2138 = vunpack.c.l.b16 %v2006
      %v2139 = vunpack.c.l.b16 %v2007
      %v2140 = vunpack.c.l.b16 %v2008
      %v2141 = vunpack.c.l.b16 %v2009
      %v2142 = vunpack.c.l.b16 %v2010
      %v2143 = vunpack.c.l.b16 %v2011
      %v2144 = vunpack.c.l.b16 %v2012
      %v2145 = vunpack.c.l.b16 %v2013
      %v2146 = vunpack.c.l.b16 %v2014
      %v2147 = vunpack.c.l.b16 %v2015
      %v2148 = vunpack.c.l.b16 %v2016
      %v2149 = vunpack.c.l.b16 %v2017
      %v2150 = vunpack.c.l.b16 %v2018
      %v2151 = vunpack.c.l.b16 %v2019
      %v2152 = vunpack.c.l.b16 %v2020
      %v2153 = vunpack.c.l.b16 %v2021
      %v2154 = vunpack.c.l.b16 %v2022
      %v2155 = vunpack.c.l.b16 %v2023
      %v2156 = vunpack.c.l.b16 %v2024
      %v2157 = vunpack.c.l.b16 %v2025
      %v2158 = vunpack.c.l.b16 %v2026
      %v2159 = vunpack.c.l.b16 %v2027
      %v2160 = vunpack.c.l.b16 %v2028
      %v2161 = vunpack.c.l.b16 %v2029
      %v2162 = vunpack.c.l.b16 %v2030
      %v2163 = vunpack.c.l.b16 %v2031
      %v2164 = vunpack.c.l.b16 %v2032
      %v2165 = vunpack.c.l.b16 %v2033
      %v2166 = vunpack.c.l.b16 %v2034
      %v2167 = vunpack.c.l.b16 %v2035
      %v2168 = vunpack.c.l.b16 %v2036
      %v2169 = vunpack.c.l.b16 %v2037
      %v2170 = vunpack.c.l.b16 %v2038
      %v2171 = vunpack.c.l.b16 %v2039
      %v2172 = vunpack.c.l.b16 %v2040
      %v2173 = vunpack.c.l.b16 %v2041
      %v2174 = vunpack.c.l.b16 %v2042
      %v2175 = vunpack.c.l.b16 %v2043
      %v2176 = vunpack.c.l.b16 %v2044
      %v2177 = vunpack.c.l.b16 %v2045
      %v2178 = vpack.c.b16 %v2115, %v2114
      %v2179 = vpack.c.b16 %v2117, %v2116
      %v2180 = vpack.c.b16 %v2119, %v2118
      %v2181 = vpack.c.b16 %v2121, %v2120
      %v2182 = vpack.c.b16 %v2123, %v2122
      %v2183 = vpack.c.b16 %v2125, %v2124
      %v2184 = vpack.c.b16 %v2127, %v2126
      %v2185 = vpack.c.b16 %v2129, %v2128
      %v2186 = vpack.c.b16 %v2131, %v2130
      %v2187 = vpack.c.b16 %v2133, %v2132
      %v2188 = vpack.c.b16 %v2135, %v2134
      %v2189 = vpack.c.b16 %v2137, %v2136
      %v2190 = vpack.c.b16 %v2139, %v2138
      %v2191 = vpack.c.b16 %v2141, %v2140
      %v2192 = vpack.c.b16 %v2143, %v2142
      %v2193 = vpack.c.b16 %v2145, %v2144
      %v2194 = vpack.c.b16 %v2147, %v2146
      %v2195 = vpack.c.b16 %v2149, %v2148
      %v2196 = vpack.c.b16 %v2151, %v2150
      %v2197 = vpack.c.b16 %v2153, %v2152
      %v2198 = vpack.c.b16 %v2155, %v2154
      %v2199 = vpack.c.b16 %v2157, %v2156
      %v2200 = vpack.c.b16 %v2159, %v2158
      %v2201 = vpack.c.b16 %v2161, %v2160
      %v2202 = vpack.c.b16 %v2163, %v2162
      %v2203 = vpack.c.b16 %v2165, %v2164
      %v2204 = vpack.c.b16 %v2167, %v2166
      %v2205 = vpack.c.b16 %v2169, %v2168
      %v2206 = vpack.c.b16 %v2171, %v2170
      %v2207 = vpack.c.b16 %v2173, %v2172
      %v2208 = vpack.c.b16 %v2175, %v2174
      %v2209 = vpack.c.b16 %v2177, %v2176
      %2242 = vmatprep.subr.bf16.mxu0 0
      %2243 = vmatpush1.bf16.msra.mxu0 %v2178
      %2244 = vmatprep.subr.bf16.mxu0 0
      %2245 = vmatpush1.bf16.msra.mxu0 %v2179
      %2246 = vmatprep.subr.bf16.mxu0 0
      %2247 = vmatpush1.bf16.msra.mxu0 %v2180
      %2248 = vmatprep.subr.bf16.mxu0 0
      %2249 = vmatpush1.bf16.msra.mxu0 %v2181
      %2250 = vmatprep.subr.bf16.mxu0 0
      %2251 = vmatpush1.bf16.msra.mxu0 %v2182
      %2252 = vmatprep.subr.bf16.mxu0 0
      %2253 = vmatpush1.bf16.msra.mxu0 %v2183
      %2254 = vmatprep.subr.bf16.mxu0 0
      %2255 = vmatpush1.bf16.msra.mxu0 %v2184
      %2256 = vmatprep.subr.bf16.mxu0 0
      %2257 = vmatpush1.bf16.msra.mxu0 %v2185
      %2258 = vmatprep.subr.bf16.mxu0 0
      %2259 = vmatpush1.bf16.msra.mxu0 %v2186
      %2260 = vmatprep.subr.bf16.mxu0 0
      %2261 = vmatpush1.bf16.msra.mxu0 %v2187
      %2262 = vmatprep.subr.bf16.mxu0 0
      %2263 = vmatpush1.bf16.msra.mxu0 %v2188
      %2264 = vmatprep.subr.bf16.mxu0 0
      %2265 = vmatpush1.bf16.msra.mxu0 %v2189
      %2266 = vmatprep.subr.bf16.mxu0 0
      %2267 = vmatpush1.bf16.msra.mxu0 %v2190
      %2268 = vmatprep.subr.bf16.mxu0 0
      %2269 = vmatpush1.bf16.msra.mxu0 %v2191
      %2270 = vmatprep.subr.bf16.mxu0 0
      %2271 = vmatpush1.bf16.msra.mxu0 %v2192
      %2272 = vmatprep.subr.bf16.mxu0 0
      %2273 = vmatpush1.bf16.msra.mxu0 %v2193
      %2274 = vmatprep.mubr.bf16.mxu0 %v1954
      %2275 = vmatmul.mubr.bf16.gmra.mrb[0].mxu0 %v1942
      %v2276 = vpop.f32.mrb[0].mxu0
      %v2277 = vadd.f32 0.0, %v2276
      %v2278 = vpop.f32.mrb[0].mxu0
      %v2279 = vpop.f32.mrb[0].mxu0
      %v2280 = vadd.f32 0.0, %v2279
      %v2281 = vpop.f32.mrb[0].mxu0
      %2282 = vmatprep.mubr.bf16.mxu0 %v1955
      %2283 = vmatmul.mubr.bf16.gmra.mrb[0].mxu0 %v1943
      %v2284 = vpop.f32.mrb[0].mxu0
      %v2285 = vadd.f32 0.0, %v2284
      %v2286 = vpop.f32.mrb[0].mxu0
      %v2287 = vpop.f32.mrb[0].mxu0
      %v2288 = vadd.f32 0.0, %v2287
      %v2289 = vpop.f32.mrb[0].mxu0
      %2290 = vdwg.mxu0
      %2291 = vmatprep.subr.bf16.mxu0 0
      %2292 = vmatpush1.bf16.msra.mxu0 %v2194
      %2293 = vmatprep.subr.bf16.mxu0 0
      %2294 = vmatpush1.bf16.msra.mxu0 %v2195
      %2295 = vmatprep.subr.bf16.mxu0 0
      %2296 = vmatpush1.bf16.msra.mxu0 %v2196
      %2297 = vmatprep.subr.bf16.mxu0 0
      %2298 = vmatpush1.bf16.msra.mxu0 %v2197
      %2299 = vmatprep.subr.bf16.mxu0 0
      %2300 = vmatpush1.bf16.msra.mxu0 %v2198
      %2301 = vmatprep.subr.bf16.mxu0 0
      %2302 = vmatpush1.bf16.msra.mxu0 %v2199
      %2303 = vmatprep.subr.bf16.mxu0 0
      %2304 = vmatpush1.bf16.msra.mxu0 %v2200
      %2305 = vmatprep.subr.bf16.mxu0 0
      %2306 = vmatpush1.bf16.msra.mxu0 %v2201
      %2307 = vmatprep.subr.bf16.mxu0 0
      %2308 = vmatpush1.bf16.msra.mxu0 %v2202
      %2309 = vmatprep.subr.bf16.mxu0 0
      %2310 = vmatpush1.bf16.msra.mxu0 %v2203
      %2311 = vmatprep.subr.bf16.mxu0 0
      %2312 = vmatpush1.bf16.msra.mxu0 %v2204
      %2313 = vmatprep.subr.bf16.mxu0 0
      %2314 = vmatpush1.bf16.msra.mxu0 %v2205
      %2315 = vmatprep.subr.bf16.mxu0 0
      %2316 = vmatpush1.bf16.msra.mxu0 %v2206
      %2317 = vmatprep.subr.bf16.mxu0 0
      %2318 = vmatpush1.bf16.msra.mxu0 %v2207
      %2319 = vmatprep.subr.bf16.mxu0 0
      %2320 = vmatpush1.bf16.msra.mxu0 %v2208
      %2321 = vmatprep.subr.bf16.mxu0 0
      %2322 = vmatpush1.bf16.msra.mxu0 %v2209
      %2323 = vmatprep.mubr.bf16.mxu0 %v1978
      %2324 = vmatmul.mubr.bf16.gmra.mrb[0].mxu0 %v1966
      %v2325 = vpop.f32.mrb[0].mxu0
      %v2326 = vadd.f32 %v2277, %v2325
      %v2327 = vpop.f32.mrb[0].mxu0
      %v2328 = vpop.f32.mrb[0].mxu0
      %v2329 = vadd.f32 %v2280, %v2328
      %v2330 = vpop.f32.mrb[0].mxu0
      %2331 = vmatprep.mubr.bf16.mxu0 %v1979
      %2332 = vmatmul.mubr.bf16.gmra.mrb[0].mxu0 %v1967
      %v2333 = vpop.f32.mrb[0].mxu0
      %v2334 = vadd.f32 %v2285, %v2333
      %v2335 = vpop.f32.mrb[0].mxu0
      %v2336 = vpop.f32.mrb[0].mxu0
      %v2337 = vadd.f32 %v2288, %v2336
      %v2338 = vpop.f32.mrb[0].mxu0
      %2339 = vdwg.mxu0
      %v2340 = vadd.f32 %v2046, %v2326
      %v2341 = vadd.f32 %v2047, %v2329
      %v2342 = vadd.f32 %v2048, %v2334
      %v2343 = vadd.f32 %v2049, %v2337
      %2344 = vst [vmem:[%s299] sm:$0xff] %v2340
      %2345 = vst [vmem:[%s299 + $0x8] sm:$0xff] %v2341
      %2346 = vst [vmem:[%s299 + $0x10] sm:$0xff] %v2342
      %2347 = vst [vmem:[%s299 + $0x18] sm:$0xff] %v2343
      %2348 = vset.pattern.permute.xlu0 12
      %2349 = vperm.xlu0 %2348, %v522
      %v2350 = vpop.permute.xlu0 %2349
      %v2353 = vunpack.c.l.s4 839922192
      %v2354 = vunpack.c.0.s8 %v2353
      %v2355 = vlaneseq
      %v2356 = vshrl.u32 %v2355, 7
      %v2357 = vsub.s32 %v2354, %v2356
      %v2358 = vrot.slane %v2350, %v2357
      %2359 = vset.pattern.permute.xlu0 12
      %2360 = vperm.xlu0 %2359, %v523
      %v2361 = vpop.permute.xlu0 %2360
      %v2364 = vunpack.c.l.s4 839922192
      %v2365 = vunpack.c.0.s8 %v2364
      %v2366 = vlaneseq
      %v2367 = vshrl.u32 %v2366, 7
      %v2368 = vsub.s32 %v2365, %v2367
      %v2369 = vrot.slane %v2361, %v2368
      %2370 = vset.pattern.permute.xlu0 12
      %2371 = vperm.xlu0 %2370, %v524
      %v2372 = vpop.permute.xlu0 %2371
      %v2375 = vunpack.c.l.s4 839922192
      %v2376 = vunpack.c.0.s8 %v2375
      %v2377 = vlaneseq
      %v2378 = vshrl.u32 %v2377, 7
      %v2379 = vsub.s32 %v2376, %v2378
      %v2380 = vrot.slane %v2372, %v2379
      %2381 = vset.pattern.permute.xlu0 12
      %2382 = vperm.xlu0 %2381, %v525
      %v2383 = vpop.permute.xlu0 %2382
      %v2386 = vunpack.c.l.s4 839922192
      %v2387 = vunpack.c.0.s8 %v2386
      %v2388 = vlaneseq
      %v2389 = vshrl.u32 %v2388, 7
      %v2390 = vsub.s32 %v2387, %v2389
      %v2391 = vrot.slane %v2383, %v2390
      %v2392 = vmul.bf16 %v2358, %v518
      %v2393 = vmul.bf16 %v2369, %v519
      %v2394 = vmul.bf16 %v2380, %v520
      %v2395 = vmul.bf16 %v2391, %v521
      %2396 = vset.pattern.permute.xlu0 13
      %2397 = vperm.xlu0 %2396, %v522
      %v2398 = vpop.permute.xlu0 %2397
      %v2401 = vunpack.c.l.s4 839922192
      %v2402 = vunpack.c.0.s8 %v2401
      %v2403 = vlaneseq
      %v2404 = vshrl.u32 %v2403, 7
      %v2405 = vsub.s32 %v2402, %v2404
      %v2406 = vrot.slane %v2398, %v2405
      %2407 = vset.pattern.permute.xlu0 13
      %2408 = vperm.xlu0 %2407, %v523
      %v2409 = vpop.permute.xlu0 %2408
      %v2412 = vunpack.c.l.s4 839922192
      %v2413 = vunpack.c.0.s8 %v2412
      %v2414 = vlaneseq
      %v2415 = vshrl.u32 %v2414, 7
      %v2416 = vsub.s32 %v2413, %v2415
      %v2417 = vrot.slane %v2409, %v2416
      %2418 = vset.pattern.permute.xlu0 13
      %2419 = vperm.xlu0 %2418, %v524
      %v2420 = vpop.permute.xlu0 %2419
      %v2423 = vunpack.c.l.s4 839922192
      %v2424 = vunpack.c.0.s8 %v2423
      %v2425 = vlaneseq
      %v2426 = vshrl.u32 %v2425, 7
      %v2427 = vsub.s32 %v2424, %v2426
      %v2428 = vrot.slane %v2420, %v2427
      %2429 = vset.pattern.permute.xlu0 13
      %2430 = vperm.xlu0 %2429, %v525
      %v2431 = vpop.permute.xlu0 %2430
      %v2434 = vunpack.c.l.s4 839922192
      %v2435 = vunpack.c.0.s8 %v2434
      %v2436 = vlaneseq
      %v2437 = vshrl.u32 %v2436, 7
      %v2438 = vsub.s32 %v2435, %v2437
      %v2439 = vrot.slane %v2431, %v2438
      %v2440 = vmul.bf16 %v2406, %v518
      %v2441 = vmul.bf16 %v2417, %v519
      %v2442 = vmul.bf16 %v2428, %v520
      %v2443 = vmul.bf16 %v2439, %v521
      %2444 = vset.pattern.permute.xlu0 14
      %2445 = vperm.xlu0 %2444, %v522
      %v2446 = vpop.permute.xlu0 %2445
      %v2449 = vunpack.c.l.s4 839922192
      %v2450 = vunpack.c.0.s8 %v2449
      %v2451 = vlaneseq
      %v2452 = vshrl.u32 %v2451, 7
      %v2453 = vsub.s32 %v2450, %v2452
      %v2454 = vrot.slane %v2446, %v2453
      %2455 = vset.pattern.permute.xlu0 14
      %2456 = vperm.xlu0 %2455, %v523
      %v2457 = vpop.permute.xlu0 %2456
      %v2460 = vunpack.c.l.s4 839922192
      %v2461 = vunpack.c.0.s8 %v2460
      %v2462 = vlaneseq
      %v2463 = vshrl.u32 %v2462, 7
      %v2464 = vsub.s32 %v2461, %v2463
      %v2465 = vrot.slane %v2457, %v2464
      %2466 = vset.pattern.permute.xlu0 14
      %2467 = vperm.xlu0 %2466, %v524
      %v2468 = vpop.permute.xlu0 %2467
      %v2471 = vunpack.c.l.s4 839922192
      %v2472 = vunpack.c.0.s8 %v2471
      %v2473 = vlaneseq
      %v2474 = vshrl.u32 %v2473, 7
      %v2475 = vsub.s32 %v2472, %v2474
      %v2476 = vrot.slane %v2468, %v2475
      %2477 = vset.pattern.permute.xlu0 14
      %2478 = vperm.xlu0 %2477, %v525
      %v2479 = vpop.permute.xlu0 %2478
      %v2482 = vunpack.c.l.s4 839922192
      %v2483 = vunpack.c.0.s8 %v2482
      %v2484 = vlaneseq
      %v2485 = vshrl.u32 %v2484, 7
      %v2486 = vsub.s32 %v2483, %v2485
      %v2487 = vrot.slane %v2479, %v2486
      %v2488 = vmul.bf16 %v2454, %v518
      %v2489 = vmul.bf16 %v2465, %v519
      %v2490 = vmul.bf16 %v2476, %v520
      %v2491 = vmul.bf16 %v2487, %v521
      %2492 = vset.pattern.permute.xlu0 15
      %2493 = vperm.xlu0 %2492, %v522
      %v2494 = vpop.permute.xlu0 %2493
      %v2497 = vunpack.c.l.s4 839922192
      %v2498 = vunpack.c.0.s8 %v2497
      %v2499 = vlaneseq
      %v2500 = vshrl.u32 %v2499, 7
      %v2501 = vsub.s32 %v2498, %v2500
      %v2502 = vrot.slane %v2494, %v2501
      %2503 = vset.pattern.permute.xlu0 15
      %2504 = vperm.xlu0 %2503, %v523
      %v2505 = vpop.permute.xlu0 %2504
      %v2508 = vunpack.c.l.s4 839922192
      %v2509 = vunpack.c.0.s8 %v2508
      %v2510 = vlaneseq
      %v2511 = vshrl.u32 %v2510, 7
      %v2512 = vsub.s32 %v2509, %v2511
      %v2513 = vrot.slane %v2505, %v2512
      %2514 = vset.pattern.permute.xlu0 15
      %2515 = vperm.xlu0 %2514, %v524
      %v2516 = vpop.permute.xlu0 %2515
      %v2519 = vunpack.c.l.s4 839922192
      %v2520 = vunpack.c.0.s8 %v2519
      %v2521 = vlaneseq
      %v2522 = vshrl.u32 %v2521, 7
      %v2523 = vsub.s32 %v2520, %v2522
      %v2524 = vrot.slane %v2516, %v2523
      %2525 = vset.pattern.permute.xlu0 15
      %2526 = vperm.xlu0 %2525, %v525
      %v2527 = vpop.permute.xlu0 %2526
      %v2530 = vunpack.c.l.s4 839922192
      %v2531 = vunpack.c.0.s8 %v2530
      %v2532 = vlaneseq
      %v2533 = vshrl.u32 %v2532, 7
      %v2534 = vsub.s32 %v2531, %v2533
      %v2535 = vrot.slane %v2527, %v2534
      %v2536 = vmul.bf16 %v2502, %v518
      %v2537 = vmul.bf16 %v2513, %v519
      %v2538 = vmul.bf16 %v2524, %v520
      %v2539 = vmul.bf16 %v2535, %v521
      %v2544 = vunpack.c.l.b16 %v2392
      %v2545 = vunpack.c.l.b16 %v2393
      %v2546 = vunpack.c.l.b16 %v2394
      %v2547 = vunpack.c.l.b16 %v2395
      %v2548 = vpack.c.b16 %v2545, %v2544
      %v2549 = vpack.c.b16 %v2547, %v2546
      %v2556 = vunpack.c.l.b16 %v2440
      %v2557 = vunpack.c.l.b16 %v2441
      %v2558 = vunpack.c.l.b16 %v2442
      %v2559 = vunpack.c.l.b16 %v2443
      %v2560 = vpack.c.b16 %v2557, %v2556
      %v2561 = vpack.c.b16 %v2559, %v2558
      %v2568 = vunpack.c.l.b16 %v2488
      %v2569 = vunpack.c.l.b16 %v2489
      %v2570 = vunpack.c.l.b16 %v2490
      %v2571 = vunpack.c.l.b16 %v2491
      %v2572 = vpack.c.b16 %v2569, %v2568
      %v2573 = vpack.c.b16 %v2571, %v2570
      %v2580 = vunpack.c.l.b16 %v2536
      %v2581 = vunpack.c.l.b16 %v2537
      %v2582 = vunpack.c.l.b16 %v2538
      %v2583 = vunpack.c.l.b16 %v2539
      %v2584 = vpack.c.b16 %v2581, %v2580
      %v2585 = vpack.c.b16 %v2583, %v2582
      %v2588 = vld [vmem:[%s293 + $0x300] sm:$0xf]
      %v2589 = vld [vmem:[%s293 + $0x304] sm:$0xf]
      %v2590 = vld [vmem:[%s293 + $0x308] sm:$0xf]
      %v2591 = vld [vmem:[%s293 + $0x30c] sm:$0xf]
      %v2592 = vld [vmem:[%s293 + $0x310] sm:$0xf]
      %v2593 = vld [vmem:[%s293 + $0x314] sm:$0xf]
      %v2594 = vld [vmem:[%s293 + $0x318] sm:$0xf]
      %v2595 = vld [vmem:[%s293 + $0x31c] sm:$0xf]
      %v2596 = vld [vmem:[%s293 + $0x320] sm:$0xf]
      %v2597 = vld [vmem:[%s293 + $0x324] sm:$0xf]
      %v2598 = vld [vmem:[%s293 + $0x328] sm:$0xf]
      %v2599 = vld [vmem:[%s293 + $0x32c] sm:$0xf]
      %v2600 = vld [vmem:[%s293 + $0x330] sm:$0xf]
      %v2601 = vld [vmem:[%s293 + $0x334] sm:$0xf]
      %v2602 = vld [vmem:[%s293 + $0x338] sm:$0xf]
      %v2603 = vld [vmem:[%s293 + $0x33c] sm:$0xf]
      %v2604 = vld [vmem:[%s293 + $0x340] sm:$0xf]
      %v2605 = vld [vmem:[%s293 + $0x344] sm:$0xf]
      %v2606 = vld [vmem:[%s293 + $0x348] sm:$0xf]
      %v2607 = vld [vmem:[%s293 + $0x34c] sm:$0xf]
      %v2608 = vld [vmem:[%s293 + $0x350] sm:$0xf]
      %v2609 = vld [vmem:[%s293 + $0x354] sm:$0xf]
      %v2610 = vld [vmem:[%s293 + $0x358] sm:$0xf]
      %v2611 = vld [vmem:[%s293 + $0x35c] sm:$0xf]
      %v2612 = vld [vmem:[%s293 + $0x360] sm:$0xf]
      %v2613 = vld [vmem:[%s293 + $0x364] sm:$0xf]
      %v2614 = vld [vmem:[%s293 + $0x368] sm:$0xf]
      %v2615 = vld [vmem:[%s293 + $0x36c] sm:$0xf]
      %v2616 = vld [vmem:[%s293 + $0x370] sm:$0xf]
      %v2617 = vld [vmem:[%s293 + $0x374] sm:$0xf]
      %v2618 = vld [vmem:[%s293 + $0x378] sm:$0xf]
      %v2619 = vld [vmem:[%s293 + $0x37c] sm:$0xf]
      %v2620 = vld [vmem:[%s293 + $0x380] sm:$0xf]
      %v2621 = vld [vmem:[%s293 + $0x384] sm:$0xf]
      %v2622 = vld [vmem:[%s293 + $0x388] sm:$0xf]
      %v2623 = vld [vmem:[%s293 + $0x38c] sm:$0xf]
      %v2624 = vld [vmem:[%s293 + $0x390] sm:$0xf]
      %v2625 = vld [vmem:[%s293 + $0x394] sm:$0xf]
      %v2626 = vld [vmem:[%s293 + $0x398] sm:$0xf]
      %v2627 = vld [vmem:[%s293 + $0x39c] sm:$0xf]
      %v2628 = vld [vmem:[%s293 + $0x3a0] sm:$0xf]
      %v2629 = vld [vmem:[%s293 + $0x3a4] sm:$0xf]
      %v2630 = vld [vmem:[%s293 + $0x3a8] sm:$0xf]
      %v2631 = vld [vmem:[%s293 + $0x3ac] sm:$0xf]
      %v2632 = vld [vmem:[%s293 + $0x3b0] sm:$0xf]
      %v2633 = vld [vmem:[%s293 + $0x3b4] sm:$0xf]
      %v2634 = vld [vmem:[%s293 + $0x3b8] sm:$0xf]
      %v2635 = vld [vmem:[%s293 + $0x3bc] sm:$0xf]
      %v2636 = vld [vmem:[%s293 + $0x3c0] sm:$0xf]
      %v2637 = vld [vmem:[%s293 + $0x3c4] sm:$0xf]
      %v2638 = vld [vmem:[%s293 + $0x3c8] sm:$0xf]
      %v2639 = vld [vmem:[%s293 + $0x3cc] sm:$0xf]
      %v2640 = vld [vmem:[%s293 + $0x3d0] sm:$0xf]
      %v2641 = vld [vmem:[%s293 + $0x3d4] sm:$0xf]
      %v2642 = vld [vmem:[%s293 + $0x3d8] sm:$0xf]
      %v2643 = vld [vmem:[%s293 + $0x3dc] sm:$0xf]
      %v2644 = vld [vmem:[%s293 + $0x3e0] sm:$0xf]
      %v2645 = vld [vmem:[%s293 + $0x3e4] sm:$0xf]
      %v2646 = vld [vmem:[%s293 + $0x3e8] sm:$0xf]
      %v2647 = vld [vmem:[%s293 + $0x3ec] sm:$0xf]
      %v2648 = vld [vmem:[%s293 + $0x3f0] sm:$0xf]
      %v2649 = vld [vmem:[%s293 + $0x3f4] sm:$0xf]
      %v2650 = vld [vmem:[%s293 + $0x3f8] sm:$0xf]
      %v2651 = vld [vmem:[%s293 + $0x3fc] sm:$0xf]
      %v2652 = vld [vmem:[%s299] sm:$0xff]
      %v2653 = vld [vmem:[%s299 + $0x8] sm:$0xff]
      %v2654 = vld [vmem:[%s299 + $0x10] sm:$0xff]
      %v2655 = vld [vmem:[%s299 + $0x18] sm:$0xff]
      %v2720 = vunpack.c.l.b16 %v2588
      %v2721 = vunpack.c.l.b16 %v2589
      %v2722 = vunpack.c.l.b16 %v2590
      %v2723 = vunpack.c.l.b16 %v2591
      %v2724 = vunpack.c.l.b16 %v2592
      %v2725 = vunpack.c.l.b16 %v2593
      %v2726 = vunpack.c.l.b16 %v2594
      %v2727 = vunpack.c.l.b16 %v2595
      %v2728 = vunpack.c.l.b16 %v2596
      %v2729 = vunpack.c.l.b16 %v2597
      %v2730 = vunpack.c.l.b16 %v2598
      %v2731 = vunpack.c.l.b16 %v2599
      %v2732 = vunpack.c.l.b16 %v2600
      %v2733 = vunpack.c.l.b16 %v2601
      %v2734 = vunpack.c.l.b16 %v2602
      %v2735 = vunpack.c.l.b16 %v2603
      %v2736 = vunpack.c.l.b16 %v2604
      %v2737 = vunpack.c.l.b16 %v2605
      %v2738 = vunpack.c.l.b16 %v2606
      %v2739 = vunpack.c.l.b16 %v2607
      %v2740 = vunpack.c.l.b16 %v2608
      %v2741 = vunpack.c.l.b16 %v2609
      %v2742 = vunpack.c.l.b16 %v2610
      %v2743 = vunpack.c.l.b16 %v2611
      %v2744 = vunpack.c.l.b16 %v2612
      %v2745 = vunpack.c.l.b16 %v2613
      %v2746 = vunpack.c.l.b16 %v2614
      %v2747 = vunpack.c.l.b16 %v2615
      %v2748 = vunpack.c.l.b16 %v2616
      %v2749 = vunpack.c.l.b16 %v2617
      %v2750 = vunpack.c.l.b16 %v2618
      %v2751 = vunpack.c.l.b16 %v2619
      %v2752 = vunpack.c.l.b16 %v2620
      %v2753 = vunpack.c.l.b16 %v2621
      %v2754 = vunpack.c.l.b16 %v2622
      %v2755 = vunpack.c.l.b16 %v2623
      %v2756 = vunpack.c.l.b16 %v2624
      %v2757 = vunpack.c.l.b16 %v2625
      %v2758 = vunpack.c.l.b16 %v2626
      %v2759 = vunpack.c.l.b16 %v2627
      %v2760 = vunpack.c.l.b16 %v2628
      %v2761 = vunpack.c.l.b16 %v2629
      %v2762 = vunpack.c.l.b16 %v2630
      %v2763 = vunpack.c.l.b16 %v2631
      %v2764 = vunpack.c.l.b16 %v2632
      %v2765 = vunpack.c.l.b16 %v2633
      %v2766 = vunpack.c.l.b16 %v2634
      %v2767 = vunpack.c.l.b16 %v2635
      %v2768 = vunpack.c.l.b16 %v2636
      %v2769 = vunpack.c.l.b16 %v2637
      %v2770 = vunpack.c.l.b16 %v2638
      %v2771 = vunpack.c.l.b16 %v2639
      %v2772 = vunpack.c.l.b16 %v2640
      %v2773 = vunpack.c.l.b16 %v2641
      %v2774 = vunpack.c.l.b16 %v2642
      %v2775 = vunpack.c.l.b16 %v2643
      %v2776 = vunpack.c.l.b16 %v2644
      %v2777 = vunpack.c.l.b16 %v2645
      %v2778 = vunpack.c.l.b16 %v2646
      %v2779 = vunpack.c.l.b16 %v2647
      %v2780 = vunpack.c.l.b16 %v2648
      %v2781 = vunpack.c.l.b16 %v2649
      %v2782 = vunpack.c.l.b16 %v2650
      %v2783 = vunpack.c.l.b16 %v2651
      %v2784 = vpack.c.b16 %v2721, %v2720
      %v2785 = vpack.c.b16 %v2723, %v2722
      %v2786 = vpack.c.b16 %v2725, %v2724
      %v2787 = vpack.c.b16 %v2727, %v2726
      %v2788 = vpack.c.b16 %v2729, %v2728
      %v2789 = vpack.c.b16 %v2731, %v2730
      %v2790 = vpack.c.b16 %v2733, %v2732
      %v2791 = vpack.c.b16 %v2735, %v2734
      %v2792 = vpack.c.b16 %v2737, %v2736
      %v2793 = vpack.c.b16 %v2739, %v2738
      %v2794 = vpack.c.b16 %v2741, %v2740
      %v2795 = vpack.c.b16 %v2743, %v2742
      %v2796 = vpack.c.b16 %v2745, %v2744
      %v2797 = vpack.c.b16 %v2747, %v2746
      %v2798 = vpack.c.b16 %v2749, %v2748
      %v2799 = vpack.c.b16 %v2751, %v2750
      %v2800 = vpack.c.b16 %v2753, %v2752
      %v2801 = vpack.c.b16 %v2755, %v2754
      %v2802 = vpack.c.b16 %v2757, %v2756
      %v2803 = vpack.c.b16 %v2759, %v2758
      %v2804 = vpack.c.b16 %v2761, %v2760
      %v2805 = vpack.c.b16 %v2763, %v2762
      %v2806 = vpack.c.b16 %v2765, %v2764
      %v2807 = vpack.c.b16 %v2767, %v2766
      %v2808 = vpack.c.b16 %v2769, %v2768
      %v2809 = vpack.c.b16 %v2771, %v2770
      %v2810 = vpack.c.b16 %v2773, %v2772
      %v2811 = vpack.c.b16 %v2775, %v2774
      %v2812 = vpack.c.b16 %v2777, %v2776
      %v2813 = vpack.c.b16 %v2779, %v2778
      %v2814 = vpack.c.b16 %v2781, %v2780
      %v2815 = vpack.c.b16 %v2783, %v2782
      %2848 = vmatprep.subr.bf16.mxu0 0
      %2849 = vmatpush1.bf16.msra.mxu0 %v2784
      %2850 = vmatprep.subr.bf16.mxu0 0
      %2851 = vmatpush1.bf16.msra.mxu0 %v2785
      %2852 = vmatprep.subr.bf16.mxu0 0
      %2853 = vmatpush1.bf16.msra.mxu0 %v2786
      %2854 = vmatprep.subr.bf16.mxu0 0
      %2855 = vmatpush1.bf16.msra.mxu0 %v2787
      %2856 = vmatprep.subr.bf16.mxu0 0
      %2857 = vmatpush1.bf16.msra.mxu0 %v2788
      %2858 = vmatprep.subr.bf16.mxu0 0
      %2859 = vmatpush1.bf16.msra.mxu0 %v2789
      %2860 = vmatprep.subr.bf16.mxu0 0
      %2861 = vmatpush1.bf16.msra.mxu0 %v2790
      %2862 = vmatprep.subr.bf16.mxu0 0
      %2863 = vmatpush1.bf16.msra.mxu0 %v2791
      %2864 = vmatprep.subr.bf16.mxu0 0
      %2865 = vmatpush1.bf16.msra.mxu0 %v2792
      %2866 = vmatprep.subr.bf16.mxu0 0
      %2867 = vmatpush1.bf16.msra.mxu0 %v2793
      %2868 = vmatprep.subr.bf16.mxu0 0
      %2869 = vmatpush1.bf16.msra.mxu0 %v2794
      %2870 = vmatprep.subr.bf16.mxu0 0
      %2871 = vmatpush1.bf16.msra.mxu0 %v2795
      %2872 = vmatprep.subr.bf16.mxu0 0
      %2873 = vmatpush1.bf16.msra.mxu0 %v2796
      %2874 = vmatprep.subr.bf16.mxu0 0
      %2875 = vmatpush1.bf16.msra.mxu0 %v2797
      %2876 = vmatprep.subr.bf16.mxu0 0
      %2877 = vmatpush1.bf16.msra.mxu0 %v2798
      %2878 = vmatprep.subr.bf16.mxu0 0
      %2879 = vmatpush1.bf16.msra.mxu0 %v2799
      %2880 = vmatprep.mubr.bf16.mxu0 %v2560
      %2881 = vmatmul.mubr.bf16.gmra.mrb[0].mxu0 %v2548
      %v2882 = vpop.f32.mrb[0].mxu0
      %v2883 = vadd.f32 0.0, %v2882
      %v2884 = vpop.f32.mrb[0].mxu0
      %v2885 = vpop.f32.mrb[0].mxu0
      %v2886 = vadd.f32 0.0, %v2885
      %v2887 = vpop.f32.mrb[0].mxu0
      %2888 = vmatprep.mubr.bf16.mxu0 %v2561
      %2889 = vmatmul.mubr.bf16.gmra.mrb[0].mxu0 %v2549
      %v2890 = vpop.f32.mrb[0].mxu0
      %v2891 = vadd.f32 0.0, %v2890
      %v2892 = vpop.f32.mrb[0].mxu0
      %v2893 = vpop.f32.mrb[0].mxu0
      %v2894 = vadd.f32 0.0, %v2893
      %v2895 = vpop.f32.mrb[0].mxu0
      %2896 = vdwg.mxu0
      %2897 = vmatprep.subr.bf16.mxu0 0
      %2898 = vmatpush1.bf16.msra.mxu0 %v2800
      %2899 = vmatprep.subr.bf16.mxu0 0
      %2900 = vmatpush1.bf16.msra.mxu0 %v2801
      %2901 = vmatprep.subr.bf16.mxu0 0
      %2902 = vmatpush1.bf16.msra.mxu0 %v2802
      %2903 = vmatprep.subr.bf16.mxu0 0
      %2904 = vmatpush1.bf16.msra.mxu0 %v2803
      %2905 = vmatprep.subr.bf16.mxu0 0
      %2906 = vmatpush1.bf16.msra.mxu0 %v2804
      %2907 = vmatprep.subr.bf16.mxu0 0
      %2908 = vmatpush1.bf16.msra.mxu0 %v2805
      %2909 = vmatprep.subr.bf16.mxu0 0
      %2910 = vmatpush1.bf16.msra.mxu0 %v2806
      %2911 = vmatprep.subr.bf16.mxu0 0
      %2912 = vmatpush1.bf16.msra.mxu0 %v2807
      %2913 = vmatprep.subr.bf16.mxu0 0
      %2914 = vmatpush1.bf16.msra.mxu0 %v2808
      %2915 = vmatprep.subr.bf16.mxu0 0
      %2916 = vmatpush1.bf16.msra.mxu0 %v2809
      %2917 = vmatprep.subr.bf16.mxu0 0
      %2918 = vmatpush1.bf16.msra.mxu0 %v2810
      %2919 = vmatprep.subr.bf16.mxu0 0
      %2920 = vmatpush1.bf16.msra.mxu0 %v2811
      %2921 = vmatprep.subr.bf16.mxu0 0
      %2922 = vmatpush1.bf16.msra.mxu0 %v2812
      %2923 = vmatprep.subr.bf16.mxu0 0
      %2924 = vmatpush1.bf16.msra.mxu0 %v2813
      %2925 = vmatprep.subr.bf16.mxu0 0
      %2926 = vmatpush1.bf16.msra.mxu0 %v2814
      %2927 = vmatprep.subr.bf16.mxu0 0
      %2928 = vmatpush1.bf16.msra.mxu0 %v2815
      %2929 = vmatprep.mubr.bf16.mxu0 %v2584
      %2930 = vmatmul.mubr.bf16.gmra.mrb[0].mxu0 %v2572
      %v2931 = vpop.f32.mrb[0].mxu0
      %v2932 = vadd.f32 %v2883, %v2931
      %v2933 = vpop.f32.mrb[0].mxu0
      %v2934 = vpop.f32.mrb[0].mxu0
      %v2935 = vadd.f32 %v2886, %v2934
      %v2936 = vpop.f32.mrb[0].mxu0
      %2937 = vmatprep.mubr.bf16.mxu0 %v2585
      %2938 = vmatmul.mubr.bf16.gmra.mrb[0].mxu0 %v2573
      %v2939 = vpop.f32.mrb[0].mxu0
      %v2940 = vadd.f32 %v2891, %v2939
      %v2941 = vpop.f32.mrb[0].mxu0
      %v2942 = vpop.f32.mrb[0].mxu0
      %v2943 = vadd.f32 %v2894, %v2942
      %v2944 = vpop.f32.mrb[0].mxu0
      %2945 = vdwg.mxu0
      %v2946 = vadd.f32 %v2652, %v2932
      %v2947 = vadd.f32 %v2653, %v2935
      %v2948 = vadd.f32 %v2654, %v2940
      %v2949 = vadd.f32 %v2655, %v2943
      %2950 = vst [vmem:[%s299] sm:$0xff] %v2946
      %2951 = vst [vmem:[%s299 + $0x8] sm:$0xff] %v2947
      %2952 = vst [vmem:[%s299 + $0x10] sm:$0xff] %v2948
      %2953 = vst [vmem:[%s299 + $0x18] sm:$0xff] %v2949
      %2954 = vset.pattern.permute.xlu0 16
      %2955 = vperm.xlu0 %2954, %v522
      %v2956 = vpop.permute.xlu0 %2955
      %v2959 = vunpack.c.l.s4 839922192
      %v2960 = vunpack.c.0.s8 %v2959
      %v2961 = vlaneseq
      %v2962 = vshrl.u32 %v2961, 7
      %v2963 = vsub.s32 %v2960, %v2962
      %v2964 = vrot.slane %v2956, %v2963
      %2965 = vset.pattern.permute.xlu0 16
      %2966 = vperm.xlu0 %2965, %v523
      %v2967 = vpop.permute.xlu0 %2966
      %v2970 = vunpack.c.l.s4 839922192
      %v2971 = vunpack.c.0.s8 %v2970
      %v2972 = vlaneseq
      %v2973 = vshrl.u32 %v2972, 7
      %v2974 = vsub.s32 %v2971, %v2973
      %v2975 = vrot.slane %v2967, %v2974
      %2976 = vset.pattern.permute.xlu0 16
      %2977 = vperm.xlu0 %2976, %v524
      %v2978 = vpop.permute.xlu0 %2977
      %v2981 = vunpack.c.l.s4 839922192
      %v2982 = vunpack.c.0.s8 %v2981
      %v2983 = vlaneseq
      %v2984 = vshrl.u32 %v2983, 7
      %v2985 = vsub.s32 %v2982, %v2984
      %v2986 = vrot.slane %v2978, %v2985
      %2987 = vset.pattern.permute.xlu0 16
      %2988 = vperm.xlu0 %2987, %v525
      %v2989 = vpop.permute.xlu0 %2988
      %v2992 = vunpack.c.l.s4 839922192
      %v2993 = vunpack.c.0.s8 %v2992
      %v2994 = vlaneseq
      %v2995 = vshrl.u32 %v2994, 7
      %v2996 = vsub.s32 %v2993, %v2995
      %v2997 = vrot.slane %v2989, %v2996
      %v2998 = vmul.bf16 %v2964, %v518
      %v2999 = vmul.bf16 %v2975, %v519
      %v3000 = vmul.bf16 %v2986, %v520
      %v3001 = vmul.bf16 %v2997, %v521
      %3002 = vset.pattern.permute.xlu0 17
      %3003 = vperm.xlu0 %3002, %v522
      %v3004 = vpop.permute.xlu0 %3003
      %v3007 = vunpack.c.l.s4 839922192
      %v3008 = vunpack.c.0.s8 %v3007
      %v3009 = vlaneseq
      %v3010 = vshrl.u32 %v3009, 7
      %v3011 = vsub.s32 %v3008, %v3010
      %v3012 = vrot.slane %v3004, %v3011
      %3013 = vset.pattern.permute.xlu0 17
      %3014 = vperm.xlu0 %3013, %v523
      %v3015 = vpop.permute.xlu0 %3014
      %v3018 = vunpack.c.l.s4 839922192
      %v3019 = vunpack.c.0.s8 %v3018
      %v3020 = vlaneseq
      %v3021 = vshrl.u32 %v3020, 7
      %v3022 = vsub.s32 %v3019, %v3021
      %v3023 = vrot.slane %v3015, %v3022
      %3024 = vset.pattern.permute.xlu0 17
      %3025 = vperm.xlu0 %3024, %v524
      %v3026 = vpop.permute.xlu0 %3025
      %v3029 = vunpack.c.l.s4 839922192
      %v3030 = vunpack.c.0.s8 %v3029
      %v3031 = vlaneseq
      %v3032 = vshrl.u32 %v3031, 7
      %v3033 = vsub.s32 %v3030, %v3032
      %v3034 = vrot.slane %v3026, %v3033
      %3035 = vset.pattern.permute.xlu0 17
      %3036 = vperm.xlu0 %3035, %v525
      %v3037 = vpop.permute.xlu0 %3036
      %v3040 = vunpack.c.l.s4 839922192
      %v3041 = vunpack.c.0.s8 %v3040
      %v3042 = vlaneseq
      %v3043 = vshrl.u32 %v3042, 7
      %v3044 = vsub.s32 %v3041, %v3043
      %v3045 = vrot.slane %v3037, %v3044
      %v3046 = vmul.bf16 %v3012, %v518
      %v3047 = vmul.bf16 %v3023, %v519
      %v3048 = vmul.bf16 %v3034, %v520
      %v3049 = vmul.bf16 %v3045, %v521
      %3050 = vset.pattern.permute.xlu0 18
      %3051 = vperm.xlu0 %3050, %v522
      %v3052 = vpop.permute.xlu0 %3051
      %v3055 = vunpack.c.l.s4 839922192
      %v3056 = vunpack.c.0.s8 %v3055
      %v3057 = vlaneseq
      %v3058 = vshrl.u32 %v3057, 7
      %v3059 = vsub.s32 %v3056, %v3058
      %v3060 = vrot.slane %v3052, %v3059
      %3061 = vset.pattern.permute.xlu0 18
      %3062 = vperm.xlu0 %3061, %v523
      %v3063 = vpop.permute.xlu0 %3062
      %v3066 = vunpack.c.l.s4 839922192
      %v3067 = vunpack.c.0.s8 %v3066
      %v3068 = vlaneseq
      %v3069 = vshrl.u32 %v3068, 7
      %v3070 = vsub.s32 %v3067, %v3069
      %v3071 = vrot.slane %v3063, %v3070
      %3072 = vset.pattern.permute.xlu0 18
      %3073 = vperm.xlu0 %3072, %v524
      %v3074 = vpop.permute.xlu0 %3073
      %v3077 = vunpack.c.l.s4 839922192
      %v3078 = vunpack.c.0.s8 %v3077
      %v3079 = vlaneseq
      %v3080 = vshrl.u32 %v3079, 7
      %v3081 = vsub.s32 %v3078, %v3080
      %v3082 = vrot.slane %v3074, %v3081
      %3083 = vset.pattern.permute.xlu0 18
      %3084 = vperm.xlu0 %3083, %v525
      %v3085 = vpop.permute.xlu0 %3084
      %v3088 = vunpack.c.l.s4 839922192
      %v3089 = vunpack.c.0.s8 %v3088
      %v3090 = vlaneseq
      %v3091 = vshrl.u32 %v3090, 7
      %v3092 = vsub.s32 %v3089, %v3091
      %v3093 = vrot.slane %v3085, %v3092
      %v3094 = vmul.bf16 %v3060, %v518
      %v3095 = vmul.bf16 %v3071, %v519
      %v3096 = vmul.bf16 %v3082, %v520
      %v3097 = vmul.bf16 %v3093, %v521
      %3098 = vset.pattern.permute.xlu0 19
      %3099 = vperm.xlu0 %3098, %v522
      %v3100 = vpop.permute.xlu0 %3099
      %v3103 = vunpack.c.l.s4 839922192
      %v3104 = vunpack.c.0.s8 %v3103
      %v3105 = vlaneseq
      %v3106 = vshrl.u32 %v3105, 7
      %v3107 = vsub.s32 %v3104, %v3106
      %v3108 = vrot.slane %v3100, %v3107
      %3109 = vset.pattern.permute.xlu0 19
      %3110 = vperm.xlu0 %3109, %v523
      %v3111 = vpop.permute.xlu0 %3110
      %v3114 = vunpack.c.l.s4 839922192
      %v3115 = vunpack.c.0.s8 %v3114
      %v3116 = vlaneseq
      %v3117 = vshrl.u32 %v3116, 7
      %v3118 = vsub.s32 %v3115, %v3117
      %v3119 = vrot.slane %v3111, %v3118
      %3120 = vset.pattern.permute.xlu0 19
      %3121 = vperm.xlu0 %3120, %v524
      %v3122 = vpop.permute.xlu0 %3121
      %v3125 = vunpack.c.l.s4 839922192
      %v3126 = vunpack.c.0.s8 %v3125
      %v3127 = vlaneseq
      %v3128 = vshrl.u32 %v3127, 7
      %v3129 = vsub.s32 %v3126, %v3128
      %v3130 = vrot.slane %v3122, %v3129
      %3131 = vset.pattern.permute.xlu0 19
      %3132 = vperm.xlu0 %3131, %v525
      %v3133 = vpop.permute.xlu0 %3132
      %v3136 = vunpack.c.l.s4 839922192
      %v3137 = vunpack.c.0.s8 %v3136
      %v3138 = vlaneseq
      %v3139 = vshrl.u32 %v3138, 7
      %v3140 = vsub.s32 %v3137, %v3139
      %v3141 = vrot.slane %v3133, %v3140
      %v3142 = vmul.bf16 %v3108, %v518
      %v3143 = vmul.bf16 %v3119, %v519
      %v3144 = vmul.bf16 %v3130, %v520
      %v3145 = vmul.bf16 %v3141, %v521
      %v3150 = vunpack.c.l.b16 %v2998
      %v3151 = vunpack.c.l.b16 %v2999
      %v3152 = vunpack.c.l.b16 %v3000
      %v3153 = vunpack.c.l.b16 %v3001
      %v3154 = vpack.c.b16 %v3151, %v3150
      %v3155 = vpack.c.b16 %v3153, %v3152
      %v3162 = vunpack.c.l.b16 %v3046
      %v3163 = vunpack.c.l.b16 %v3047
      %v3164 = vunpack.c.l.b16 %v3048
      %v3165 = vunpack.c.l.b16 %v3049
      %v3166 = vpack.c.b16 %v3163, %v3162
      %v3167 = vpack.c.b16 %v3165, %v3164
      %v3174 = vunpack.c.l.b16 %v3094
      %v3175 = vunpack.c.l.b16 %v3095
      %v3176 = vunpack.c.l.b16 %v3096
      %v3177 = vunpack.c.l.b16 %v3097
      %v3178 = vpack.c.b16 %v3175, %v3174
      %v3179 = vpack.c.b16 %v3177, %v3176
      %v3186 = vunpack.c.l.b16 %v3142
      %v3187 = vunpack.c.l.b16 %v3143
      %v3188 = vunpack.c.l.b16 %v3144
      %v3189 = vunpack.c.l.b16 %v3145
      %v3190 = vpack.c.b16 %v3187, %v3186
      %v3191 = vpack.c.b16 %v3189, %v3188
      %v3194 = vld [vmem:[%s293 + $0x400] sm:$0xf]
      %v3195 = vld [vmem:[%s293 + $0x404] sm:$0xf]
      %v3196 = vld [vmem:[%s293 + $0x408] sm:$0xf]
      %v3197 = vld [vmem:[%s293 + $0x40c] sm:$0xf]
      %v3198 = vld [vmem:[%s293 + $0x410] sm:$0xf]
      %v3199 = vld [vmem:[%s293 + $0x414] sm:$0xf]
      %v3200 = vld [vmem:[%s293 + $0x418] sm:$0xf]
      %v3201 = vld [vmem:[%s293 + $0x41c] sm:$0xf]
      %v3202 = vld [vmem:[%s293 + $0x420] sm:$0xf]
      %v3203 = vld [vmem:[%s293 + $0x424] sm:$0xf]
      %v3204 = vld [vmem:[%s293 + $0x428] sm:$0xf]
      %v3205 = vld [vmem:[%s293 + $0x42c] sm:$0xf]
      %v3206 = vld [vmem:[%s293 + $0x430] sm:$0xf]
      %v3207 = vld [vmem:[%s293 + $0x434] sm:$0xf]
      %v3208 = vld [vmem:[%s293 + $0x438] sm:$0xf]
      %v3209 = vld [vmem:[%s293 + $0x43c] sm:$0xf]
      %v3210 = vld [vmem:[%s293 + $0x440] sm:$0xf]
      %v3211 = vld [vmem:[%s293 + $0x444] sm:$0xf]
      %v3212 = vld [vmem:[%s293 + $0x448] sm:$0xf]
      %v3213 = vld [vmem:[%s293 + $0x44c] sm:$0xf]
      %v3214 = vld [vmem:[%s293 + $0x450] sm:$0xf]
      %v3215 = vld [vmem:[%s293 + $0x454] sm:$0xf]
      %v3216 = vld [vmem:[%s293 + $0x458] sm:$0xf]
      %v3217 = vld [vmem:[%s293 + $0x45c] sm:$0xf]
      %v3218 = vld [vmem:[%s293 + $0x460] sm:$0xf]
      %v3219 = vld [vmem:[%s293 + $0x464] sm:$0xf]
      %v3220 = vld [vmem:[%s293 + $0x468] sm:$0xf]
      %v3221 = vld [vmem:[%s293 + $0x46c] sm:$0xf]
      %v3222 = vld [vmem:[%s293 + $0x470] sm:$0xf]
      %v3223 = vld [vmem:[%s293 + $0x474] sm:$0xf]
      %v3224 = vld [vmem:[%s293 + $0x478] sm:$0xf]
      %v3225 = vld [vmem:[%s293 + $0x47c] sm:$0xf]
      %v3226 = vld [vmem:[%s293 + $0x480] sm:$0xf]
      %v3227 = vld [vmem:[%s293 + $0x484] sm:$0xf]
      %v3228 = vld [vmem:[%s293 + $0x488] sm:$0xf]
      %v3229 = vld [vmem:[%s293 + $0x48c] sm:$0xf]
      %v3230 = vld [vmem:[%s293 + $0x490] sm:$0xf]
      %v3231 = vld [vmem:[%s293 + $0x494] sm:$0xf]
      %v3232 = vld [vmem:[%s293 + $0x498] sm:$0xf]
      %v3233 = vld [vmem:[%s293 + $0x49c] sm:$0xf]
      %v3234 = vld [vmem:[%s293 + $0x4a0] sm:$0xf]
      %v3235 = vld [vmem:[%s293 + $0x4a4] sm:$0xf]
      %v3236 = vld [vmem:[%s293 + $0x4a8] sm:$0xf]
      %v3237 = vld [vmem:[%s293 + $0x4ac] sm:$0xf]
      %v3238 = vld [vmem:[%s293 + $0x4b0] sm:$0xf]
      %v3239 = vld [vmem:[%s293 + $0x4b4] sm:$0xf]
      %v3240 = vld [vmem:[%s293 + $0x4b8] sm:$0xf]
      %v3241 = vld [vmem:[%s293 + $0x4bc] sm:$0xf]
      %v3242 = vld [vmem:[%s293 + $0x4c0] sm:$0xf]
      %v3243 = vld [vmem:[%s293 + $0x4c4] sm:$0xf]
      %v3244 = vld [vmem:[%s293 + $0x4c8] sm:$0xf]
      %v3245 = vld [vmem:[%s293 + $0x4cc] sm:$0xf]
      %v3246 = vld [vmem:[%s293 + $0x4d0] sm:$0xf]
      %v3247 = vld [vmem:[%s293 + $0x4d4] sm:$0xf]
      %v3248 = vld [vmem:[%s293 + $0x4d8] sm:$0xf]
      %v3249 = vld [vmem:[%s293 + $0x4dc] sm:$0xf]
      %v3250 = vld [vmem:[%s293 + $0x4e0] sm:$0xf]
      %v3251 = vld [vmem:[%s293 + $0x4e4] sm:$0xf]
      %v3252 = vld [vmem:[%s293 + $0x4e8] sm:$0xf]
      %v3253 = vld [vmem:[%s293 + $0x4ec] sm:$0xf]
      %v3254 = vld [vmem:[%s293 + $0x4f0] sm:$0xf]
      %v3255 = vld [vmem:[%s293 + $0x4f4] sm:$0xf]
      %v3256 = vld [vmem:[%s293 + $0x4f8] sm:$0xf]
      %v3257 = vld [vmem:[%s293 + $0x4fc] sm:$0xf]
      %v3258 = vld [vmem:[%s299] sm:$0xff]
      %v3259 = vld [vmem:[%s299 + $0x8] sm:$0xff]
      %v3260 = vld [vmem:[%s299 + $0x10] sm:$0xff]
      %v3261 = vld [vmem:[%s299 + $0x18] sm:$0xff]
      %v3326 = vunpack.c.l.b16 %v3194
      %v3327 = vunpack.c.l.b16 %v3195
      %v3328 = vunpack.c.l.b16 %v3196
      %v3329 = vunpack.c.l.b16 %v3197
      %v3330 = vunpack.c.l.b16 %v3198
      %v3331 = vunpack.c.l.b16 %v3199
      %v3332 = vunpack.c.l.b16 %v3200
      %v3333 = vunpack.c.l.b16 %v3201
      %v3334 = vunpack.c.l.b16 %v3202
      %v3335 = vunpack.c.l.b16 %v3203
      %v3336 = vunpack.c.l.b16 %v3204
      %v3337 = vunpack.c.l.b16 %v3205
      %v3338 = vunpack.c.l.b16 %v3206
      %v3339 = vunpack.c.l.b16 %v3207
      %v3340 = vunpack.c.l.b16 %v3208
      %v3341 = vunpack.c.l.b16 %v3209
      %v3342 = vunpack.c.l.b16 %v3210
      %v3343 = vunpack.c.l.b16 %v3211
      %v3344 = vunpack.c.l.b16 %v3212
      %v3345 = vunpack.c.l.b16 %v3213
      %v3346 = vunpack.c.l.b16 %v3214
      %v3347 = vunpack.c.l.b16 %v3215
      %v3348 = vunpack.c.l.b16 %v3216
      %v3349 = vunpack.c.l.b16 %v3217
      %v3350 = vunpack.c.l.b16 %v3218
      %v3351 = vunpack.c.l.b16 %v3219
      %v3352 = vunpack.c.l.b16 %v3220
      %v3353 = vunpack.c.l.b16 %v3221
      %v3354 = vunpack.c.l.b16 %v3222
      %v3355 = vunpack.c.l.b16 %v3223
      %v3356 = vunpack.c.l.b16 %v3224
      %v3357 = vunpack.c.l.b16 %v3225
      %v3358 = vunpack.c.l.b16 %v3226
      %v3359 = vunpack.c.l.b16 %v3227
      %v3360 = vunpack.c.l.b16 %v3228
      %v3361 = vunpack.c.l.b16 %v3229
      %v3362 = vunpack.c.l.b16 %v3230
      %v3363 = vunpack.c.l.b16 %v3231
      %v3364 = vunpack.c.l.b16 %v3232
      %v3365 = vunpack.c.l.b16 %v3233
      %v3366 = vunpack.c.l.b16 %v3234
      %v3367 = vunpack.c.l.b16 %v3235
      %v3368 = vunpack.c.l.b16 %v3236
      %v3369 = vunpack.c.l.b16 %v3237
      %v3370 = vunpack.c.l.b16 %v3238
      %v3371 = vunpack.c.l.b16 %v3239
      %v3372 = vunpack.c.l.b16 %v3240
      %v3373 = vunpack.c.l.b16 %v3241
      %v3374 = vunpack.c.l.b16 %v3242
      %v3375 = vunpack.c.l.b16 %v3243
      %v3376 = vunpack.c.l.b16 %v3244
      %v3377 = vunpack.c.l.b16 %v3245
      %v3378 = vunpack.c.l.b16 %v3246
      %v3379 = vunpack.c.l.b16 %v3247
      %v3380 = vunpack.c.l.b16 %v3248
      %v3381 = vunpack.c.l.b16 %v3249
      %v3382 = vunpack.c.l.b16 %v3250
      %v3383 = vunpack.c.l.b16 %v3251
      %v3384 = vunpack.c.l.b16 %v3252
      %v3385 = vunpack.c.l.b16 %v3253
      %v3386 = vunpack.c.l.b16 %v3254
      %v3387 = vunpack.c.l.b16 %v3255
      %v3388 = vunpack.c.l.b16 %v3256
      %v3389 = vunpack.c.l.b16 %v3257
      %v3390 = vpack.c.b16 %v3327, %v3326
      %v3391 = vpack.c.b16 %v3329, %v3328
      %v3392 = vpack.c.b16 %v3331, %v3330
      %v3393 = vpack.c.b16 %v3333, %v3332
      %v3394 = vpack.c.b16 %v3335, %v3334
      %v3395 = vpack.c.b16 %v3337, %v3336
      %v3396 = vpack.c.b16 %v3339, %v3338
      %v3397 = vpack.c.b16 %v3341, %v3340
      %v3398 = vpack.c.b16 %v3343, %v3342
      %v3399 = vpack.c.b16 %v3345, %v3344
      %v3400 = vpack.c.b16 %v3347, %v3346
      %v3401 = vpack.c.b16 %v3349, %v3348
      %v3402 = vpack.c.b16 %v3351, %v3350
      %v3403 = vpack.c.b16 %v3353, %v3352
      %v3404 = vpack.c.b16 %v3355, %v3354
      %v3405 = vpack.c.b16 %v3357, %v3356
      %v3406 = vpack.c.b16 %v3359, %v3358
      %v3407 = vpack.c.b16 %v3361, %v3360
      %v3408 = vpack.c.b16 %v3363, %v3362
      %v3409 = vpack.c.b16 %v3365, %v3364
      %v3410 = vpack.c.b16 %v3367, %v3366
      %v3411 = vpack.c.b16 %v3369, %v3368
      %v3412 = vpack.c.b16 %v3371, %v3370
      %v3413 = vpack.c.b16 %v3373, %v3372
      %v3414 = vpack.c.b16 %v3375, %v3374
      %v3415 = vpack.c.b16 %v3377, %v3376
      %v3416 = vpack.c.b16 %v3379, %v3378
      %v3417 = vpack.c.b16 %v3381, %v3380
      %v3418 = vpack.c.b16 %v3383, %v3382
      %v3419 = vpack.c.b16 %v3385, %v3384
      %v3420 = vpack.c.b16 %v3387, %v3386
      %v3421 = vpack.c.b16 %v3389, %v3388
      %3454 = vmatprep.subr.bf16.mxu0 0
      %3455 = vmatpush1.bf16.msra.mxu0 %v3390
      %3456 = vmatprep.subr.bf16.mxu0 0
      %3457 = vmatpush1.bf16.msra.mxu0 %v3391
      %3458 = vmatprep.subr.bf16.mxu0 0
      %3459 = vmatpush1.bf16.msra.mxu0 %v3392
      %3460 = vmatprep.subr.bf16.mxu0 0
      %3461 = vmatpush1.bf16.msra.mxu0 %v3393
      %3462 = vmatprep.subr.bf16.mxu0 0
      %3463 = vmatpush1.bf16.msra.mxu0 %v3394
      %3464 = vmatprep.subr.bf16.mxu0 0
      %3465 = vmatpush1.bf16.msra.mxu0 %v3395
      %3466 = vmatprep.subr.bf16.mxu0 0
      %3467 = vmatpush1.bf16.msra.mxu0 %v3396
      %3468 = vmatprep.subr.bf16.mxu0 0
      %3469 = vmatpush1.bf16.msra.mxu0 %v3397
      %3470 = vmatprep.subr.bf16.mxu0 0
      %3471 = vmatpush1.bf16.msra.mxu0 %v3398
      %3472 = vmatprep.subr.bf16.mxu0 0
      %3473 = vmatpush1.bf16.msra.mxu0 %v3399
      %3474 = vmatprep.subr.bf16.mxu0 0
      %3475 = vmatpush1.bf16.msra.mxu0 %v3400
      %3476 = vmatprep.subr.bf16.mxu0 0
      %3477 = vmatpush1.bf16.msra.mxu0 %v3401
      %3478 = vmatprep.subr.bf16.mxu0 0
      %3479 = vmatpush1.bf16.msra.mxu0 %v3402
      %3480 = vmatprep.subr.bf16.mxu0 0
      %3481 = vmatpush1.bf16.msra.mxu0 %v3403
      %3482 = vmatprep.subr.bf16.mxu0 0
      %3483 = vmatpush1.bf16.msra.mxu0 %v3404
      %3484 = vmatprep.subr.bf16.mxu0 0
      %3485 = vmatpush1.bf16.msra.mxu0 %v3405
      %3486 = vmatprep.mubr.bf16.mxu0 %v3166
      %3487 = vmatmul.mubr.bf16.gmra.mrb[0].mxu0 %v3154
      %v3488 = vpop.f32.mrb[0].mxu0
      %v3489 = vadd.f32 0.0, %v3488
      %v3490 = vpop.f32.mrb[0].mxu0
      %v3491 = vpop.f32.mrb[0].mxu0
      %v3492 = vadd.f32 0.0, %v3491
      %v3493 = vpop.f32.mrb[0].mxu0
      %3494 = vmatprep.mubr.bf16.mxu0 %v3167
      %3495 = vmatmul.mubr.bf16.gmra.mrb[0].mxu0 %v3155
      %v3496 = vpop.f32.mrb[0].mxu0
      %v3497 = vadd.f32 0.0, %v3496
      %v3498 = vpop.f32.mrb[0].mxu0
      %v3499 = vpop.f32.mrb[0].mxu0
      %v3500 = vadd.f32 0.0, %v3499
      %v3501 = vpop.f32.mrb[0].mxu0
      %3502 = vdwg.mxu0
      %3503 = vmatprep.subr.bf16.mxu0 0
      %3504 = vmatpush1.bf16.msra.mxu0 %v3406
      %3505 = vmatprep.subr.bf16.mxu0 0
      %3506 = vmatpush1.bf16.msra.mxu0 %v3407
      %3507 = vmatprep.subr.bf16.mxu0 0
      %3508 = vmatpush1.bf16.msra.mxu0 %v3408
      %3509 = vmatprep.subr.bf16.mxu0 0
      %3510 = vmatpush1.bf16.msra.mxu0 %v3409
      %3511 = vmatprep.subr.bf16.mxu0 0
      %3512 = vmatpush1.bf16.msra.mxu0 %v3410
      %3513 = vmatprep.subr.bf16.mxu0 0
      %3514 = vmatpush1.bf16.msra.mxu0 %v3411
      %3515 = vmatprep.subr.bf16.mxu0 0
      %3516 = vmatpush1.bf16.msra.mxu0 %v3412
      %3517 = vmatprep.subr.bf16.mxu0 0
      %3518 = vmatpush1.bf16.msra.mxu0 %v3413
      %3519 = vmatprep.subr.bf16.mxu0 0
      %3520 = vmatpush1.bf16.msra.mxu0 %v3414
      %3521 = vmatprep.subr.bf16.mxu0 0
      %3522 = vmatpush1.bf16.msra.mxu0 %v3415
      %3523 = vmatprep.subr.bf16.mxu0 0
      %3524 = vmatpush1.bf16.msra.mxu0 %v3416
      %3525 = vmatprep.subr.bf16.mxu0 0
      %3526 = vmatpush1.bf16.msra.mxu0 %v3417
      %3527 = vmatprep.subr.bf16.mxu0 0
      %3528 = vmatpush1.bf16.msra.mxu0 %v3418
      %3529 = vmatprep.subr.bf16.mxu0 0
      %3530 = vmatpush1.bf16.msra.mxu0 %v3419
      %3531 = vmatprep.subr.bf16.mxu0 0
      %3532 = vmatpush1.bf16.msra.mxu0 %v3420
      %3533 = vmatprep.subr.bf16.mxu0 0
      %3534 = vmatpush1.bf16.msra.mxu0 %v3421
      %3535 = vmatprep.mubr.bf16.mxu0 %v3190
      %3536 = vmatmul.mubr.bf16.gmra.mrb[0].mxu0 %v3178
      %v3537 = vpop.f32.mrb[0].mxu0
      %v3538 = vadd.f32 %v3489, %v3537
      %v3539 = vpop.f32.mrb[0].mxu0
      %v3540 = vpop.f32.mrb[0].mxu0
      %v3541 = vadd.f32 %v3492, %v3540
      %v3542 = vpop.f32.mrb[0].mxu0
      %3543 = vmatprep.mubr.bf16.mxu0 %v3191
      %3544 = vmatmul.mubr.bf16.gmra.mrb[0].mxu0 %v3179
      %v3545 = vpop.f32.mrb[0].mxu0
      %v3546 = vadd.f32 %v3497, %v3545
      %v3547 = vpop.f32.mrb[0].mxu0
      %v3548 = vpop.f32.mrb[0].mxu0
      %v3549 = vadd.f32 %v3500, %v3548
      %v3550 = vpop.f32.mrb[0].mxu0
      %3551 = vdwg.mxu0
      %v3552 = vadd.f32 %v3258, %v3538
      %v3553 = vadd.f32 %v3259, %v3541
      %v3554 = vadd.f32 %v3260, %v3546
      %v3555 = vadd.f32 %v3261, %v3549
      %3556 = vst [vmem:[%s299] sm:$0xff] %v3552
      %3557 = vst [vmem:[%s299 + $0x8] sm:$0xff] %v3553
      %3558 = vst [vmem:[%s299 + $0x10] sm:$0xff] %v3554
      %3559 = vst [vmem:[%s299 + $0x18] sm:$0xff] %v3555
      %3560 = vset.pattern.permute.xlu0 20
      %3561 = vperm.xlu0 %3560, %v522
      %v3562 = vpop.permute.xlu0 %3561
      %v3565 = vunpack.c.l.s4 839922192
      %v3566 = vunpack.c.0.s8 %v3565
      %v3567 = vlaneseq
      %v3568 = vshrl.u32 %v3567, 7
      %v3569 = vsub.s32 %v3566, %v3568
      %v3570 = vrot.slane %v3562, %v3569
      %3571 = vset.pattern.permute.xlu0 20
      %3572 = vperm.xlu0 %3571, %v523
      %v3573 = vpop.permute.xlu0 %3572
      %v3576 = vunpack.c.l.s4 839922192
      %v3577 = vunpack.c.0.s8 %v3576
      %v3578 = vlaneseq
      %v3579 = vshrl.u32 %v3578, 7
      %v3580 = vsub.s32 %v3577, %v3579
      %v3581 = vrot.slane %v3573, %v3580
      %3582 = vset.pattern.permute.xlu0 20
      %3583 = vperm.xlu0 %3582, %v524
      %v3584 = vpop.permute.xlu0 %3583
      %v3587 = vunpack.c.l.s4 839922192
      %v3588 = vunpack.c.0.s8 %v3587
      %v3589 = vlaneseq
      %v3590 = vshrl.u32 %v3589, 7
      %v3591 = vsub.s32 %v3588, %v3590
      %v3592 = vrot.slane %v3584, %v3591
      %3593 = vset.pattern.permute.xlu0 20
      %3594 = vperm.xlu0 %3593, %v525
      %v3595 = vpop.permute.xlu0 %3594
      %v3598 = vunpack.c.l.s4 839922192
      %v3599 = vunpack.c.0.s8 %v3598
      %v3600 = vlaneseq
      %v3601 = vshrl.u32 %v3600, 7
      %v3602 = vsub.s32 %v3599, %v3601
      %v3603 = vrot.slane %v3595, %v3602
      %v3604 = vmul.bf16 %v3570, %v518
      %v3605 = vmul.bf16 %v3581, %v519
      %v3606 = vmul.bf16 %v3592, %v520
      %v3607 = vmul.bf16 %v3603, %v521
      %3608 = vset.pattern.permute.xlu0 21
      %3609 = vperm.xlu0 %3608, %v522
      %v3610 = vpop.permute.xlu0 %3609
      %v3613 = vunpack.c.l.s4 839922192
      %v3614 = vunpack.c.0.s8 %v3613
      %v3615 = vlaneseq
      %v3616 = vshrl.u32 %v3615, 7
      %v3617 = vsub.s32 %v3614, %v3616
      %v3618 = vrot.slane %v3610, %v3617
      %3619 = vset.pattern.permute.xlu0 21
      %3620 = vperm.xlu0 %3619, %v523
      %v3621 = vpop.permute.xlu0 %3620
      %v3624 = vunpack.c.l.s4 839922192
      %v3625 = vunpack.c.0.s8 %v3624
      %v3626 = vlaneseq
      %v3627 = vshrl.u32 %v3626, 7
      %v3628 = vsub.s32 %v3625, %v3627
      %v3629 = vrot.slane %v3621, %v3628
      %3630 = vset.pattern.permute.xlu0 21
      %3631 = vperm.xlu0 %3630, %v524
      %v3632 = vpop.permute.xlu0 %3631
      %v3635 = vunpack.c.l.s4 839922192
      %v3636 = vunpack.c.0.s8 %v3635
      %v3637 = vlaneseq
      %v3638 = vshrl.u32 %v3637, 7
      %v3639 = vsub.s32 %v3636, %v3638
      %v3640 = vrot.slane %v3632, %v3639
      %3641 = vset.pattern.permute.xlu0 21
      %3642 = vperm.xlu0 %3641, %v525
      %v3643 = vpop.permute.xlu0 %3642
      %v3646 = vunpack.c.l.s4 839922192
      %v3647 = vunpack.c.0.s8 %v3646
      %v3648 = vlaneseq
      %v3649 = vshrl.u32 %v3648, 7
      %v3650 = vsub.s32 %v3647, %v3649
      %v3651 = vrot.slane %v3643, %v3650
      %v3652 = vmul.bf16 %v3618, %v518
      %v3653 = vmul.bf16 %v3629, %v519
      %v3654 = vmul.bf16 %v3640, %v520
      %v3655 = vmul.bf16 %v3651, %v521
      %3656 = vset.pattern.permute.xlu0 22
      %3657 = vperm.xlu0 %3656, %v522
      %v3658 = vpop.permute.xlu0 %3657
      %v3661 = vunpack.c.l.s4 839922192
      %v3662 = vunpack.c.0.s8 %v3661
      %v3663 = vlaneseq
      %v3664 = vshrl.u32 %v3663, 7
      %v3665 = vsub.s32 %v3662, %v3664
      %v3666 = vrot.slane %v3658, %v3665
      %3667 = vset.pattern.permute.xlu0 22
      %3668 = vperm.xlu0 %3667, %v523
      %v3669 = vpop.permute.xlu0 %3668
      %v3672 = vunpack.c.l.s4 839922192
      %v3673 = vunpack.c.0.s8 %v3672
      %v3674 = vlaneseq
      %v3675 = vshrl.u32 %v3674, 7
      %v3676 = vsub.s32 %v3673, %v3675
      %v3677 = vrot.slane %v3669, %v3676
      %3678 = vset.pattern.permute.xlu0 22
      %3679 = vperm.xlu0 %3678, %v524
      %v3680 = vpop.permute.xlu0 %3679
      %v3683 = vunpack.c.l.s4 839922192
      %v3684 = vunpack.c.0.s8 %v3683
      %v3685 = vlaneseq
      %v3686 = vshrl.u32 %v3685, 7
      %v3687 = vsub.s32 %v3684, %v3686
      %v3688 = vrot.slane %v3680, %v3687
      %3689 = vset.pattern.permute.xlu0 22
      %3690 = vperm.xlu0 %3689, %v525
      %v3691 = vpop.permute.xlu0 %3690
      %v3694 = vunpack.c.l.s4 839922192
      %v3695 = vunpack.c.0.s8 %v3694
      %v3696 = vlaneseq
      %v3697 = vshrl.u32 %v3696, 7
      %v3698 = vsub.s32 %v3695, %v3697
      %v3699 = vrot.slane %v3691, %v3698
      %v3700 = vmul.bf16 %v3666, %v518
      %v3701 = vmul.bf16 %v3677, %v519
      %v3702 = vmul.bf16 %v3688, %v520
      %v3703 = vmul.bf16 %v3699, %v521
      %3704 = vset.pattern.permute.xlu0 23
      %3705 = vperm.xlu0 %3704, %v522
      %v3706 = vpop.permute.xlu0 %3705
      %v3709 = vunpack.c.l.s4 839922192
      %v3710 = vunpack.c.0.s8 %v3709
      %v3711 = vlaneseq
      %v3712 = vshrl.u32 %v3711, 7
      %v3713 = vsub.s32 %v3710, %v3712
      %v3714 = vrot.slane %v3706, %v3713
      %3715 = vset.pattern.permute.xlu0 23
      %3716 = vperm.xlu0 %3715, %v523
      %v3717 = vpop.permute.xlu0 %3716
      %v3720 = vunpack.c.l.s4 839922192
      %v3721 = vunpack.c.0.s8 %v3720
      %v3722 = vlaneseq
      %v3723 = vshrl.u32 %v3722, 7
      %v3724 = vsub.s32 %v3721, %v3723
      %v3725 = vrot.slane %v3717, %v3724
      %3726 = vset.pattern.permute.xlu0 23
      %3727 = vperm.xlu0 %3726, %v524
      %v3728 = vpop.permute.xlu0 %3727
      %v3731 = vunpack.c.l.s4 839922192
      %v3732 = vunpack.c.0.s8 %v3731
      %v3733 = vlaneseq
      %v3734 = vshrl.u32 %v3733, 7
      %v3735 = vsub.s32 %v3732, %v3734
      %v3736 = vrot.slane %v3728, %v3735
      %3737 = vset.pattern.permute.xlu0 23
      %3738 = vperm.xlu0 %3737, %v525
      %v3739 = vpop.permute.xlu0 %3738
      %v3742 = vunpack.c.l.s4 839922192
      %v3743 = vunpack.c.0.s8 %v3742
      %v3744 = vlaneseq
      %v3745 = vshrl.u32 %v3744, 7
      %v3746 = vsub.s32 %v3743, %v3745
      %v3747 = vrot.slane %v3739, %v3746
      %v3748 = vmul.bf16 %v3714, %v518
      %v3749 = vmul.bf16 %v3725, %v519
      %v3750 = vmul.bf16 %v3736, %v520
      %v3751 = vmul.bf16 %v3747, %v521
      %v3756 = vunpack.c.l.b16 %v3604
      %v3757 = vunpack.c.l.b16 %v3605
      %v3758 = vunpack.c.l.b16 %v3606
      %v3759 = vunpack.c.l.b16 %v3607
      %v3760 = vpack.c.b16 %v3757, %v3756
      %v3761 = vpack.c.b16 %v3759, %v3758
      %v3768 = vunpack.c.l.b16 %v3652
      %v3769 = vunpack.c.l.b16 %v3653
      %v3770 = vunpack.c.l.b16 %v3654
      %v3771 = vunpack.c.l.b16 %v3655
      %v3772 = vpack.c.b16 %v3769, %v3768
      %v3773 = vpack.c.b16 %v3771, %v3770
      %v3780 = vunpack.c.l.b16 %v3700
      %v3781 = vunpack.c.l.b16 %v3701
      %v3782 = vunpack.c.l.b16 %v3702
      %v3783 = vunpack.c.l.b16 %v3703
      %v3784 = vpack.c.b16 %v3781, %v3780
      %v3785 = vpack.c.b16 %v3783, %v3782
      %v3792 = vunpack.c.l.b16 %v3748
      %v3793 = vunpack.c.l.b16 %v3749
      %v3794 = vunpack.c.l.b16 %v3750
      %v3795 = vunpack.c.l.b16 %v3751
      %v3796 = vpack.c.b16 %v3793, %v3792
      %v3797 = vpack.c.b16 %v3795, %v3794
      %v3800 = vld [vmem:[%s293 + $0x500] sm:$0xf]
      %v3801 = vld [vmem:[%s293 + $0x504] sm:$0xf]
      %v3802 = vld [vmem:[%s293 + $0x508] sm:$0xf]
      %v3803 = vld [vmem:[%s293 + $0x50c] sm:$0xf]
      %v3804 = vld [vmem:[%s293 + $0x510] sm:$0xf]
      %v3805 = vld [vmem:[%s293 + $0x514] sm:$0xf]
      %v3806 = vld [vmem:[%s293 + $0x518] sm:$0xf]
      %v3807 = vld [vmem:[%s293 + $0x51c] sm:$0xf]
      %v3808 = vld [vmem:[%s293 + $0x520] sm:$0xf]
      %v3809 = vld [vmem:[%s293 + $0x524] sm:$0xf]
      %v3810 = vld [vmem:[%s293 + $0x528] sm:$0xf]
      %v3811 = vld [vmem:[%s293 + $0x52c] sm:$0xf]
      %v3812 = vld [vmem:[%s293 + $0x530] sm:$0xf]
      %v3813 = vld [vmem:[%s293 + $0x534] sm:$0xf]
      %v3814 = vld [vmem:[%s293 + $0x538] sm:$0xf]
      %v3815 = vld [vmem:[%s293 + $0x53c] sm:$0xf]
      %v3816 = vld [vmem:[%s293 + $0x540] sm:$0xf]
      %v3817 = vld [vmem:[%s293 + $0x544] sm:$0xf]
      %v3818 = vld [vmem:[%s293 + $0x548] sm:$0xf]
      %v3819 = vld [vmem:[%s293 + $0x54c] sm:$0xf]
      %v3820 = vld [vmem:[%s293 + $0x550] sm:$0xf]
      %v3821 = vld [vmem:[%s293 + $0x554] sm:$0xf]
      %v3822 = vld [vmem:[%s293 + $0x558] sm:$0xf]
      %v3823 = vld [vmem:[%s293 + $0x55c] sm:$0xf]
      %v3824 = vld [vmem:[%s293 + $0x560] sm:$0xf]
      %v3825 = vld [vmem:[%s293 + $0x564] sm:$0xf]
      %v3826 = vld [vmem:[%s293 + $0x568] sm:$0xf]
      %v3827 = vld [vmem:[%s293 + $0x56c] sm:$0xf]
      %v3828 = vld [vmem:[%s293 + $0x570] sm:$0xf]
      %v3829 = vld [vmem:[%s293 + $0x574] sm:$0xf]
      %v3830 = vld [vmem:[%s293 + $0x578] sm:$0xf]
      %v3831 = vld [vmem:[%s293 + $0x57c] sm:$0xf]
      %v3832 = vld [vmem:[%s293 + $0x580] sm:$0xf]
      %v3833 = vld [vmem:[%s293 + $0x584] sm:$0xf]
      %v3834 = vld [vmem:[%s293 + $0x588] sm:$0xf]
      %v3835 = vld [vmem:[%s293 + $0x58c] sm:$0xf]
      %v3836 = vld [vmem:[%s293 + $0x590] sm:$0xf]
      %v3837 = vld [vmem:[%s293 + $0x594] sm:$0xf]
      %v3838 = vld [vmem:[%s293 + $0x598] sm:$0xf]
      %v3839 = vld [vmem:[%s293 + $0x59c] sm:$0xf]
      %v3840 = vld [vmem:[%s293 + $0x5a0] sm:$0xf]
      %v3841 = vld [vmem:[%s293 + $0x5a4] sm:$0xf]
      %v3842 = vld [vmem:[%s293 + $0x5a8] sm:$0xf]
      %v3843 = vld [vmem:[%s293 + $0x5ac] sm:$0xf]
      %v3844 = vld [vmem:[%s293 + $0x5b0] sm:$0xf]
      %v3845 = vld [vmem:[%s293 + $0x5b4] sm:$0xf]
      %v3846 = vld [vmem:[%s293 + $0x5b8] sm:$0xf]
      %v3847 = vld [vmem:[%s293 + $0x5bc] sm:$0xf]
      %v3848 = vld [vmem:[%s293 + $0x5c0] sm:$0xf]
      %v3849 = vld [vmem:[%s293 + $0x5c4] sm:$0xf]
      %v3850 = vld [vmem:[%s293 + $0x5c8] sm:$0xf]
      %v3851 = vld [vmem:[%s293 + $0x5cc] sm:$0xf]
      %v3852 = vld [vmem:[%s293 + $0x5d0] sm:$0xf]
      %v3853 = vld [vmem:[%s293 + $0x5d4] sm:$0xf]
      %v3854 = vld [vmem:[%s293 + $0x5d8] sm:$0xf]
      %v3855 = vld [vmem:[%s293 + $0x5dc] sm:$0xf]
      %v3856 = vld [vmem:[%s293 + $0x5e0] sm:$0xf]
      %v3857 = vld [vmem:[%s293 + $0x5e4] sm:$0xf]
      %v3858 = vld [vmem:[%s293 + $0x5e8] sm:$0xf]
      %v3859 = vld [vmem:[%s293 + $0x5ec] sm:$0xf]
      %v3860 = vld [vmem:[%s293 + $0x5f0] sm:$0xf]
      %v3861 = vld [vmem:[%s293 + $0x5f4] sm:$0xf]
      %v3862 = vld [vmem:[%s293 + $0x5f8] sm:$0xf]
      %v3863 = vld [vmem:[%s293 + $0x5fc] sm:$0xf]
      %v3864 = vld [vmem:[%s299] sm:$0xff]
      %v3865 = vld [vmem:[%s299 + $0x8] sm:$0xff]
      %v3866 = vld [vmem:[%s299 + $0x10] sm:$0xff]
      %v3867 = vld [vmem:[%s299 + $0x18] sm:$0xff]
      %v3932 = vunpack.c.l.b16 %v3800
      %v3933 = vunpack.c.l.b16 %v3801
      %v3934 = vunpack.c.l.b16 %v3802
      %v3935 = vunpack.c.l.b16 %v3803
      %v3936 = vunpack.c.l.b16 %v3804
      %v3937 = vunpack.c.l.b16 %v3805
      %v3938 = vunpack.c.l.b16 %v3806
      %v3939 = vunpack.c.l.b16 %v3807
      %v3940 = vunpack.c.l.b16 %v3808
      %v3941 = vunpack.c.l.b16 %v3809
      %v3942 = vunpack.c.l.b16 %v3810
      %v3943 = vunpack.c.l.b16 %v3811
      %v3944 = vunpack.c.l.b16 %v3812
      %v3945 = vunpack.c.l.b16 %v3813
      %v3946 = vunpack.c.l.b16 %v3814
      %v3947 = vunpack.c.l.b16 %v3815
      %v3948 = vunpack.c.l.b16 %v3816
      %v3949 = vunpack.c.l.b16 %v3817
      %v3950 = vunpack.c.l.b16 %v3818
      %v3951 = vunpack.c.l.b16 %v3819
      %v3952 = vunpack.c.l.b16 %v3820
      %v3953 = vunpack.c.l.b16 %v3821
      %v3954 = vunpack.c.l.b16 %v3822
      %v3955 = vunpack.c.l.b16 %v3823
      %v3956 = vunpack.c.l.b16 %v3824
      %v3957 = vunpack.c.l.b16 %v3825
      %v3958 = vunpack.c.l.b16 %v3826
      %v3959 = vunpack.c.l.b16 %v3827
      %v3960 = vunpack.c.l.b16 %v3828
      %v3961 = vunpack.c.l.b16 %v3829
      %v3962 = vunpack.c.l.b16 %v3830
      %v3963 = vunpack.c.l.b16 %v3831
      %v3964 = vunpack.c.l.b16 %v3832
      %v3965 = vunpack.c.l.b16 %v3833
      %v3966 = vunpack.c.l.b16 %v3834
      %v3967 = vunpack.c.l.b16 %v3835
      %v3968 = vunpack.c.l.b16 %v3836
      %v3969 = vunpack.c.l.b16 %v3837
      %v3970 = vunpack.c.l.b16 %v3838
      %v3971 = vunpack.c.l.b16 %v3839
      %v3972 = vunpack.c.l.b16 %v3840
      %v3973 = vunpack.c.l.b16 %v3841
      %v3974 = vunpack.c.l.b16 %v3842
      %v3975 = vunpack.c.l.b16 %v3843
      %v3976 = vunpack.c.l.b16 %v3844
      %v3977 = vunpack.c.l.b16 %v3845
      %v3978 = vunpack.c.l.b16 %v3846
      %v3979 = vunpack.c.l.b16 %v3847
      %v3980 = vunpack.c.l.b16 %v3848
      %v3981 = vunpack.c.l.b16 %v3849
      %v3982 = vunpack.c.l.b16 %v3850
      %v3983 = vunpack.c.l.b16 %v3851
      %v3984 = vunpack.c.l.b16 %v3852
      %v3985 = vunpack.c.l.b16 %v3853
      %v3986 = vunpack.c.l.b16 %v3854
      %v3987 = vunpack.c.l.b16 %v3855
      %v3988 = vunpack.c.l.b16 %v3856
      %v3989 = vunpack.c.l.b16 %v3857
      %v3990 = vunpack.c.l.b16 %v3858
      %v3991 = vunpack.c.l.b16 %v3859
      %v3992 = vunpack.c.l.b16 %v3860
      %v3993 = vunpack.c.l.b16 %v3861
      %v3994 = vunpack.c.l.b16 %v3862
      %v3995 = vunpack.c.l.b16 %v3863
      %v3996 = vpack.c.b16 %v3933, %v3932
      %v3997 = vpack.c.b16 %v3935, %v3934
      %v3998 = vpack.c.b16 %v3937, %v3936
      %v3999 = vpack.c.b16 %v3939, %v3938
      %v4000 = vpack.c.b16 %v3941, %v3940
      %v4001 = vpack.c.b16 %v3943, %v3942
      %v4002 = vpack.c.b16 %v3945, %v3944
      %v4003 = vpack.c.b16 %v3947, %v3946
      %v4004 = vpack.c.b16 %v3949, %v3948
      %v4005 = vpack.c.b16 %v3951, %v3950
      %v4006 = vpack.c.b16 %v3953, %v3952
      %v4007 = vpack.c.b16 %v3955, %v3954
      %v4008 = vpack.c.b16 %v3957, %v3956
      %v4009 = vpack.c.b16 %v3959, %v3958
      %v4010 = vpack.c.b16 %v3961, %v3960
      %v4011 = vpack.c.b16 %v3963, %v3962
      %v4012 = vpack.c.b16 %v3965, %v3964
      %v4013 = vpack.c.b16 %v3967, %v3966
      %v4014 = vpack.c.b16 %v3969, %v3968
      %v4015 = vpack.c.b16 %v3971, %v3970
      %v4016 = vpack.c.b16 %v3973, %v3972
      %v4017 = vpack.c.b16 %v3975, %v3974
      %v4018 = vpack.c.b16 %v3977, %v3976
      %v4019 = vpack.c.b16 %v3979, %v3978
      %v4020 = vpack.c.b16 %v3981, %v3980
      %v4021 = vpack.c.b16 %v3983, %v3982
      %v4022 = vpack.c.b16 %v3985, %v3984
      %v4023 = vpack.c.b16 %v3987, %v3986
      %v4024 = vpack.c.b16 %v3989, %v3988
      %v4025 = vpack.c.b16 %v3991, %v3990
      %v4026 = vpack.c.b16 %v3993, %v3992
      %v4027 = vpack.c.b16 %v3995, %v3994
      %4060 = vmatprep.subr.bf16.mxu0 0
      %4061 = vmatpush1.bf16.msra.mxu0 %v3996
      %4062 = vmatprep.subr.bf16.mxu0 0
      %4063 = vmatpush1.bf16.msra.mxu0 %v3997
      %4064 = vmatprep.subr.bf16.mxu0 0
      %4065 = vmatpush1.bf16.msra.mxu0 %v3998
      %4066 = vmatprep.subr.bf16.mxu0 0
      %4067 = vmatpush1.bf16.msra.mxu0 %v3999
      %4068 = vmatprep.subr.bf16.mxu0 0
      %4069 = vmatpush1.bf16.msra.mxu0 %v4000
      %4070 = vmatprep.subr.bf16.mxu0 0
      %4071 = vmatpush1.bf16.msra.mxu0 %v4001
      %4072 = vmatprep.subr.bf16.mxu0 0
      %4073 = vmatpush1.bf16.msra.mxu0 %v4002
      %4074 = vmatprep.subr.bf16.mxu0 0
      %4075 = vmatpush1.bf16.msra.mxu0 %v4003
      %4076 = vmatprep.subr.bf16.mxu0 0
      %4077 = vmatpush1.bf16.msra.mxu0 %v4004
      %4078 = vmatprep.subr.bf16.mxu0 0
      %4079 = vmatpush1.bf16.msra.mxu0 %v4005
      %4080 = vmatprep.subr.bf16.mxu0 0
      %4081 = vmatpush1.bf16.msra.mxu0 %v4006
      %4082 = vmatprep.subr.bf16.mxu0 0
      %4083 = vmatpush1.bf16.msra.mxu0 %v4007
      %4084 = vmatprep.subr.bf16.mxu0 0
      %4085 = vmatpush1.bf16.msra.mxu0 %v4008
      %4086 = vmatprep.subr.bf16.mxu0 0
      %4087 = vmatpush1.bf16.msra.mxu0 %v4009
      %4088 = vmatprep.subr.bf16.mxu0 0
      %4089 = vmatpush1.bf16.msra.mxu0 %v4010
      %4090 = vmatprep.subr.bf16.mxu0 0
      %4091 = vmatpush1.bf16.msra.mxu0 %v4011
      %4092 = vmatprep.mubr.bf16.mxu0 %v3772
      %4093 = vmatmul.mubr.bf16.gmra.mrb[0].mxu0 %v3760
      %v4094 = vpop.f32.mrb[0].mxu0
      %v4095 = vadd.f32 0.0, %v4094
      %v4096 = vpop.f32.mrb[0].mxu0
      %v4097 = vpop.f32.mrb[0].mxu0
      %v4098 = vadd.f32 0.0, %v4097
      %v4099 = vpop.f32.mrb[0].mxu0
      %4100 = vmatprep.mubr.bf16.mxu0 %v3773
      %4101 = vmatmul.mubr.bf16.gmra.mrb[0].mxu0 %v3761
      %v4102 = vpop.f32.mrb[0].mxu0
      %v4103 = vadd.f32 0.0, %v4102
      %v4104 = vpop.f32.mrb[0].mxu0
      %v4105 = vpop.f32.mrb[0].mxu0
      %v4106 = vadd.f32 0.0, %v4105
      %v4107 = vpop.f32.mrb[0].mxu0
      %4108 = vdwg.mxu0
      %4109 = vmatprep.subr.bf16.mxu0 0
      %4110 = vmatpush1.bf16.msra.mxu0 %v4012
      %4111 = vmatprep.subr.bf16.mxu0 0
      %4112 = vmatpush1.bf16.msra.mxu0 %v4013
      %4113 = vmatprep.subr.bf16.mxu0 0
      %4114 = vmatpush1.bf16.msra.mxu0 %v4014
      %4115 = vmatprep.subr.bf16.mxu0 0
      %4116 = vmatpush1.bf16.msra.mxu0 %v4015
      %4117 = vmatprep.subr.bf16.mxu0 0
      %4118 = vmatpush1.bf16.msra.mxu0 %v4016
      %4119 = vmatprep.subr.bf16.mxu0 0
      %4120 = vmatpush1.bf16.msra.mxu0 %v4017
      %4121 = vmatprep.subr.bf16.mxu0 0
      %4122 = vmatpush1.bf16.msra.mxu0 %v4018
      %4123 = vmatprep.subr.bf16.mxu0 0
      %4124 = vmatpush1.bf16.msra.mxu0 %v4019
      %4125 = vmatprep.subr.bf16.mxu0 0
      %4126 = vmatpush1.bf16.msra.mxu0 %v4020
      %4127 = vmatprep.subr.bf16.mxu0 0
      %4128 = vmatpush1.bf16.msra.mxu0 %v4021
      %4129 = vmatprep.subr.bf16.mxu0 0
      %4130 = vmatpush1.bf16.msra.mxu0 %v4022
      %4131 = vmatprep.subr.bf16.mxu0 0
      %4132 = vmatpush1.bf16.msra.mxu0 %v4023
      %4133 = vmatprep.subr.bf16.mxu0 0
      %4134 = vmatpush1.bf16.msra.mxu0 %v4024
      %4135 = vmatprep.subr.bf16.mxu0 0
      %4136 = vmatpush1.bf16.msra.mxu0 %v4025
      %4137 = vmatprep.subr.bf16.mxu0 0
      %4138 = vmatpush1.bf16.msra.mxu0 %v4026
      %4139 = vmatprep.subr.bf16.mxu0 0
      %4140 = vmatpush1.bf16.msra.mxu0 %v4027
      %4141 = vmatprep.mubr.bf16.mxu0 %v3796
      %4142 = vmatmul.mubr.bf16.gmra.mrb[0].mxu0 %v3784
      %v4143 = vpop.f32.mrb[0].mxu0
      %v4144 = vadd.f32 %v4095, %v4143
      %v4145 = vpop.f32.mrb[0].mxu0
      %v4146 = vpop.f32.mrb[0].mxu0
      %v4147 = vadd.f32 %v4098, %v4146
      %v4148 = vpop.f32.mrb[0].mxu0
      %4149 = vmatprep.mubr.bf16.mxu0 %v3797
      %4150 = vmatmul.mubr.bf16.gmra.mrb[0].mxu0 %v3785
      %v4151 = vpop.f32.mrb[0].mxu0
      %v4152 = vadd.f32 %v4103, %v4151
      %v4153 = vpop.f32.mrb[0].mxu0
      %v4154 = vpop.f32.mrb[0].mxu0
      %v4155 = vadd.f32 %v4106, %v4154
      %v4156 = vpop.f32.mrb[0].mxu0
      %4157 = vdwg.mxu0
      %v4158 = vadd.f32 %v3864, %v4144
      %v4159 = vadd.f32 %v3865, %v4147
      %v4160 = vadd.f32 %v3866, %v4152
      %v4161 = vadd.f32 %v3867, %v4155
      %4162 = vst [vmem:[%s299] sm:$0xff] %v4158
      %4163 = vst [vmem:[%s299 + $0x8] sm:$0xff] %v4159
      %4164 = vst [vmem:[%s299 + $0x10] sm:$0xff] %v4160
      %4165 = vst [vmem:[%s299 + $0x18] sm:$0xff] %v4161
      %4166 = vset.pattern.permute.xlu0 24
      %4167 = vperm.xlu0 %4166, %v522
      %v4168 = vpop.permute.xlu0 %4167
      %v4171 = vunpack.c.l.s4 839922192
      %v4172 = vunpack.c.0.s8 %v4171
      %v4173 = vlaneseq
      %v4174 = vshrl.u32 %v4173, 7
      %v4175 = vsub.s32 %v4172, %v4174
      %v4176 = vrot.slane %v4168, %v4175
      %4177 = vset.pattern.permute.xlu0 24
      %4178 = vperm.xlu0 %4177, %v523
      %v4179 = vpop.permute.xlu0 %4178
      %v4182 = vunpack.c.l.s4 839922192
      %v4183 = vunpack.c.0.s8 %v4182
      %v4184 = vlaneseq
      %v4185 = vshrl.u32 %v4184, 7
      %v4186 = vsub.s32 %v4183, %v4185
      %v4187 = vrot.slane %v4179, %v4186
      %4188 = vset.pattern.permute.xlu0 24
      %4189 = vperm.xlu0 %4188, %v524
      %v4190 = vpop.permute.xlu0 %4189
      %v4193 = vunpack.c.l.s4 839922192
      %v4194 = vunpack.c.0.s8 %v4193
      %v4195 = vlaneseq
      %v4196 = vshrl.u32 %v4195, 7
      %v4197 = vsub.s32 %v4194, %v4196
      %v4198 = vrot.slane %v4190, %v4197
      %4199 = vset.pattern.permute.xlu0 24
      %4200 = vperm.xlu0 %4199, %v525
      %v4201 = vpop.permute.xlu0 %4200
      %v4204 = vunpack.c.l.s4 839922192
      %v4205 = vunpack.c.0.s8 %v4204
      %v4206 = vlaneseq
      %v4207 = vshrl.u32 %v4206, 7
      %v4208 = vsub.s32 %v4205, %v4207
      %v4209 = vrot.slane %v4201, %v4208
      %v4210 = vmul.bf16 %v4176, %v518
      %v4211 = vmul.bf16 %v4187, %v519
      %v4212 = vmul.bf16 %v4198, %v520
      %v4213 = vmul.bf16 %v4209, %v521
      %4214 = vset.pattern.permute.xlu0 25
      %4215 = vperm.xlu0 %4214, %v522
      %v4216 = vpop.permute.xlu0 %4215
      %v4219 = vunpack.c.l.s4 839922192
      %v4220 = vunpack.c.0.s8 %v4219
      %v4221 = vlaneseq
      %v4222 = vshrl.u32 %v4221, 7
      %v4223 = vsub.s32 %v4220, %v4222
      %v4224 = vrot.slane %v4216, %v4223
      %4225 = vset.pattern.permute.xlu0 25
      %4226 = vperm.xlu0 %4225, %v523
      %v4227 = vpop.permute.xlu0 %4226
      %v4230 = vunpack.c.l.s4 839922192
      %v4231 = vunpack.c.0.s8 %v4230
      %v4232 = vlaneseq
      %v4233 = vshrl.u32 %v4232, 7
      %v4234 = vsub.s32 %v4231, %v4233
      %v4235 = vrot.slane %v4227, %v4234
      %4236 = vset.pattern.permute.xlu0 25
      %4237 = vperm.xlu0 %4236, %v524
      %v4238 = vpop.permute.xlu0 %4237
      %v4241 = vunpack.c.l.s4 839922192
      %v4242 = vunpack.c.0.s8 %v4241
      %v4243 = vlaneseq
      %v4244 = vshrl.u32 %v4243, 7
      %v4245 = vsub.s32 %v4242, %v4244
      %v4246 = vrot.slane %v4238, %v4245
      %4247 = vset.pattern.permute.xlu0 25
      %4248 = vperm.xlu0 %4247, %v525
      %v4249 = vpop.permute.xlu0 %4248
      %v4252 = vunpack.c.l.s4 839922192
      %v4253 = vunpack.c.0.s8 %v4252
      %v4254 = vlaneseq
      %v4255 = vshrl.u32 %v4254, 7
      %v4256 = vsub.s32 %v4253, %v4255
      %v4257 = vrot.slane %v4249, %v4256
      %v4258 = vmul.bf16 %v4224, %v518
      %v4259 = vmul.bf16 %v4235, %v519
      %v4260 = vmul.bf16 %v4246, %v520
      %v4261 = vmul.bf16 %v4257, %v521
      %4262 = vset.pattern.permute.xlu0 26
      %4263 = vperm.xlu0 %4262, %v522
      %v4264 = vpop.permute.xlu0 %4263
      %v4267 = vunpack.c.l.s4 839922192
      %v4268 = vunpack.c.0.s8 %v4267
      %v4269 = vlaneseq
      %v4270 = vshrl.u32 %v4269, 7
      %v4271 = vsub.s32 %v4268, %v4270
      %v4272 = vrot.slane %v4264, %v4271
      %4273 = vset.pattern.permute.xlu0 26
      %4274 = vperm.xlu0 %4273, %v523
      %v4275 = vpop.permute.xlu0 %4274
      %v4278 = vunpack.c.l.s4 839922192
      %v4279 = vunpack.c.0.s8 %v4278
      %v4280 = vlaneseq
      %v4281 = vshrl.u32 %v4280, 7
      %v4282 = vsub.s32 %v4279, %v4281
      %v4283 = vrot.slane %v4275, %v4282
      %4284 = vset.pattern.permute.xlu0 26
      %4285 = vperm.xlu0 %4284, %v524
      %v4286 = vpop.permute.xlu0 %4285
      %v4289 = vunpack.c.l.s4 839922192
      %v4290 = vunpack.c.0.s8 %v4289
      %v4291 = vlaneseq
      %v4292 = vshrl.u32 %v4291, 7
      %v4293 = vsub.s32 %v4290, %v4292
      %v4294 = vrot.slane %v4286, %v4293
      %4295 = vset.pattern.permute.xlu0 26
      %4296 = vperm.xlu0 %4295, %v525
      %v4297 = vpop.permute.xlu0 %4296
      %v4300 = vunpack.c.l.s4 839922192
      %v4301 = vunpack.c.0.s8 %v4300
      %v4302 = vlaneseq
      %v4303 = vshrl.u32 %v4302, 7
      %v4304 = vsub.s32 %v4301, %v4303
      %v4305 = vrot.slane %v4297, %v4304
      %v4306 = vmul.bf16 %v4272, %v518
      %v4307 = vmul.bf16 %v4283, %v519
      %v4308 = vmul.bf16 %v4294, %v520
      %v4309 = vmul.bf16 %v4305, %v521
      %4310 = vset.pattern.permute.xlu0 27
      %4311 = vperm.xlu0 %4310, %v522
      %v4312 = vpop.permute.xlu0 %4311
      %v4315 = vunpack.c.l.s4 839922192
      %v4316 = vunpack.c.0.s8 %v4315
      %v4317 = vlaneseq
      %v4318 = vshrl.u32 %v4317, 7
      %v4319 = vsub.s32 %v4316, %v4318
      %v4320 = vrot.slane %v4312, %v4319
      %4321 = vset.pattern.permute.xlu0 27
      %4322 = vperm.xlu0 %4321, %v523
      %v4323 = vpop.permute.xlu0 %4322
      %v4326 = vunpack.c.l.s4 839922192
      %v4327 = vunpack.c.0.s8 %v4326
      %v4328 = vlaneseq
      %v4329 = vshrl.u32 %v4328, 7
      %v4330 = vsub.s32 %v4327, %v4329
      %v4331 = vrot.slane %v4323, %v4330
      %4332 = vset.pattern.permute.xlu0 27
      %4333 = vperm.xlu0 %4332, %v524
      %v4334 = vpop.permute.xlu0 %4333
      %v4337 = vunpack.c.l.s4 839922192
      %v4338 = vunpack.c.0.s8 %v4337
      %v4339 = vlaneseq
      %v4340 = vshrl.u32 %v4339, 7
      %v4341 = vsub.s32 %v4338, %v4340
      %v4342 = vrot.slane %v4334, %v4341
      %4343 = vset.pattern.permute.xlu0 27
      %4344 = vperm.xlu0 %4343, %v525
      %v4345 = vpop.permute.xlu0 %4344
      %v4348 = vunpack.c.l.s4 839922192
      %v4349 = vunpack.c.0.s8 %v4348
      %v4350 = vlaneseq
      %v4351 = vshrl.u32 %v4350, 7
      %v4352 = vsub.s32 %v4349, %v4351
      %v4353 = vrot.slane %v4345, %v4352
      %v4354 = vmul.bf16 %v4320, %v518
      %v4355 = vmul.bf16 %v4331, %v519
      %v4356 = vmul.bf16 %v4342, %v520
      %v4357 = vmul.bf16 %v4353, %v521
      %v4362 = vunpack.c.l.b16 %v4210
      %v4363 = vunpack.c.l.b16 %v4211
      %v4364 = vunpack.c.l.b16 %v4212
      %v4365 = vunpack.c.l.b16 %v4213
      %v4366 = vpack.c.b16 %v4363, %v4362
      %v4367 = vpack.c.b16 %v4365, %v4364
      %v4374 = vunpack.c.l.b16 %v4258
      %v4375 = vunpack.c.l.b16 %v4259
      %v4376 = vunpack.c.l.b16 %v4260
      %v4377 = vunpack.c.l.b16 %v4261
      %v4378 = vpack.c.b16 %v4375, %v4374
      %v4379 = vpack.c.b16 %v4377, %v4376
      %v4386 = vunpack.c.l.b16 %v4306
      %v4387 = vunpack.c.l.b16 %v4307
      %v4388 = vunpack.c.l.b16 %v4308
      %v4389 = vunpack.c.l.b16 %v4309
      %v4390 = vpack.c.b16 %v4387, %v4386
      %v4391 = vpack.c.b16 %v4389, %v4388
      %v4398 = vunpack.c.l.b16 %v4354
      %v4399 = vunpack.c.l.b16 %v4355
      %v4400 = vunpack.c.l.b16 %v4356
      %v4401 = vunpack.c.l.b16 %v4357
      %v4402 = vpack.c.b16 %v4399, %v4398
      %v4403 = vpack.c.b16 %v4401, %v4400
      %v4406 = vld [vmem:[%s293 + $0x600] sm:$0xf]
      %v4407 = vld [vmem:[%s293 + $0x604] sm:$0xf]
      %v4408 = vld [vmem:[%s293 + $0x608] sm:$0xf]
      %v4409 = vld [vmem:[%s293 + $0x60c] sm:$0xf]
      %v4410 = vld [vmem:[%s293 + $0x610] sm:$0xf]
      %v4411 = vld [vmem:[%s293 + $0x614] sm:$0xf]
      %v4412 = vld [vmem:[%s293 + $0x618] sm:$0xf]
      %v4413 = vld [vmem:[%s293 + $0x61c] sm:$0xf]
      %v4414 = vld [vmem:[%s293 + $0x620] sm:$0xf]
      %v4415 = vld [vmem:[%s293 + $0x624] sm:$0xf]
      %v4416 = vld [vmem:[%s293 + $0x628] sm:$0xf]
      %v4417 = vld [vmem:[%s293 + $0x62c] sm:$0xf]
      %v4418 = vld [vmem:[%s293 + $0x630] sm:$0xf]
      %v4419 = vld [vmem:[%s293 + $0x634] sm:$0xf]
      %v4420 = vld [vmem:[%s293 + $0x638] sm:$0xf]
      %v4421 = vld [vmem:[%s293 + $0x63c] sm:$0xf]
      %v4422 = vld [vmem:[%s293 + $0x640] sm:$0xf]
      %v4423 = vld [vmem:[%s293 + $0x644] sm:$0xf]
      %v4424 = vld [vmem:[%s293 + $0x648] sm:$0xf]
      %v4425 = vld [vmem:[%s293 + $0x64c] sm:$0xf]
      %v4426 = vld [vmem:[%s293 + $0x650] sm:$0xf]
      %v4427 = vld [vmem:[%s293 + $0x654] sm:$0xf]
      %v4428 = vld [vmem:[%s293 + $0x658] sm:$0xf]
      %v4429 = vld [vmem:[%s293 + $0x65c] sm:$0xf]
      %v4430 = vld [vmem:[%s293 + $0x660] sm:$0xf]
      %v4431 = vld [vmem:[%s293 + $0x664] sm:$0xf]
      %v4432 = vld [vmem:[%s293 + $0x668] sm:$0xf]
      %v4433 = vld [vmem:[%s293 + $0x66c] sm:$0xf]
      %v4434 = vld [vmem:[%s293 + $0x670] sm:$0xf]
      %v4435 = vld [vmem:[%s293 + $0x674] sm:$0xf]
      %v4436 = vld [vmem:[%s293 + $0x678] sm:$0xf]
      %v4437 = vld [vmem:[%s293 + $0x67c] sm:$0xf]
      %v4438 = vld [vmem:[%s293 + $0x680] sm:$0xf]
      %v4439 = vld [vmem:[%s293 + $0x684] sm:$0xf]
      %v4440 = vld [vmem:[%s293 + $0x688] sm:$0xf]
      %v4441 = vld [vmem:[%s293 + $0x68c] sm:$0xf]
      %v4442 = vld [vmem:[%s293 + $0x690] sm:$0xf]
      %v4443 = vld [vmem:[%s293 + $0x694] sm:$0xf]
      %v4444 = vld [vmem:[%s293 + $0x698] sm:$0xf]
      %v4445 = vld [vmem:[%s293 + $0x69c] sm:$0xf]
      %v4446 = vld [vmem:[%s293 + $0x6a0] sm:$0xf]
      %v4447 = vld [vmem:[%s293 + $0x6a4] sm:$0xf]
      %v4448 = vld [vmem:[%s293 + $0x6a8] sm:$0xf]
      %v4449 = vld [vmem:[%s293 + $0x6ac] sm:$0xf]
      %v4450 = vld [vmem:[%s293 + $0x6b0] sm:$0xf]
      %v4451 = vld [vmem:[%s293 + $0x6b4] sm:$0xf]
      %v4452 = vld [vmem:[%s293 + $0x6b8] sm:$0xf]
      %v4453 = vld [vmem:[%s293 + $0x6bc] sm:$0xf]
      %v4454 = vld [vmem:[%s293 + $0x6c0] sm:$0xf]
      %v4455 = vld [vmem:[%s293 + $0x6c4] sm:$0xf]
      %v4456 = vld [vmem:[%s293 + $0x6c8] sm:$0xf]
      %v4457 = vld [vmem:[%s293 + $0x6cc] sm:$0xf]
      %v4458 = vld [vmem:[%s293 + $0x6d0] sm:$0xf]
      %v4459 = vld [vmem:[%s293 + $0x6d4] sm:$0xf]
      %v4460 = vld [vmem:[%s293 + $0x6d8] sm:$0xf]
      %v4461 = vld [vmem:[%s293 + $0x6dc] sm:$0xf]
      %v4462 = vld [vmem:[%s293 + $0x6e0] sm:$0xf]
      %v4463 = vld [vmem:[%s293 + $0x6e4] sm:$0xf]
      %v4464 = vld [vmem:[%s293 + $0x6e8] sm:$0xf]
      %v4465 = vld [vmem:[%s293 + $0x6ec] sm:$0xf]
      %v4466 = vld [vmem:[%s293 + $0x6f0] sm:$0xf]
      %v4467 = vld [vmem:[%s293 + $0x6f4] sm:$0xf]
      %v4468 = vld [vmem:[%s293 + $0x6f8] sm:$0xf]
      %v4469 = vld [vmem:[%s293 + $0x6fc] sm:$0xf]
      %v4470 = vld [vmem:[%s299] sm:$0xff]
      %v4471 = vld [vmem:[%s299 + $0x8] sm:$0xff]
      %v4472 = vld [vmem:[%s299 + $0x10] sm:$0xff]
      %v4473 = vld [vmem:[%s299 + $0x18] sm:$0xff]
      %v4538 = vunpack.c.l.b16 %v4406
      %v4539 = vunpack.c.l.b16 %v4407
      %v4540 = vunpack.c.l.b16 %v4408
      %v4541 = vunpack.c.l.b16 %v4409
      %v4542 = vunpack.c.l.b16 %v4410
      %v4543 = vunpack.c.l.b16 %v4411
      %v4544 = vunpack.c.l.b16 %v4412
      %v4545 = vunpack.c.l.b16 %v4413
      %v4546 = vunpack.c.l.b16 %v4414
      %v4547 = vunpack.c.l.b16 %v4415
      %v4548 = vunpack.c.l.b16 %v4416
      %v4549 = vunpack.c.l.b16 %v4417
      %v4550 = vunpack.c.l.b16 %v4418
      %v4551 = vunpack.c.l.b16 %v4419
      %v4552 = vunpack.c.l.b16 %v4420
      %v4553 = vunpack.c.l.b16 %v4421
      %v4554 = vunpack.c.l.b16 %v4422
      %v4555 = vunpack.c.l.b16 %v4423
      %v4556 = vunpack.c.l.b16 %v4424
      %v4557 = vunpack.c.l.b16 %v4425
      %v4558 = vunpack.c.l.b16 %v4426
      %v4559 = vunpack.c.l.b16 %v4427
      %v4560 = vunpack.c.l.b16 %v4428
      %v4561 = vunpack.c.l.b16 %v4429
      %v4562 = vunpack.c.l.b16 %v4430
      %v4563 = vunpack.c.l.b16 %v4431
      %v4564 = vunpack.c.l.b16 %v4432
      %v4565 = vunpack.c.l.b16 %v4433
      %v4566 = vunpack.c.l.b16 %v4434
      %v4567 = vunpack.c.l.b16 %v4435
      %v4568 = vunpack.c.l.b16 %v4436
      %v4569 = vunpack.c.l.b16 %v4437
      %v4570 = vunpack.c.l.b16 %v4438
      %v4571 = vunpack.c.l.b16 %v4439
      %v4572 = vunpack.c.l.b16 %v4440
      %v4573 = vunpack.c.l.b16 %v4441
      %v4574 = vunpack.c.l.b16 %v4442
      %v4575 = vunpack.c.l.b16 %v4443
      %v4576 = vunpack.c.l.b16 %v4444
      %v4577 = vunpack.c.l.b16 %v4445
      %v4578 = vunpack.c.l.b16 %v4446
      %v4579 = vunpack.c.l.b16 %v4447
      %v4580 = vunpack.c.l.b16 %v4448
      %v4581 = vunpack.c.l.b16 %v4449
      %v4582 = vunpack.c.l.b16 %v4450
      %v4583 = vunpack.c.l.b16 %v4451
      %v4584 = vunpack.c.l.b16 %v4452
      %v4585 = vunpack.c.l.b16 %v4453
      %v4586 = vunpack.c.l.b16 %v4454
      %v4587 = vunpack.c.l.b16 %v4455
      %v4588 = vunpack.c.l.b16 %v4456
      %v4589 = vunpack.c.l.b16 %v4457
      %v4590 = vunpack.c.l.b16 %v4458
      %v4591 = vunpack.c.l.b16 %v4459
      %v4592 = vunpack.c.l.b16 %v4460
      %v4593 = vunpack.c.l.b16 %v4461
      %v4594 = vunpack.c.l.b16 %v4462
      %v4595 = vunpack.c.l.b16 %v4463
      %v4596 = vunpack.c.l.b16 %v4464
      %v4597 = vunpack.c.l.b16 %v4465
      %v4598 = vunpack.c.l.b16 %v4466
      %v4599 = vunpack.c.l.b16 %v4467
      %v4600 = vunpack.c.l.b16 %v4468
      %v4601 = vunpack.c.l.b16 %v4469
      %v4602 = vpack.c.b16 %v4539, %v4538
      %v4603 = vpack.c.b16 %v4541, %v4540
      %v4604 = vpack.c.b16 %v4543, %v4542
      %v4605 = vpack.c.b16 %v4545, %v4544
      %v4606 = vpack.c.b16 %v4547, %v4546
      %v4607 = vpack.c.b16 %v4549, %v4548
      %v4608 = vpack.c.b16 %v4551, %v4550
      %v4609 = vpack.c.b16 %v4553, %v4552
      %v4610 = vpack.c.b16 %v4555, %v4554
      %v4611 = vpack.c.b16 %v4557, %v4556
      %v4612 = vpack.c.b16 %v4559, %v4558
      %v4613 = vpack.c.b16 %v4561, %v4560
      %v4614 = vpack.c.b16 %v4563, %v4562
      %v4615 = vpack.c.b16 %v4565, %v4564
      %v4616 = vpack.c.b16 %v4567, %v4566
      %v4617 = vpack.c.b16 %v4569, %v4568
      %v4618 = vpack.c.b16 %v4571, %v4570
      %v4619 = vpack.c.b16 %v4573, %v4572
      %v4620 = vpack.c.b16 %v4575, %v4574
      %v4621 = vpack.c.b16 %v4577, %v4576
      %v4622 = vpack.c.b16 %v4579, %v4578
      %v4623 = vpack.c.b16 %v4581, %v4580
      %v4624 = vpack.c.b16 %v4583, %v4582
      %v4625 = vpack.c.b16 %v4585, %v4584
      %v4626 = vpack.c.b16 %v4587, %v4586
      %v4627 = vpack.c.b16 %v4589, %v4588
      %v4628 = vpack.c.b16 %v4591, %v4590
      %v4629 = vpack.c.b16 %v4593, %v4592
      %v4630 = vpack.c.b16 %v4595, %v4594
      %v4631 = vpack.c.b16 %v4597, %v4596
      %v4632 = vpack.c.b16 %v4599, %v4598
      %v4633 = vpack.c.b16 %v4601, %v4600
      %4666 = vmatprep.subr.bf16.mxu0 0
      %4667 = vmatpush1.bf16.msra.mxu0 %v4602
      %4668 = vmatprep.subr.bf16.mxu0 0
      %4669 = vmatpush1.bf16.msra.mxu0 %v4603
      %4670 = vmatprep.subr.bf16.mxu0 0
      %4671 = vmatpush1.bf16.msra.mxu0 %v4604
      %4672 = vmatprep.subr.bf16.mxu0 0
      %4673 = vmatpush1.bf16.msra.mxu0 %v4605
      %4674 = vmatprep.subr.bf16.mxu0 0
      %4675 = vmatpush1.bf16.msra.mxu0 %v4606
      %4676 = vmatprep.subr.bf16.mxu0 0
      %4677 = vmatpush1.bf16.msra.mxu0 %v4607
      %4678 = vmatprep.subr.bf16.mxu0 0
      %4679 = vmatpush1.bf16.msra.mxu0 %v4608
      %4680 = vmatprep.subr.bf16.mxu0 0
      %4681 = vmatpush1.bf16.msra.mxu0 %v4609
      %4682 = vmatprep.subr.bf16.mxu0 0
      %4683 = vmatpush1.bf16.msra.mxu0 %v4610
      %4684 = vmatprep.subr.bf16.mxu0 0
      %4685 = vmatpush1.bf16.msra.mxu0 %v4611
      %4686 = vmatprep.subr.bf16.mxu0 0
      %4687 = vmatpush1.bf16.msra.mxu0 %v4612
      %4688 = vmatprep.subr.bf16.mxu0 0
      %4689 = vmatpush1.bf16.msra.mxu0 %v4613
      %4690 = vmatprep.subr.bf16.mxu0 0
      %4691 = vmatpush1.bf16.msra.mxu0 %v4614
      %4692 = vmatprep.subr.bf16.mxu0 0
      %4693 = vmatpush1.bf16.msra.mxu0 %v4615
      %4694 = vmatprep.subr.bf16.mxu0 0
      %4695 = vmatpush1.bf16.msra.mxu0 %v4616
      %4696 = vmatprep.subr.bf16.mxu0 0
      %4697 = vmatpush1.bf16.msra.mxu0 %v4617
      %4698 = vmatprep.mubr.bf16.mxu0 %v4378
      %4699 = vmatmul.mubr.bf16.gmra.mrb[0].mxu0 %v4366
      %v4700 = vpop.f32.mrb[0].mxu0
      %v4701 = vadd.f32 0.0, %v4700
      %v4702 = vpop.f32.mrb[0].mxu0
      %v4703 = vpop.f32.mrb[0].mxu0
      %v4704 = vadd.f32 0.0, %v4703
      %v4705 = vpop.f32.mrb[0].mxu0
      %4706 = vmatprep.mubr.bf16.mxu0 %v4379
      %4707 = vmatmul.mubr.bf16.gmra.mrb[0].mxu0 %v4367
      %v4708 = vpop.f32.mrb[0].mxu0
      %v4709 = vadd.f32 0.0, %v4708
      %v4710 = vpop.f32.mrb[0].mxu0
      %v4711 = vpop.f32.mrb[0].mxu0
      %v4712 = vadd.f32 0.0, %v4711
      %v4713 = vpop.f32.mrb[0].mxu0
      %4714 = vdwg.mxu0
      %4715 = vmatprep.subr.bf16.mxu0 0
      %4716 = vmatpush1.bf16.msra.mxu0 %v4618
      %4717 = vmatprep.subr.bf16.mxu0 0
      %4718 = vmatpush1.bf16.msra.mxu0 %v4619
      %4719 = vmatprep.subr.bf16.mxu0 0
      %4720 = vmatpush1.bf16.msra.mxu0 %v4620
      %4721 = vmatprep.subr.bf16.mxu0 0
      %4722 = vmatpush1.bf16.msra.mxu0 %v4621
      %4723 = vmatprep.subr.bf16.mxu0 0
      %4724 = vmatpush1.bf16.msra.mxu0 %v4622
      %4725 = vmatprep.subr.bf16.mxu0 0
      %4726 = vmatpush1.bf16.msra.mxu0 %v4623
      %4727 = vmatprep.subr.bf16.mxu0 0
      %4728 = vmatpush1.bf16.msra.mxu0 %v4624
      %4729 = vmatprep.subr.bf16.mxu0 0
      %4730 = vmatpush1.bf16.msra.mxu0 %v4625
      %4731 = vmatprep.subr.bf16.mxu0 0
      %4732 = vmatpush1.bf16.msra.mxu0 %v4626
      %4733 = vmatprep.subr.bf16.mxu0 0
      %4734 = vmatpush1.bf16.msra.mxu0 %v4627
      %4735 = vmatprep.subr.bf16.mxu0 0
      %4736 = vmatpush1.bf16.msra.mxu0 %v4628
      %4737 = vmatprep.subr.bf16.mxu0 0
      %4738 = vmatpush1.bf16.msra.mxu0 %v4629
      %4739 = vmatprep.subr.bf16.mxu0 0
      %4740 = vmatpush1.bf16.msra.mxu0 %v4630
      %4741 = vmatprep.subr.bf16.mxu0 0
      %4742 = vmatpush1.bf16.msra.mxu0 %v4631
      %4743 = vmatprep.subr.bf16.mxu0 0
      %4744 = vmatpush1.bf16.msra.mxu0 %v4632
      %4745 = vmatprep.subr.bf16.mxu0 0
      %4746 = vmatpush1.bf16.msra.mxu0 %v4633
      %4747 = vmatprep.mubr.bf16.mxu0 %v4402
      %4748 = vmatmul.mubr.bf16.gmra.mrb[0].mxu0 %v4390
      %v4749 = vpop.f32.mrb[0].mxu0
      %v4750 = vadd.f32 %v4701, %v4749
      %v4751 = vpop.f32.mrb[0].mxu0
      %v4752 = vpop.f32.mrb[0].mxu0
      %v4753 = vadd.f32 %v4704, %v4752
      %v4754 = vpop.f32.mrb[0].mxu0
      %4755 = vmatprep.mubr.bf16.mxu0 %v4403
      %4756 = vmatmul.mubr.bf16.gmra.mrb[0].mxu0 %v4391
      %v4757 = vpop.f32.mrb[0].mxu0
      %v4758 = vadd.f32 %v4709, %v4757
      %v4759 = vpop.f32.mrb[0].mxu0
      %v4760 = vpop.f32.mrb[0].mxu0
      %v4761 = vadd.f32 %v4712, %v4760
      %v4762 = vpop.f32.mrb[0].mxu0
      %4763 = vdwg.mxu0
      %v4764 = vadd.f32 %v4470, %v4750
      %v4765 = vadd.f32 %v4471, %v4753
      %v4766 = vadd.f32 %v4472, %v4758
      %v4767 = vadd.f32 %v4473, %v4761
      %4768 = vst [vmem:[%s299] sm:$0xff] %v4764
      %4769 = vst [vmem:[%s299 + $0x8] sm:$0xff] %v4765
      %4770 = vst [vmem:[%s299 + $0x10] sm:$0xff] %v4766
      %4771 = vst [vmem:[%s299 + $0x18] sm:$0xff] %v4767
      %4772 = vset.pattern.permute.xlu0 28
      %4773 = vperm.xlu0 %4772, %v522
      %v4774 = vpop.permute.xlu0 %4773
      %v4777 = vunpack.c.l.s4 839922192
      %v4778 = vunpack.c.0.s8 %v4777
      %v4779 = vlaneseq
      %v4780 = vshrl.u32 %v4779, 7
      %v4781 = vsub.s32 %v4778, %v4780
      %v4782 = vrot.slane %v4774, %v4781
      %4783 = vset.pattern.permute.xlu0 28
      %4784 = vperm.xlu0 %4783, %v523
      %v4785 = vpop.permute.xlu0 %4784
      %v4788 = vunpack.c.l.s4 839922192
      %v4789 = vunpack.c.0.s8 %v4788
      %v4790 = vlaneseq
      %v4791 = vshrl.u32 %v4790, 7
      %v4792 = vsub.s32 %v4789, %v4791
      %v4793 = vrot.slane %v4785, %v4792
      %4794 = vset.pattern.permute.xlu0 28
      %4795 = vperm.xlu0 %4794, %v524
      %v4796 = vpop.permute.xlu0 %4795
      %v4799 = vunpack.c.l.s4 839922192
      %v4800 = vunpack.c.0.s8 %v4799
      %v4801 = vlaneseq
      %v4802 = vshrl.u32 %v4801, 7
      %v4803 = vsub.s32 %v4800, %v4802
      %v4804 = vrot.slane %v4796, %v4803
      %4805 = vset.pattern.permute.xlu0 28
      %4806 = vperm.xlu0 %4805, %v525
      %v4807 = vpop.permute.xlu0 %4806
      %v4810 = vunpack.c.l.s4 839922192
      %v4811 = vunpack.c.0.s8 %v4810
      %v4812 = vlaneseq
      %v4813 = vshrl.u32 %v4812, 7
      %v4814 = vsub.s32 %v4811, %v4813
      %v4815 = vrot.slane %v4807, %v4814
      %v4816 = vmul.bf16 %v4782, %v518
      %v4817 = vmul.bf16 %v4793, %v519
      %v4818 = vmul.bf16 %v4804, %v520
      %v4819 = vmul.bf16 %v4815, %v521
      %4820 = vset.pattern.permute.xlu0 29
      %4821 = vperm.xlu0 %4820, %v522
      %v4822 = vpop.permute.xlu0 %4821
      %v4825 = vunpack.c.l.s4 839922192
      %v4826 = vunpack.c.0.s8 %v4825
      %v4827 = vlaneseq
      %v4828 = vshrl.u32 %v4827, 7
      %v4829 = vsub.s32 %v4826, %v4828
      %v4830 = vrot.slane %v4822, %v4829
      %4831 = vset.pattern.permute.xlu0 29
      %4832 = vperm.xlu0 %4831, %v523
      %v4833 = vpop.permute.xlu0 %4832
      %v4836 = vunpack.c.l.s4 839922192
      %v4837 = vunpack.c.0.s8 %v4836
      %v4838 = vlaneseq
      %v4839 = vshrl.u32 %v4838, 7
      %v4840 = vsub.s32 %v4837, %v4839
      %v4841 = vrot.slane %v4833, %v4840
      %4842 = vset.pattern.permute.xlu0 29
      %4843 = vperm.xlu0 %4842, %v524
      %v4844 = vpop.permute.xlu0 %4843
      %v4847 = vunpack.c.l.s4 839922192
      %v4848 = vunpack.c.0.s8 %v4847
      %v4849 = vlaneseq
      %v4850 = vshrl.u32 %v4849, 7
      %v4851 = vsub.s32 %v4848, %v4850
      %v4852 = vrot.slane %v4844, %v4851
      %4853 = vset.pattern.permute.xlu0 29
      %4854 = vperm.xlu0 %4853, %v525
      %v4855 = vpop.permute.xlu0 %4854
      %v4858 = vunpack.c.l.s4 839922192
      %v4859 = vunpack.c.0.s8 %v4858
      %v4860 = vlaneseq
      %v4861 = vshrl.u32 %v4860, 7
      %v4862 = vsub.s32 %v4859, %v4861
      %v4863 = vrot.slane %v4855, %v4862
      %v4864 = vmul.bf16 %v4830, %v518
      %v4865 = vmul.bf16 %v4841, %v519
      %v4866 = vmul.bf16 %v4852, %v520
      %v4867 = vmul.bf16 %v4863, %v521
      %4868 = vset.pattern.permute.xlu0 30
      %4869 = vperm.xlu0 %4868, %v522
      %v4870 = vpop.permute.xlu0 %4869
      %v4873 = vunpack.c.l.s4 839922192
      %v4874 = vunpack.c.0.s8 %v4873
      %v4875 = vlaneseq
      %v4876 = vshrl.u32 %v4875, 7
      %v4877 = vsub.s32 %v4874, %v4876
      %v4878 = vrot.slane %v4870, %v4877
      %4879 = vset.pattern.permute.xlu0 30
      %4880 = vperm.xlu0 %4879, %v523
      %v4881 = vpop.permute.xlu0 %4880
      %v4884 = vunpack.c.l.s4 839922192
      %v4885 = vunpack.c.0.s8 %v4884
      %v4886 = vlaneseq
      %v4887 = vshrl.u32 %v4886, 7
      %v4888 = vsub.s32 %v4885, %v4887
      %v4889 = vrot.slane %v4881, %v4888
      %4890 = vset.pattern.permute.xlu0 30
      %4891 = vperm.xlu0 %4890, %v524
      %v4892 = vpop.permute.xlu0 %4891
      %v4895 = vunpack.c.l.s4 839922192
      %v4896 = vunpack.c.0.s8 %v4895
      %v4897 = vlaneseq
      %v4898 = vshrl.u32 %v4897, 7
      %v4899 = vsub.s32 %v4896, %v4898
      %v4900 = vrot.slane %v4892, %v4899
      %4901 = vset.pattern.permute.xlu0 30
      %4902 = vperm.xlu0 %4901, %v525
      %v4903 = vpop.permute.xlu0 %4902
      %v4906 = vunpack.c.l.s4 839922192
      %v4907 = vunpack.c.0.s8 %v4906
      %v4908 = vlaneseq
      %v4909 = vshrl.u32 %v4908, 7
      %v4910 = vsub.s32 %v4907, %v4909
      %v4911 = vrot.slane %v4903, %v4910
      %v4912 = vmul.bf16 %v4878, %v518
      %v4913 = vmul.bf16 %v4889, %v519
      %v4914 = vmul.bf16 %v4900, %v520
      %v4915 = vmul.bf16 %v4911, %v521
      %4916 = vset.pattern.permute.xlu0 31
      %4917 = vperm.xlu0 %4916, %v522
      %v4918 = vpop.permute.xlu0 %4917
      %v4921 = vunpack.c.l.s4 839922192
      %v4922 = vunpack.c.0.s8 %v4921
      %v4923 = vlaneseq
      %v4924 = vshrl.u32 %v4923, 7
      %v4925 = vsub.s32 %v4922, %v4924
      %v4926 = vrot.slane %v4918, %v4925
      %4927 = vset.pattern.permute.xlu0 31
      %4928 = vperm.xlu0 %4927, %v523
      %v4929 = vpop.permute.xlu0 %4928
      %v4932 = vunpack.c.l.s4 839922192
      %v4933 = vunpack.c.0.s8 %v4932
      %v4934 = vlaneseq
      %v4935 = vshrl.u32 %v4934, 7
      %v4936 = vsub.s32 %v4933, %v4935
      %v4937 = vrot.slane %v4929, %v4936
      %4938 = vset.pattern.permute.xlu0 31
      %4939 = vperm.xlu0 %4938, %v524
      %v4940 = vpop.permute.xlu0 %4939
      %v4943 = vunpack.c.l.s4 839922192
      %v4944 = vunpack.c.0.s8 %v4943
      %v4945 = vlaneseq
      %v4946 = vshrl.u32 %v4945, 7
      %v4947 = vsub.s32 %v4944, %v4946
      %v4948 = vrot.slane %v4940, %v4947
      %4949 = vset.pattern.permute.xlu0 31
      %4950 = vperm.xlu0 %4949, %v525
      %v4951 = vpop.permute.xlu0 %4950
      %v4954 = vunpack.c.l.s4 839922192
      %v4955 = vunpack.c.0.s8 %v4954
      %v4956 = vlaneseq
      %v4957 = vshrl.u32 %v4956, 7
      %v4958 = vsub.s32 %v4955, %v4957
      %v4959 = vrot.slane %v4951, %v4958
      %v4960 = vmul.bf16 %v4926, %v518
      %v4961 = vmul.bf16 %v4937, %v519
      %v4962 = vmul.bf16 %v4948, %v520
      %v4963 = vmul.bf16 %v4959, %v521
      %v4968 = vunpack.c.l.b16 %v4816
      %v4969 = vunpack.c.l.b16 %v4817
      %v4970 = vunpack.c.l.b16 %v4818
      %v4971 = vunpack.c.l.b16 %v4819
      %v4972 = vpack.c.b16 %v4969, %v4968
      %v4973 = vpack.c.b16 %v4971, %v4970
      %v4980 = vunpack.c.l.b16 %v4864
      %v4981 = vunpack.c.l.b16 %v4865
      %v4982 = vunpack.c.l.b16 %v4866
      %v4983 = vunpack.c.l.b16 %v4867
      %v4984 = vpack.c.b16 %v4981, %v4980
      %v4985 = vpack.c.b16 %v4983, %v4982
      %v4992 = vunpack.c.l.b16 %v4912
      %v4993 = vunpack.c.l.b16 %v4913
      %v4994 = vunpack.c.l.b16 %v4914
      %v4995 = vunpack.c.l.b16 %v4915
      %v4996 = vpack.c.b16 %v4993, %v4992
      %v4997 = vpack.c.b16 %v4995, %v4994
      %v5004 = vunpack.c.l.b16 %v4960
      %v5005 = vunpack.c.l.b16 %v4961
      %v5006 = vunpack.c.l.b16 %v4962
      %v5007 = vunpack.c.l.b16 %v4963
      %v5008 = vpack.c.b16 %v5005, %v5004
      %v5009 = vpack.c.b16 %v5007, %v5006
      %v5012 = vld [vmem:[%s293 + $0x700] sm:$0xf]
      %v5013 = vld [vmem:[%s293 + $0x704] sm:$0xf]
      %v5014 = vld [vmem:[%s293 + $0x708] sm:$0xf]
      %v5015 = vld [vmem:[%s293 + $0x70c] sm:$0xf]
      %v5016 = vld [vmem:[%s293 + $0x710] sm:$0xf]
      %v5017 = vld [vmem:[%s293 + $0x714] sm:$0xf]
      %v5018 = vld [vmem:[%s293 + $0x718] sm:$0xf]
      %v5019 = vld [vmem:[%s293 + $0x71c] sm:$0xf]
      %v5020 = vld [vmem:[%s293 + $0x720] sm:$0xf]
      %v5021 = vld [vmem:[%s293 + $0x724] sm:$0xf]
      %v5022 = vld [vmem:[%s293 + $0x728] sm:$0xf]
      %v5023 = vld [vmem:[%s293 + $0x72c] sm:$0xf]
      %v5024 = vld [vmem:[%s293 + $0x730] sm:$0xf]
      %v5025 = vld [vmem:[%s293 + $0x734] sm:$0xf]
      %v5026 = vld [vmem:[%s293 + $0x738] sm:$0xf]
      %v5027 = vld [vmem:[%s293 + $0x73c] sm:$0xf]
      %v5028 = vld [vmem:[%s293 + $0x740] sm:$0xf]
      %v5029 = vld [vmem:[%s293 + $0x744] sm:$0xf]
      %v5030 = vld [vmem:[%s293 + $0x748] sm:$0xf]
      %v5031 = vld [vmem:[%s293 + $0x74c] sm:$0xf]
      %v5032 = vld [vmem:[%s293 + $0x750] sm:$0xf]
      %v5033 = vld [vmem:[%s293 + $0x754] sm:$0xf]
      %v5034 = vld [vmem:[%s293 + $0x758] sm:$0xf]
      %v5035 = vld [vmem:[%s293 + $0x75c] sm:$0xf]
      %v5036 = vld [vmem:[%s293 + $0x760] sm:$0xf]
      %v5037 = vld [vmem:[%s293 + $0x764] sm:$0xf]
      %v5038 = vld [vmem:[%s293 + $0x768] sm:$0xf]
      %v5039 = vld [vmem:[%s293 + $0x76c] sm:$0xf]
      %v5040 = vld [vmem:[%s293 + $0x770] sm:$0xf]
      %v5041 = vld [vmem:[%s293 + $0x774] sm:$0xf]
      %v5042 = vld [vmem:[%s293 + $0x778] sm:$0xf]
      %v5043 = vld [vmem:[%s293 + $0x77c] sm:$0xf]
      %v5044 = vld [vmem:[%s293 + $0x780] sm:$0xf]
      %v5045 = vld [vmem:[%s293 + $0x784] sm:$0xf]
      %v5046 = vld [vmem:[%s293 + $0x788] sm:$0xf]
      %v5047 = vld [vmem:[%s293 + $0x78c] sm:$0xf]
      %v5048 = vld [vmem:[%s293 + $0x790] sm:$0xf]
      %v5049 = vld [vmem:[%s293 + $0x794] sm:$0xf]
      %v5050 = vld [vmem:[%s293 + $0x798] sm:$0xf]
      %v5051 = vld [vmem:[%s293 + $0x79c] sm:$0xf]
      %v5052 = vld [vmem:[%s293 + $0x7a0] sm:$0xf]
      %v5053 = vld [vmem:[%s293 + $0x7a4] sm:$0xf]
      %v5054 = vld [vmem:[%s293 + $0x7a8] sm:$0xf]
      %v5055 = vld [vmem:[%s293 + $0x7ac] sm:$0xf]
      %v5056 = vld [vmem:[%s293 + $0x7b0] sm:$0xf]
      %v5057 = vld [vmem:[%s293 + $0x7b4] sm:$0xf]
      %v5058 = vld [vmem:[%s293 + $0x7b8] sm:$0xf]
      %v5059 = vld [vmem:[%s293 + $0x7bc] sm:$0xf]
      %v5060 = vld [vmem:[%s293 + $0x7c0] sm:$0xf]
      %v5061 = vld [vmem:[%s293 + $0x7c4] sm:$0xf]
      %v5062 = vld [vmem:[%s293 + $0x7c8] sm:$0xf]
      %v5063 = vld [vmem:[%s293 + $0x7cc] sm:$0xf]
      %v5064 = vld [vmem:[%s293 + $0x7d0] sm:$0xf]
      %v5065 = vld [vmem:[%s293 + $0x7d4] sm:$0xf]
      %v5066 = vld [vmem:[%s293 + $0x7d8] sm:$0xf]
      %v5067 = vld [vmem:[%s293 + $0x7dc] sm:$0xf]
      %v5068 = vld [vmem:[%s293 + $0x7e0] sm:$0xf]
      %v5069 = vld [vmem:[%s293 + $0x7e4] sm:$0xf]
      %v5070 = vld [vmem:[%s293 + $0x7e8] sm:$0xf]
      %v5071 = vld [vmem:[%s293 + $0x7ec] sm:$0xf]
      %v5072 = vld [vmem:[%s293 + $0x7f0] sm:$0xf]
      %v5073 = vld [vmem:[%s293 + $0x7f4] sm:$0xf]
      %v5074 = vld [vmem:[%s293 + $0x7f8] sm:$0xf]
      %v5075 = vld [vmem:[%s293 + $0x7fc] sm:$0xf]
      %v5076 = vld [vmem:[%s299] sm:$0xff]
      %v5077 = vld [vmem:[%s299 + $0x8] sm:$0xff]
      %v5078 = vld [vmem:[%s299 + $0x10] sm:$0xff]
      %v5079 = vld [vmem:[%s299 + $0x18] sm:$0xff]
      %v5144 = vunpack.c.l.b16 %v5012
      %v5145 = vunpack.c.l.b16 %v5013
      %v5146 = vunpack.c.l.b16 %v5014
      %v5147 = vunpack.c.l.b16 %v5015
      %v5148 = vunpack.c.l.b16 %v5016
      %v5149 = vunpack.c.l.b16 %v5017
      %v5150 = vunpack.c.l.b16 %v5018
      %v5151 = vunpack.c.l.b16 %v5019
      %v5152 = vunpack.c.l.b16 %v5020
      %v5153 = vunpack.c.l.b16 %v5021
      %v5154 = vunpack.c.l.b16 %v5022
      %v5155 = vunpack.c.l.b16 %v5023
      %v5156 = vunpack.c.l.b16 %v5024
      %v5157 = vunpack.c.l.b16 %v5025
      %v5158 = vunpack.c.l.b16 %v5026
      %v5159 = vunpack.c.l.b16 %v5027
      %v5160 = vunpack.c.l.b16 %v5028
      %v5161 = vunpack.c.l.b16 %v5029
      %v5162 = vunpack.c.l.b16 %v5030
      %v5163 = vunpack.c.l.b16 %v5031
      %v5164 = vunpack.c.l.b16 %v5032
      %v5165 = vunpack.c.l.b16 %v5033
      %v5166 = vunpack.c.l.b16 %v5034
      %v5167 = vunpack.c.l.b16 %v5035
      %v5168 = vunpack.c.l.b16 %v5036
      %v5169 = vunpack.c.l.b16 %v5037
      %v5170 = vunpack.c.l.b16 %v5038
      %v5171 = vunpack.c.l.b16 %v5039
      %v5172 = vunpack.c.l.b16 %v5040
      %v5173 = vunpack.c.l.b16 %v5041
      %v5174 = vunpack.c.l.b16 %v5042
      %v5175 = vunpack.c.l.b16 %v5043
      %v5176 = vunpack.c.l.b16 %v5044
      %v5177 = vunpack.c.l.b16 %v5045
      %v5178 = vunpack.c.l.b16 %v5046
      %v5179 = vunpack.c.l.b16 %v5047
      %v5180 = vunpack.c.l.b16 %v5048
      %v5181 = vunpack.c.l.b16 %v5049
      %v5182 = vunpack.c.l.b16 %v5050
      %v5183 = vunpack.c.l.b16 %v5051
      %v5184 = vunpack.c.l.b16 %v5052
      %v5185 = vunpack.c.l.b16 %v5053
      %v5186 = vunpack.c.l.b16 %v5054
      %v5187 = vunpack.c.l.b16 %v5055
      %v5188 = vunpack.c.l.b16 %v5056
      %v5189 = vunpack.c.l.b16 %v5057
      %v5190 = vunpack.c.l.b16 %v5058
      %v5191 = vunpack.c.l.b16 %v5059
      %v5192 = vunpack.c.l.b16 %v5060
      %v5193 = vunpack.c.l.b16 %v5061
      %v5194 = vunpack.c.l.b16 %v5062
      %v5195 = vunpack.c.l.b16 %v5063
      %v5196 = vunpack.c.l.b16 %v5064
      %v5197 = vunpack.c.l.b16 %v5065
      %v5198 = vunpack.c.l.b16 %v5066
      %v5199 = vunpack.c.l.b16 %v5067
      %v5200 = vunpack.c.l.b16 %v5068
      %v5201 = vunpack.c.l.b16 %v5069
      %v5202 = vunpack.c.l.b16 %v5070
      %v5203 = vunpack.c.l.b16 %v5071
      %v5204 = vunpack.c.l.b16 %v5072
      %v5205 = vunpack.c.l.b16 %v5073
      %v5206 = vunpack.c.l.b16 %v5074
      %v5207 = vunpack.c.l.b16 %v5075
      %v5208 = vpack.c.b16 %v5145, %v5144
      %v5209 = vpack.c.b16 %v5147, %v5146
      %v5210 = vpack.c.b16 %v5149, %v5148
      %v5211 = vpack.c.b16 %v5151, %v5150
      %v5212 = vpack.c.b16 %v5153, %v5152
      %v5213 = vpack.c.b16 %v5155, %v5154
      %v5214 = vpack.c.b16 %v5157, %v5156
      %v5215 = vpack.c.b16 %v5159, %v5158
      %v5216 = vpack.c.b16 %v5161, %v5160
      %v5217 = vpack.c.b16 %v5163, %v5162
      %v5218 = vpack.c.b16 %v5165, %v5164
      %v5219 = vpack.c.b16 %v5167, %v5166
      %v5220 = vpack.c.b16 %v5169, %v5168
      %v5221 = vpack.c.b16 %v5171, %v5170
      %v5222 = vpack.c.b16 %v5173, %v5172
      %v5223 = vpack.c.b16 %v5175, %v5174
      %v5224 = vpack.c.b16 %v5177, %v5176
      %v5225 = vpack.c.b16 %v5179, %v5178
      %v5226 = vpack.c.b16 %v5181, %v5180
      %v5227 = vpack.c.b16 %v5183, %v5182
      %v5228 = vpack.c.b16 %v5185, %v5184
      %v5229 = vpack.c.b16 %v5187, %v5186
      %v5230 = vpack.c.b16 %v5189, %v5188
      %v5231 = vpack.c.b16 %v5191, %v5190
      %v5232 = vpack.c.b16 %v5193, %v5192
      %v5233 = vpack.c.b16 %v5195, %v5194
      %v5234 = vpack.c.b16 %v5197, %v5196
      %v5235 = vpack.c.b16 %v5199, %v5198
      %v5236 = vpack.c.b16 %v5201, %v5200
      %v5237 = vpack.c.b16 %v5203, %v5202
      %v5238 = vpack.c.b16 %v5205, %v5204
      %v5239 = vpack.c.b16 %v5207, %v5206
      %5272 = vmatprep.subr.bf16.mxu0 0
      %5273 = vmatpush1.bf16.msra.mxu0 %v5208
      %5274 = vmatprep.subr.bf16.mxu0 0
      %5275 = vmatpush1.bf16.msra.mxu0 %v5209
      %5276 = vmatprep.subr.bf16.mxu0 0
      %5277 = vmatpush1.bf16.msra.mxu0 %v5210
      %5278 = vmatprep.subr.bf16.mxu0 0
      %5279 = vmatpush1.bf16.msra.mxu0 %v5211
      %5280 = vmatprep.subr.bf16.mxu0 0
      %5281 = vmatpush1.bf16.msra.mxu0 %v5212
      %5282 = vmatprep.subr.bf16.mxu0 0
      %5283 = vmatpush1.bf16.msra.mxu0 %v5213
      %5284 = vmatprep.subr.bf16.mxu0 0
      %5285 = vmatpush1.bf16.msra.mxu0 %v5214
      %5286 = vmatprep.subr.bf16.mxu0 0
      %5287 = vmatpush1.bf16.msra.mxu0 %v5215
      %5288 = vmatprep.subr.bf16.mxu0 0
      %5289 = vmatpush1.bf16.msra.mxu0 %v5216
      %5290 = vmatprep.subr.bf16.mxu0 0
      %5291 = vmatpush1.bf16.msra.mxu0 %v5217
      %5292 = vmatprep.subr.bf16.mxu0 0
      %5293 = vmatpush1.bf16.msra.mxu0 %v5218
      %5294 = vmatprep.subr.bf16.mxu0 0
      %5295 = vmatpush1.bf16.msra.mxu0 %v5219
      %5296 = vmatprep.subr.bf16.mxu0 0
      %5297 = vmatpush1.bf16.msra.mxu0 %v5220
      %5298 = vmatprep.subr.bf16.mxu0 0
      %5299 = vmatpush1.bf16.msra.mxu0 %v5221
      %5300 = vmatprep.subr.bf16.mxu0 0
      %5301 = vmatpush1.bf16.msra.mxu0 %v5222
      %5302 = vmatprep.subr.bf16.mxu0 0
      %5303 = vmatpush1.bf16.msra.mxu0 %v5223
      %5304 = vmatprep.mubr.bf16.mxu0 %v4984
      %5305 = vmatmul.mubr.bf16.gmra.mrb[0].mxu0 %v4972
      %v5306 = vpop.f32.mrb[0].mxu0
      %v5307 = vadd.f32 0.0, %v5306
      %v5308 = vpop.f32.mrb[0].mxu0
      %v5309 = vpop.f32.mrb[0].mxu0
      %v5310 = vadd.f32 0.0, %v5309
      %v5311 = vpop.f32.mrb[0].mxu0
      %5312 = vmatprep.mubr.bf16.mxu0 %v4985
      %5313 = vmatmul.mubr.bf16.gmra.mrb[0].mxu0 %v4973
      %v5314 = vpop.f32.mrb[0].mxu0
      %v5315 = vadd.f32 0.0, %v5314
      %v5316 = vpop.f32.mrb[0].mxu0
      %v5317 = vpop.f32.mrb[0].mxu0
      %v5318 = vadd.f32 0.0, %v5317
      %v5319 = vpop.f32.mrb[0].mxu0
      %5320 = vdwg.mxu0
      %5321 = vmatprep.subr.bf16.mxu0 0
      %5322 = vmatpush1.bf16.msra.mxu0 %v5224
      %5323 = vmatprep.subr.bf16.mxu0 0
      %5324 = vmatpush1.bf16.msra.mxu0 %v5225
      %5325 = vmatprep.subr.bf16.mxu0 0
      %5326 = vmatpush1.bf16.msra.mxu0 %v5226
      %5327 = vmatprep.subr.bf16.mxu0 0
      %5328 = vmatpush1.bf16.msra.mxu0 %v5227
      %5329 = vmatprep.subr.bf16.mxu0 0
      %5330 = vmatpush1.bf16.msra.mxu0 %v5228
      %5331 = vmatprep.subr.bf16.mxu0 0
      %5332 = vmatpush1.bf16.msra.mxu0 %v5229
      %5333 = vmatprep.subr.bf16.mxu0 0
      %5334 = vmatpush1.bf16.msra.mxu0 %v5230
      %5335 = vmatprep.subr.bf16.mxu0 0
      %5336 = vmatpush1.bf16.msra.mxu0 %v5231
      %5337 = vmatprep.subr.bf16.mxu0 0
      %5338 = vmatpush1.bf16.msra.mxu0 %v5232
      %5339 = vmatprep.subr.bf16.mxu0 0
      %5340 = vmatpush1.bf16.msra.mxu0 %v5233
      %5341 = vmatprep.subr.bf16.mxu0 0
      %5342 = vmatpush1.bf16.msra.mxu0 %v5234
      %5343 = vmatprep.subr.bf16.mxu0 0
      %5344 = vmatpush1.bf16.msra.mxu0 %v5235
      %5345 = vmatprep.subr.bf16.mxu0 0
      %5346 = vmatpush1.bf16.msra.mxu0 %v5236
      %5347 = vmatprep.subr.bf16.mxu0 0
      %5348 = vmatpush1.bf16.msra.mxu0 %v5237
      %5349 = vmatprep.subr.bf16.mxu0 0
      %5350 = vmatpush1.bf16.msra.mxu0 %v5238
      %5351 = vmatprep.subr.bf16.mxu0 0
      %5352 = vmatpush1.bf16.msra.mxu0 %v5239
      %5353 = vmatprep.mubr.bf16.mxu0 %v5008
      %5354 = vmatmul.mubr.bf16.gmra.mrb[0].mxu0 %v4996
      %v5355 = vpop.f32.mrb[0].mxu0
      %v5356 = vadd.f32 %v5307, %v5355
      %v5357 = vpop.f32.mrb[0].mxu0
      %v5358 = vpop.f32.mrb[0].mxu0
      %v5359 = vadd.f32 %v5310, %v5358
      %v5360 = vpop.f32.mrb[0].mxu0
      %5361 = vmatprep.mubr.bf16.mxu0 %v5009
      %5362 = vmatmul.mubr.bf16.gmra.mrb[0].mxu0 %v4997
      %v5363 = vpop.f32.mrb[0].mxu0
      %v5364 = vadd.f32 %v5315, %v5363
      %v5365 = vpop.f32.mrb[0].mxu0
      %v5366 = vpop.f32.mrb[0].mxu0
      %v5367 = vadd.f32 %v5318, %v5366
      %v5368 = vpop.f32.mrb[0].mxu0
      %5369 = vdwg.mxu0
      %v5370 = vadd.f32 %v5076, %v5356
      %v5371 = vadd.f32 %v5077, %v5359
      %v5372 = vadd.f32 %v5078, %v5364
      %v5373 = vadd.f32 %v5079, %v5367
      %5374 = vst [vmem:[%s299] sm:$0xff] %v5370
      %5375 = vst [vmem:[%s299 + $0x8] sm:$0xff] %v5371
      %5376 = vst [vmem:[%s299 + $0x10] sm:$0xff] %v5372
      %5377 = vst [vmem:[%s299 + $0x18] sm:$0xff] %v5373
      %s5378 = smul.u32 4, %s20
      %p5379 = scmp.lt.s32.totalorder %s5378, 3
      %s5380 = scalar_select %p5379, %s5378, 3
      %s5381 = smul.addr %s5380, 8
      %s5382 = scalar_lea.vmem %s5, %s5381
      // Predicated region
      $region45: #{bilinear_forward.1} parent=39 // pred_check
        %p5383 = pneg %p168
      $region46: #{bilinear_forward.1} parent=39 // pred_check_branch
        %5385 = sbr.rel (%p5383) target = $region48
      $region47: #{bilinear_forward.1} parent=39 // pred_region
        %s5386 = smul.u32 4, %s20
      $region48: #{bilinear_forward.1} parent=39 // pred_fallthru
        _
      // Predicated region
      $region49: #{bilinear_forward.1} parent=39 // pred_check
        %p5387 = pneg %p168
      $region50: #{bilinear_forward.1} parent=39 // pred_check_branch
        %5389 = sbr.rel (%p5387) target = $region52
      $region51: #{bilinear_forward.1} parent=39 // pred_region
        %s5390 = smul.u32 4, %s20
        %p5391 = scmp.lt.s32.totalorder %s5390, 3
        %s5392 = scalar_select %p5391, %s5390, 3
        %s5393 = smul.addr %s5392, 8
        %s5394 = scalar_lea.vmem %s5, %s5393
      $region52: #{bilinear_forward.1} parent=39 // pred_fallthru
        _
    $region40: #{bilinear_forward.1} parent=5 // pred_fallthru
      _
    %p5395 = scmp.le.s32.totalorder 2, %s11
    // Predicated region
    $region53: #{bilinear_forward.1} parent=5 // pred_check
      %p5396 = pneg %p5395
    $region54: #{bilinear_forward.1} parent=5 // pred_check_branch
      %5398 = sbr.rel (%p5396) target = $region56
    $region55: #{bilinear_forward.1} parent=5 // pred_region
      %s5399 = ssub.s32 %s11, 2
    $region56: #{bilinear_forward.1} parent=5 // pred_fallthru
      _
  $region6: #{bilinear_forward.1} parent=0 // loop_footer
    %s15 = sadd.s32 1, %s11
  $region7: #{bilinear_forward.1} parent=0 // loop_footer_branch
    %10 = sbr.rel target = $region3
  $region8: #{bilinear_forward.1} parent=0 // loop_exit
    _

</llo_original>
